<compile_context>
chip_gen: v7x
topology: tpu7x:2x2x1
jax: 0.10.0
libtpu: 0.0.40
codegen_flags: <defaults>
</compile_context>

<pallas_src>
import jax
import jax.numpy as jnp
from jax.experimental import pallas as pl
from jax.experimental.pallas import tpu as pltpu


def _round_up(v, m):
    return ((v + m - 1) // m) * m


# ----------------------------- Pallas kernel -------------------------------

def _gnn_fused_kernel(src_ref, dst_ref, x0_ref, ea_ref, wcat_ref, bcat_ref,
                      mix_ref, out_ref, cat_ref, x1_ref, x2w_ref, x3w_ref,
                      x4w_ref):
    """Entire 6-layer GNN forward in one kernel invocation (no grid)."""
    FP = x0_ref.shape[1]          # padded feature width (lane dim)

    # Edge half of the fused-K matmul operand: written once, reused 6x.
    cat_ref[:, FP:] = ea_ref[...]

    def layer(x_f32, l):
        # Gather source-node features per edge (bf16 MXU, f32 accumulate):
        #   (E, N) bf16 @ (N, F) bf16 -> (E, F) f32
        gathered = jnp.dot(src_ref[...], x_f32.astype(jnp.bfloat16),
                           preferred_element_type=jnp.float32)
        cat_ref[:, :FP] = gathered
        # Fused node+edge linear: (E, F+Fe) @ (F+Fe, F) + (1, F)
        msg = jnp.dot(cat_ref[...], wcat_ref[l],
                      preferred_element_type=jnp.float32) + bcat_ref[l]
        # Scatter-add messages onto destination nodes:
        #   (N, E) bf16 @ (E, F) bf16 -> (N, F) f32
        agg = jnp.dot(dst_ref[...], msg.astype(jnp.bfloat16),
                      preferred_element_type=jnp.float32)
        return jnp.maximum(agg, 0.0)          # ReLU

    # layer1
    x1_ref[...] = layer(x0_ref[...], 0)
    # layer2 + residual mix (mix weights are pre-normalized w / sum)
    x2 = layer(x1_ref[...], 1)
    x2w_ref[...] = mix_ref[0] * x1_ref[...] + mix_ref[1] * x2
    # layer3 + mix
    x3 = layer(x2w_ref[...], 2)
    x3w_ref[...] = (mix_ref[2] * x1_ref[...] + mix_ref[3] * x2w_ref[...]
                    + mix_ref[4] * x3)
    # layer4 + mix
    x4 = layer(x3w_ref[...], 3)
    x4w_ref[...] = (mix_ref[5] * x1_ref[...] + mix_ref[6] * x2w_ref[...]
                    + mix_ref[7] * x3w_ref[...] + mix_ref[8] * x4)
    # "x5" -- original forward reuses layer4's weights here (slot 4 == W4)
    x5 = layer(x4w_ref[...], 4)
    x5w = (mix_ref[9] * x1_ref[...] + mix_ref[10] * x2w_ref[...]
           + mix_ref[11] * x3w_ref[...] + mix_ref[12] * x4w_ref[...]
           + mix_ref[13] * x5)
    # layer_last
    out_ref[...] = layer(x5w, 5)


def _fused_gnn_call(src_oh, dst_oh, x0_p, ea_p, wcat, bcat, mix):
    NP, FP = x0_p.shape
    EP = src_oh.shape[0]
    FeP = ea_p.shape[1]

    flops = 6 * (2 * EP * NP * FP              # gather
                 + 2 * EP * (FP + FeP) * FP    # fused node+edge linear
                 + 2 * NP * EP * FP)           # scatter
    bytes_accessed = (src_oh.size * 2 + dst_oh.size * 2
                      + (x0_p.size + ea_p.size + wcat.size + bcat.size
                         + mix.size + NP * FP) * 4)

    vmem = pl.BlockSpec(memory_space=pltpu.MemorySpace.VMEM)
    smem = pl.BlockSpec(memory_space=pltpu.MemorySpace.SMEM)

    return pl.pallas_call(
        _gnn_fused_kernel,
        out_shape=jax.ShapeDtypeStruct((NP, FP), jnp.float32),
        in_specs=[vmem, vmem, vmem, vmem, vmem, vmem, smem],
        out_specs=vmem,
        scratch_shapes=[
            pltpu.VMEM((EP, FP + FeP), jnp.float32),   # [gathered | edge] buf
            pltpu.VMEM((NP, FP), jnp.float32),         # x1
            pltpu.VMEM((NP, FP), jnp.float32),         # x2_weighted
            pltpu.VMEM((NP, FP), jnp.float32),         # x3_weighted
            pltpu.VMEM((NP, FP), jnp.float32),         # x4_weighted
        ],
        cost_estimate=pl.CostEstimate(flops=flops, transcendentals=0,
                                      bytes_accessed=bytes_accessed),
    )(src_oh, dst_oh, x0_p, ea_p, wcat, bcat, mix)


# ----------------------------- Parameter setup ------------------------------

def _init_linear(key, fan_in, fan_out):
    # Matches torch.nn.Linear default: U(-1/sqrt(fan_in), 1/sqrt(fan_in))
    kw, kb = jax.random.split(key)
    bound = 1.0 / jnp.sqrt(jnp.float32(fan_in))
    w = jax.random.uniform(kw, (fan_in, fan_out), jnp.float32, -bound, bound)
    b = jax.random.uniform(kb, (1, fan_out), jnp.float32, -bound, bound)
    return w, b


def init_gnn_params(key, node_in, edge_in, hidden, out_features):
    keys = jax.random.split(key, 12)
    layer_dims = [
        (node_in, hidden),       # layer1
        (hidden, hidden),        # layer2
        (hidden, hidden),        # layer3
        (hidden, hidden),        # layer4
        (hidden, hidden),        # layer5 (unused by forward, kept for parity)
        (hidden, out_features),  # layer_last
    ]
    layers = []
    for i, (fin, fout) in enumerate(layer_dims):
        wn, bn = _init_linear(keys[2 * i], fin, fout)
        we, be = _init_linear(keys[2 * i + 1], edge_in, fout)
        layers.append((wn, bn, we, be))

    scalars = {
        "weight2_1": 0.6, "weight2_2": 0.4,
        "weight3_1": 0.6, "weight3_2": 0.4, "weight3_3": 0.2,
        "weight4_1": 0.6, "weight4_2": 0.4, "weight4_3": 0.2, "weight4_4": 0.2,
        "weight5_1": 0.6, "weight5_2": 0.4, "weight5_3": 0.2, "weight5_4": 0.2,
        "weight5_5": 0.2,
    }
    scalars = {k: jnp.float32(v) for k, v in scalars.items()}
    return layers, scalars


# ------------------------------- GNN forward --------------------------------

def gnn_forward(layers, scalars, x, edge_index, edge_attr):
    n_nodes, node_in = x.shape
    n_edges, edge_in = edge_attr.shape
    hidden = layers[1][0].shape[0]
    out_features = layers[5][0].shape[1]

    # Padded sizes: lane dims -> multiples of 128 (sublanes follow).
    NP = _round_up(n_nodes, 128)
    EP = _round_up(n_edges, 128)
    FP = _round_up(max(node_in, hidden, out_features), 128)
    FeP = _round_up(edge_in, 128)

    # --- zero-padded node / edge features ------------------------------------
    x0_p = jnp.zeros((NP, FP), jnp.float32).at[:n_nodes, :node_in].set(x)
    ea_p = jnp.zeros((EP, FeP), jnp.float32).at[:n_edges, :edge_in].set(edge_attr)

    # --- one-hot gather / scatter matrices in bf16 ----------------------------
    # Padded edge slots get an out-of-range node id so their row/column is all
    # zeros and they contribute nothing.  dst is built directly as (N, E); no
    # HBM transpose.
    invalid = jnp.full((EP - n_edges,), NP, dtype=edge_index.dtype)
    src_idx = jnp.concatenate([edge_index[0], invalid])
    dst_idx = jnp.concatenate([edge_index[1], invalid])
    node_ids = jnp.arange(NP, dtype=edge_index.dtype)
    src_oh = (src_idx[:, None] == node_ids[None, :]).astype(jnp.bfloat16)  # (EP, NP)
    dst_oh = (node_ids[:, None] == dst_idx[None, :]).astype(jnp.bfloat16)  # (NP, EP)

    # --- stacked, zero-padded fused weights (usage order; layer4 reused) ------
    wcat_list, bcat_list = [], []
    for li in (0, 1, 2, 3, 3, 5):   # layer1..layer4, layer4 again, layer_last
        wn, bn, we, be = layers[li]
        fin, fout = wn.shape
        w = jnp.zeros((FP + FeP, FP), jnp.float32)
        w = w.at[:fin, :fout].set(wn)
        w = w.at[FP:FP + we.shape[0], :fout].set(we)
        b = jnp.zeros((1, FP), jnp.float32).at[:, :fout].set(bn + be)
        wcat_list.append(w)
        bcat_list.append(b)
    wcat = jnp.stack(wcat_list)       # (6, FP+FeP, FP)
    bcat = jnp.stack(bcat_list)       # (6, 1, FP)

    # --- pre-normalized residual mix weights (SMEM scalars) -------------------
    def norm(names):
        v = jnp.stack([scalars[n] for n in names])
        return v / jnp.sum(v)

    mix = jnp.concatenate([
        norm(("weight2_1", "weight2_2")),
        norm(("weight3_1", "weight3_2", "weight3_3")),
        norm(("weight4_1", "weight4_2", "weight4_3", "weight4_4")),
        norm(("weight5_1", "weight5_2", "weight5_3", "weight5_4", "weight5_5")),
    ]).astype(jnp.float32)            # (14,)

    out_p = _fused_gnn_call(src_oh, dst_oh, x0_p, ea_p, wcat, bcat, mix)
    return out_p[:n_nodes, :out_features]


# ---------------------------------- main -------------------------------------

if __name__ == "__main__":
    N_NODES = 16
    N_EDGES = 32
    NODE_IN = 8
    EDGE_IN = 4
    HIDDEN = 32
    OUT_FEATURES = 16

    key = jax.random.PRNGKey(0)
    k_param, k_x, k_src, k_dst, k_ea = jax.random.split(key, 5)

    layers, scalars = init_gnn_params(k_param, NODE_IN, EDGE_IN, HIDDEN,
                                      OUT_FEATURES)

    x = jax.random.normal(k_x, (N_NODES, NODE_IN), jnp.float32)
    edge_index = jnp.stack([
        jax.random.randint(k_src, (N_EDGES,), 0, N_NODES),
        jax.random.randint(k_dst, (N_EDGES,), 0, N_NODES),
    ], axis=0)  # (2, E), int32
    edge_attr = jax.random.normal(k_ea, (N_EDGES, EDGE_IN), jnp.float32)

    out = jax.jit(gnn_forward)(layers, scalars, x, edge_index, edge_attr)
    out = jax.block_until_ready(out)

    assert out.shape == (N_NODES, OUT_FEATURES), out.shape
    assert jnp.all(jnp.isfinite(out))
    print("KERNEL_OK")
</pallas_src>

<mosaic_0001>
module attributes {stable_mosaic.version = 11 : i64} {
  func.func @_gnn_fused_kernel(%arg0: memref<128x128xbf16, #tpu.memory_space<vmem>>, %arg1: memref<128x128xbf16, #tpu.memory_space<vmem>>, %arg2: memref<128x128xf32, #tpu.memory_space<vmem>>, %arg3: memref<128x128xf32, #tpu.memory_space<vmem>>, %arg4: memref<6x256x128xf32, #tpu.memory_space<vmem>>, %arg5: memref<6x1x128xf32, #tpu.memory_space<vmem>>, %arg6: memref<14xf32, #tpu.memory_space<smem>>, %arg7: memref<128x128xf32, #tpu.memory_space<vmem>>, %arg8: memref<128x256xf32, #tpu.memory_space<vmem>>, %arg9: memref<128x128xf32, #tpu.memory_space<vmem>>, %arg10: memref<128x128xf32, #tpu.memory_space<vmem>>, %arg11: memref<128x128xf32, #tpu.memory_space<vmem>>, %arg12: memref<128x128xf32, #tpu.memory_space<vmem>>) attributes {dimension_semantics = [], scalar_prefetch = 0 : i64, scratch_operands = 5 : i64, tpu.core_type = #tpu.core_type<tc>} {
    %c0 = arith.constant 0 : index
    %c0_0 = arith.constant 0 : index
    %0 = vector.load %arg3[%c0, %c0_0] : memref<128x128xf32, #tpu.memory_space<vmem>>, vector<128x128xf32>
    %c0_1 = arith.constant 0 : index
    %c128 = arith.constant 128 : index
    %1 = vector.load %arg8[%c0_1, %c128] : memref<128x256xf32, #tpu.memory_space<vmem>>, vector<128x128xf32>
    tpu.vector_store %arg8[%c0_1, %c128], %0 {strides = array<i32>} : memref<128x256xf32, #tpu.memory_space<vmem>>, vector<128x128xf32>,
    %c0_2 = arith.constant 0 : index
    %c0_3 = arith.constant 0 : index
    %2 = vector.load %arg2[%c0_2, %c0_3] : memref<128x128xf32, #tpu.memory_space<vmem>>, vector<128x128xf32>
    %c0_4 = arith.constant 0 : index
    %c0_5 = arith.constant 0 : index
    %3 = vector.load %arg0[%c0_4, %c0_5] : memref<128x128xbf16, #tpu.memory_space<vmem>>, vector<128x128xbf16>
    %4 = arith.truncf %2 : vector<128x128xf32> to vector<128x128xbf16>
    %cst = arith.constant dense<0.000000e+00> : vector<128x128xf32>
    %5 = tpu.matmul %3, %4, %cst {dimension_numbers = #tpu.dot_dimension_numbers<[1], [0], [0], [1], [0, 0, 1, 1], [], []>} : vector<128x128xbf16>, vector<128x128xbf16>, vector<128x128xf32> -> vector<128x128xf32>
    %c0_6 = arith.constant 0 : index
    %c0_7 = arith.constant 0 : index
    %6 = vector.load %arg8[%c0_6, %c0_7] : memref<128x256xf32, #tpu.memory_space<vmem>>, vector<128x128xf32>
    tpu.vector_store %arg8[%c0_6, %c0_7], %5 {strides = array<i32>} : memref<128x256xf32, #tpu.memory_space<vmem>>, vector<128x128xf32>,
    %c0_8 = arith.constant 0 : index
    %c0_9 = arith.constant 0 : index
    %7 = vector.load %arg8[%c0_8, %c0_9] : memref<128x256xf32, #tpu.memory_space<vmem>>, vector<128x256xf32>
    %c0_10 = arith.constant 0 : index
    %c0_11 = arith.constant 0 : index
    %c0_12 = arith.constant 0 : index
    %8 = vector.load %arg4[%c0_10, %c0_11, %c0_12] : memref<6x256x128xf32, #tpu.memory_space<vmem>>, vector<1x256x128xf32>
    %9 = vector.shape_cast %8 : vector<1x256x128xf32> to vector<256x128xf32>
    %cst_13 = arith.constant dense<0.000000e+00> : vector<128x128xf32>
    %10 = tpu.matmul %7, %9, %cst_13 {dimension_numbers = #tpu.dot_dimension_numbers<[1], [0], [0], [1], [0, 0, 1, 1], [], []>} : vector<128x256xf32>, vector<256x128xf32>, vector<128x128xf32> -> vector<128x128xf32>
    %c0_14 = arith.constant 0 : index
    %c0_15 = arith.constant 0 : index
    %c0_16 = arith.constant 0 : index
    %11 = vector.load %arg5[%c0_14, %c0_15, %c0_16] : memref<6x1x128xf32, #tpu.memory_space<vmem>>, vector<1x1x128xf32>
    %12 = vector.shape_cast %11 : vector<1x1x128xf32> to vector<1x128xf32>
    %13 = vector.broadcast %12 : vector<1x128xf32> to vector<128x128xf32>
    %14 = arith.addf %10, %13 : vector<128x128xf32>
    %c0_17 = arith.constant 0 : index
    %c0_18 = arith.constant 0 : index
    %15 = vector.load %arg1[%c0_17, %c0_18] : memref<128x128xbf16, #tpu.memory_space<vmem>>, vector<128x128xbf16>
    %16 = arith.truncf %14 : vector<128x128xf32> to vector<128x128xbf16>
    %cst_19 = arith.constant dense<0.000000e+00> : vector<128x128xf32>
    %17 = tpu.matmul %15, %16, %cst_19 {dimension_numbers = #tpu.dot_dimension_numbers<[1], [0], [0], [1], [0, 0, 1, 1], [], []>} : vector<128x128xbf16>, vector<128x128xbf16>, vector<128x128xf32> -> vector<128x128xf32>
    %cst_20 = arith.constant 0.000000e+00 : f32
    %18 = vector.broadcast %cst_20 : f32 to vector<128x128xf32>
    %19 = arith.maximumf %17, %18 : vector<128x128xf32>
    %c0_21 = arith.constant 0 : index
    %c0_22 = arith.constant 0 : index
    %20 = vector.load %arg9[%c0_21, %c0_22] : memref<128x128xf32, #tpu.memory_space<vmem>>, vector<128x128xf32>
    tpu.vector_store %arg9[%c0_21, %c0_22], %19 {strides = array<i32>} : memref<128x128xf32, #tpu.memory_space<vmem>>, vector<128x128xf32>,
    %c0_23 = arith.constant 0 : index
    %c0_24 = arith.constant 0 : index
    %21 = vector.load %arg9[%c0_23, %c0_24] : memref<128x128xf32, #tpu.memory_space<vmem>>, vector<128x128xf32>
    %c0_25 = arith.constant 0 : index
    %c0_26 = arith.constant 0 : index
    %22 = vector.load %arg0[%c0_25, %c0_26] : memref<128x128xbf16, #tpu.memory_space<vmem>>, vector<128x128xbf16>
    %23 = arith.truncf %21 : vector<128x128xf32> to vector<128x128xbf16>
    %cst_27 = arith.constant dense<0.000000e+00> : vector<128x128xf32>
    %24 = tpu.matmul %22, %23, %cst_27 {dimension_numbers = #tpu.dot_dimension_numbers<[1], [0], [0], [1], [0, 0, 1, 1], [], []>} : vector<128x128xbf16>, vector<128x128xbf16>, vector<128x128xf32> -> vector<128x128xf32>
    %c0_28 = arith.constant 0 : index
    %c0_29 = arith.constant 0 : index
    %25 = vector.load %arg8[%c0_28, %c0_29] : memref<128x256xf32, #tpu.memory_space<vmem>>, vector<128x128xf32>
    tpu.vector_store %arg8[%c0_28, %c0_29], %24 {strides = array<i32>} : memref<128x256xf32, #tpu.memory_space<vmem>>, vector<128x128xf32>,
    %c0_30 = arith.constant 0 : index
    %c0_31 = arith.constant 0 : index
    %26 = vector.load %arg8[%c0_30, %c0_31] : memref<128x256xf32, #tpu.memory_space<vmem>>, vector<128x256xf32>
    %c1 = arith.constant 1 : index
    %c0_32 = arith.constant 0 : index
    %c0_33 = arith.constant 0 : index
    %27 = vector.load %arg4[%c1, %c0_32, %c0_33] : memref<6x256x128xf32, #tpu.memory_space<vmem>>, vector<1x256x128xf32>
    %28 = vector.shape_cast %27 : vector<1x256x128xf32> to vector<256x128xf32>
    %cst_34 = arith.constant dense<0.000000e+00> : vector<128x128xf32>
    %29 = tpu.matmul %26, %28, %cst_34 {dimension_numbers = #tpu.dot_dimension_numbers<[1], [0], [0], [1], [0, 0, 1, 1], [], []>} : vector<128x256xf32>, vector<256x128xf32>, vector<128x128xf32> -> vector<128x128xf32>
    %c1_35 = arith.constant 1 : index
    %c0_36 = arith.constant 0 : index
    %c0_37 = arith.constant 0 : index
    %30 = vector.load %arg5[%c1_35, %c0_36, %c0_37] : memref<6x1x128xf32, #tpu.memory_space<vmem>>, vector<1x1x128xf32>
    %31 = vector.shape_cast %30 : vector<1x1x128xf32> to vector<1x128xf32>
    %32 = vector.broadcast %31 : vector<1x128xf32> to vector<128x128xf32>
    %33 = arith.addf %29, %32 : vector<128x128xf32>
    %c0_38 = arith.constant 0 : index
    %c0_39 = arith.constant 0 : index
    %34 = vector.load %arg1[%c0_38, %c0_39] : memref<128x128xbf16, #tpu.memory_space<vmem>>, vector<128x128xbf16>
    %35 = arith.truncf %33 : vector<128x128xf32> to vector<128x128xbf16>
    %cst_40 = arith.constant dense<0.000000e+00> : vector<128x128xf32>
    %36 = tpu.matmul %34, %35, %cst_40 {dimension_numbers = #tpu.dot_dimension_numbers<[1], [0], [0], [1], [0, 0, 1, 1], [], []>} : vector<128x128xbf16>, vector<128x128xbf16>, vector<128x128xf32> -> vector<128x128xf32>
    %cst_41 = arith.constant 0.000000e+00 : f32
    %37 = vector.broadcast %cst_41 : f32 to vector<128x128xf32>
    %38 = arith.maximumf %36, %37 : vector<128x128xf32>
    %c0_42 = arith.constant 0 : index
    %39 = memref.load %arg6[%c0_42] : memref<14xf32, #tpu.memory_space<smem>>
    %c0_43 = arith.constant 0 : index
    %c0_44 = arith.constant 0 : index
    %40 = vector.load %arg9[%c0_43, %c0_44] : memref<128x128xf32, #tpu.memory_space<vmem>>, vector<128x128xf32>
    %41 = vector.broadcast %39 : f32 to vector<128x128xf32>
    %42 = arith.mulf %41, %40 : vector<128x128xf32>
    %c1_45 = arith.constant 1 : index
    %43 = memref.load %arg6[%c1_45] : memref<14xf32, #tpu.memory_space<smem>>
    %44 = vector.broadcast %43 : f32 to vector<128x128xf32>
    %45 = arith.mulf %44, %38 : vector<128x128xf32>
    %46 = arith.addf %42, %45 : vector<128x128xf32>
    %c0_46 = arith.constant 0 : index
    %c0_47 = arith.constant 0 : index
    %47 = vector.load %arg10[%c0_46, %c0_47] : memref<128x128xf32, #tpu.memory_space<vmem>>, vector<128x128xf32>
    tpu.vector_store %arg10[%c0_46, %c0_47], %46 {strides = array<i32>} : memref<128x128xf32, #tpu.memory_space<vmem>>, vector<128x128xf32>,
    %c0_48 = arith.constant 0 : index
    %c0_49 = arith.constant 0 : index
    %48 = vector.load %arg10[%c0_48, %c0_49] : memref<128x128xf32, #tpu.memory_space<vmem>>, vector<128x128xf32>
    %c0_50 = arith.constant 0 : index
    %c0_51 = arith.constant 0 : index
    %49 = vector.load %arg0[%c0_50, %c0_51] : memref<128x128xbf16, #tpu.memory_space<vmem>>, vector<128x128xbf16>
    %50 = arith.truncf %48 : vector<128x128xf32> to vector<128x128xbf16>
    %cst_52 = arith.constant dense<0.000000e+00> : vector<128x128xf32>
    %51 = tpu.matmul %49, %50, %cst_52 {dimension_numbers = #tpu.dot_dimension_numbers<[1], [0], [0], [1], [0, 0, 1, 1], [], []>} : vector<128x128xbf16>, vector<128x128xbf16>, vector<128x128xf32> -> vector<128x128xf32>
    %c0_53 = arith.constant 0 : index
    %c0_54 = arith.constant 0 : index
    %52 = vector.load %arg8[%c0_53, %c0_54] : memref<128x256xf32, #tpu.memory_space<vmem>>, vector<128x128xf32>
    tpu.vector_store %arg8[%c0_53, %c0_54], %51 {strides = array<i32>} : memref<128x256xf32, #tpu.memory_space<vmem>>, vector<128x128xf32>,
    %c0_55 = arith.constant 0 : index
    %c0_56 = arith.constant 0 : index
    %53 = vector.load %arg8[%c0_55, %c0_56] : memref<128x256xf32, #tpu.memory_space<vmem>>, vector<128x256xf32>
    %c2 = arith.constant 2 : index
    %c0_57 = arith.constant 0 : index
    %c0_58 = arith.constant 0 : index
    %54 = vector.load %arg4[%c2, %c0_57, %c0_58] : memref<6x256x128xf32, #tpu.memory_space<vmem>>, vector<1x256x128xf32>
    %55 = vector.shape_cast %54 : vector<1x256x128xf32> to vector<256x128xf32>
    %cst_59 = arith.constant dense<0.000000e+00> : vector<128x128xf32>
    %56 = tpu.matmul %53, %55, %cst_59 {dimension_numbers = #tpu.dot_dimension_numbers<[1], [0], [0], [1], [0, 0, 1, 1], [], []>} : vector<128x256xf32>, vector<256x128xf32>, vector<128x128xf32> -> vector<128x128xf32>
    %c2_60 = arith.constant 2 : index
    %c0_61 = arith.constant 0 : index
    %c0_62 = arith.constant 0 : index
    %57 = vector.load %arg5[%c2_60, %c0_61, %c0_62] : memref<6x1x128xf32, #tpu.memory_space<vmem>>, vector<1x1x128xf32>
    %58 = vector.shape_cast %57 : vector<1x1x128xf32> to vector<1x128xf32>
    %59 = vector.broadcast %58 : vector<1x128xf32> to vector<128x128xf32>
    %60 = arith.addf %56, %59 : vector<128x128xf32>
    %c0_63 = arith.constant 0 : index
    %c0_64 = arith.constant 0 : index
    %61 = vector.load %arg1[%c0_63, %c0_64] : memref<128x128xbf16, #tpu.memory_space<vmem>>, vector<128x128xbf16>
    %62 = arith.truncf %60 : vector<128x128xf32> to vector<128x128xbf16>
    %cst_65 = arith.constant dense<0.000000e+00> : vector<128x128xf32>
    %63 = tpu.matmul %61, %62, %cst_65 {dimension_numbers = #tpu.dot_dimension_numbers<[1], [0], [0], [1], [0, 0, 1, 1], [], []>} : vector<128x128xbf16>, vector<128x128xbf16>, vector<128x128xf32> -> vector<128x128xf32>
    %cst_66 = arith.constant 0.000000e+00 : f32
    %64 = vector.broadcast %cst_66 : f32 to vector<128x128xf32>
    %65 = arith.maximumf %63, %64 : vector<128x128xf32>
    %c2_67 = arith.constant 2 : index
    %66 = memref.load %arg6[%c2_67] : memref<14xf32, #tpu.memory_space<smem>>
    %c0_68 = arith.constant 0 : index
    %c0_69 = arith.constant 0 : index
    %67 = vector.load %arg9[%c0_68, %c0_69] : memref<128x128xf32, #tpu.memory_space<vmem>>, vector<128x128xf32>
    %68 = vector.broadcast %66 : f32 to vector<128x128xf32>
    %69 = arith.mulf %68, %67 : vector<128x128xf32>
    %c3 = arith.constant 3 : index
    %70 = memref.load %arg6[%c3] : memref<14xf32, #tpu.memory_space<smem>>
    %c0_70 = arith.constant 0 : index
    %c0_71 = arith.constant 0 : index
    %71 = vector.load %arg10[%c0_70, %c0_71] : memref<128x128xf32, #tpu.memory_space<vmem>>, vector<128x128xf32>
    %72 = vector.broadcast %70 : f32 to vector<128x128xf32>
    %73 = arith.mulf %72, %71 : vector<128x128xf32>
    %74 = arith.addf %69, %73 : vector<128x128xf32>
    %c4 = arith.constant 4 : index
    %75 = memref.load %arg6[%c4] : memref<14xf32, #tpu.memory_space<smem>>
    %76 = vector.broadcast %75 : f32 to vector<128x128xf32>
    %77 = arith.mulf %76, %65 : vector<128x128xf32>
    %78 = arith.addf %74, %77 : vector<128x128xf32>
    %c0_72 = arith.constant 0 : index
    %c0_73 = arith.constant 0 : index
    %79 = vector.load %arg11[%c0_72, %c0_73] : memref<128x128xf32, #tpu.memory_space<vmem>>, vector<128x128xf32>
    tpu.vector_store %arg11[%c0_72, %c0_73], %78 {strides = array<i32>} : memref<128x128xf32, #tpu.memory_space<vmem>>, vector<128x128xf32>,
    %c0_74 = arith.constant 0 : index
    %c0_75 = arith.constant 0 : index
    %80 = vector.load %arg11[%c0_74, %c0_75] : memref<128x128xf32, #tpu.memory_space<vmem>>, vector<128x128xf32>
    %c0_76 = arith.constant 0 : index
    %c0_77 = arith.constant 0 : index
    %81 = vector.load %arg0[%c0_76, %c0_77] : memref<128x128xbf16, #tpu.memory_space<vmem>>, vector<128x128xbf16>
    %82 = arith.truncf %80 : vector<128x128xf32> to vector<128x128xbf16>
    %cst_78 = arith.constant dense<0.000000e+00> : vector<128x128xf32>
    %83 = tpu.matmul %81, %82, %cst_78 {dimension_numbers = #tpu.dot_dimension_numbers<[1], [0], [0], [1], [0, 0, 1, 1], [], []>} : vector<128x128xbf16>, vector<128x128xbf16>, vector<128x128xf32> -> vector<128x128xf32>
    %c0_79 = arith.constant 0 : index
    %c0_80 = arith.constant 0 : index
    %84 = vector.load %arg8[%c0_79, %c0_80] : memref<128x256xf32, #tpu.memory_space<vmem>>, vector<128x128xf32>
    tpu.vector_store %arg8[%c0_79, %c0_80], %83 {strides = array<i32>} : memref<128x256xf32, #tpu.memory_space<vmem>>, vector<128x128xf32>,
    %c0_81 = arith.constant 0 : index
    %c0_82 = arith.constant 0 : index
    %85 = vector.load %arg8[%c0_81, %c0_82] : memref<128x256xf32, #tpu.memory_space<vmem>>, vector<128x256xf32>
    %c3_83 = arith.constant 3 : index
    %c0_84 = arith.constant 0 : index
    %c0_85 = arith.constant 0 : index
    %86 = vector.load %arg4[%c3_83, %c0_84, %c0_85] : memref<6x256x128xf32, #tpu.memory_space<vmem>>, vector<1x256x128xf32>
    %87 = vector.shape_cast %86 : vector<1x256x128xf32> to vector<256x128xf32>
    %cst_86 = arith.constant dense<0.000000e+00> : vector<128x128xf32>
    %88 = tpu.matmul %85, %87, %cst_86 {dimension_numbers = #tpu.dot_dimension_numbers<[1], [0], [0], [1], [0, 0, 1, 1], [], []>} : vector<128x256xf32>, vector<256x128xf32>, vector<128x128xf32> -> vector<128x128xf32>
    %c3_87 = arith.constant 3 : index
    %c0_88 = arith.constant 0 : index
    %c0_89 = arith.constant 0 : index
    %89 = vector.load %arg5[%c3_87, %c0_88, %c0_89] : memref<6x1x128xf32, #tpu.memory_space<vmem>>, vector<1x1x128xf32>
    %90 = vector.shape_cast %89 : vector<1x1x128xf32> to vector<1x128xf32>
    %91 = vector.broadcast %90 : vector<1x128xf32> to vector<128x128xf32>
    %92 = arith.addf %88, %91 : vector<128x128xf32>
    %c0_90 = arith.constant 0 : index
    %c0_91 = arith.constant 0 : index
    %93 = vector.load %arg1[%c0_90, %c0_91] : memref<128x128xbf16, #tpu.memory_space<vmem>>, vector<128x128xbf16>
    %94 = arith.truncf %92 : vector<128x128xf32> to vector<128x128xbf16>
    %cst_92 = arith.constant dense<0.000000e+00> : vector<128x128xf32>
    %95 = tpu.matmul %93, %94, %cst_92 {dimension_numbers = #tpu.dot_dimension_numbers<[1], [0], [0], [1], [0, 0, 1, 1], [], []>} : vector<128x128xbf16>, vector<128x128xbf16>, vector<128x128xf32> -> vector<128x128xf32>
    %cst_93 = arith.constant 0.000000e+00 : f32
    %96 = vector.broadcast %cst_93 : f32 to vector<128x128xf32>
    %97 = arith.maximumf %95, %96 : vector<128x128xf32>
    %c5 = arith.constant 5 : index
    %98 = memref.load %arg6[%c5] : memref<14xf32, #tpu.memory_space<smem>>
    %c0_94 = arith.constant 0 : index
    %c0_95 = arith.constant 0 : index
    %99 = vector.load %arg9[%c0_94, %c0_95] : memref<128x128xf32, #tpu.memory_space<vmem>>, vector<128x128xf32>
    %100 = vector.broadcast %98 : f32 to vector<128x128xf32>
    %101 = arith.mulf %100, %99 : vector<128x128xf32>
    %c6 = arith.constant 6 : index
    %102 = memref.load %arg6[%c6] : memref<14xf32, #tpu.memory_space<smem>>
    %c0_96 = arith.constant 0 : index
    %c0_97 = arith.constant 0 : index
    %103 = vector.load %arg10[%c0_96, %c0_97] : memref<128x128xf32, #tpu.memory_space<vmem>>, vector<128x128xf32>
    %104 = vector.broadcast %102 : f32 to vector<128x128xf32>
    %105 = arith.mulf %104, %103 : vector<128x128xf32>
    %106 = arith.addf %101, %105 : vector<128x128xf32>
    %c7 = arith.constant 7 : index
    %107 = memref.load %arg6[%c7] : memref<14xf32, #tpu.memory_space<smem>>
    %c0_98 = arith.constant 0 : index
    %c0_99 = arith.constant 0 : index
    %108 = vector.load %arg11[%c0_98, %c0_99] : memref<128x128xf32, #tpu.memory_space<vmem>>, vector<128x128xf32>
    %109 = vector.broadcast %107 : f32 to vector<128x128xf32>
    %110 = arith.mulf %109, %108 : vector<128x128xf32>
    %111 = arith.addf %106, %110 : vector<128x128xf32>
    %c8 = arith.constant 8 : index
    %112 = memref.load %arg6[%c8] : memref<14xf32, #tpu.memory_space<smem>>
    %113 = vector.broadcast %112 : f32 to vector<128x128xf32>
    %114 = arith.mulf %113, %97 : vector<128x128xf32>
    %115 = arith.addf %111, %114 : vector<128x128xf32>
    %c0_100 = arith.constant 0 : index
    %c0_101 = arith.constant 0 : index
    %116 = vector.load %arg12[%c0_100, %c0_101] : memref<128x128xf32, #tpu.memory_space<vmem>>, vector<128x128xf32>
    tpu.vector_store %arg12[%c0_100, %c0_101], %115 {strides = array<i32>} : memref<128x128xf32, #tpu.memory_space<vmem>>, vector<128x128xf32>,
    %c0_102 = arith.constant 0 : index
    %c0_103 = arith.constant 0 : index
    %117 = vector.load %arg12[%c0_102, %c0_103] : memref<128x128xf32, #tpu.memory_space<vmem>>, vector<128x128xf32>
    %c0_104 = arith.constant 0 : index
    %c0_105 = arith.constant 0 : index
    %118 = vector.load %arg0[%c0_104, %c0_105] : memref<128x128xbf16, #tpu.memory_space<vmem>>, vector<128x128xbf16>
    %119 = arith.truncf %117 : vector<128x128xf32> to vector<128x128xbf16>
    %cst_106 = arith.constant dense<0.000000e+00> : vector<128x128xf32>
    %120 = tpu.matmul %118, %119, %cst_106 {dimension_numbers = #tpu.dot_dimension_numbers<[1], [0], [0], [1], [0, 0, 1, 1], [], []>} : vector<128x128xbf16>, vector<128x128xbf16>, vector<128x128xf32> -> vector<128x128xf32>
    %c0_107 = arith.constant 0 : index
    %c0_108 = arith.constant 0 : index
    %121 = vector.load %arg8[%c0_107, %c0_108] : memref<128x256xf32, #tpu.memory_space<vmem>>, vector<128x128xf32>
    tpu.vector_store %arg8[%c0_107, %c0_108], %120 {strides = array<i32>} : memref<128x256xf32, #tpu.memory_space<vmem>>, vector<128x128xf32>,
    %c0_109 = arith.constant 0 : index
    %c0_110 = arith.constant 0 : index
    %122 = vector.load %arg8[%c0_109, %c0_110] : memref<128x256xf32, #tpu.memory_space<vmem>>, vector<128x256xf32>
    %c4_111 = arith.constant 4 : index
    %c0_112 = arith.constant 0 : index
    %c0_113 = arith.constant 0 : index
    %123 = vector.load %arg4[%c4_111, %c0_112, %c0_113] : memref<6x256x128xf32, #tpu.memory_space<vmem>>, vector<1x256x128xf32>
    %124 = vector.shape_cast %123 : vector<1x256x128xf32> to vector<256x128xf32>
    %cst_114 = arith.constant dense<0.000000e+00> : vector<128x128xf32>
    %125 = tpu.matmul %122, %124, %cst_114 {dimension_numbers = #tpu.dot_dimension_numbers<[1], [0], [0], [1], [0, 0, 1, 1], [], []>} : vector<128x256xf32>, vector<256x128xf32>, vector<128x128xf32> -> vector<128x128xf32>
    %c4_115 = arith.constant 4 : index
    %c0_116 = arith.constant 0 : index
    %c0_117 = arith.constant 0 : index
    %126 = vector.load %arg5[%c4_115, %c0_116, %c0_117] : memref<6x1x128xf32, #tpu.memory_space<vmem>>, vector<1x1x128xf32>
    %127 = vector.shape_cast %126 : vector<1x1x128xf32> to vector<1x128xf32>
    %128 = vector.broadcast %127 : vector<1x128xf32> to vector<128x128xf32>
    %129 = arith.addf %125, %128 : vector<128x128xf32>
    %c0_118 = arith.constant 0 : index
    %c0_119 = arith.constant 0 : index
    %130 = vector.load %arg1[%c0_118, %c0_119] : memref<128x128xbf16, #tpu.memory_space<vmem>>, vector<128x128xbf16>
    %131 = arith.truncf %129 : vector<128x128xf32> to vector<128x128xbf16>
    %cst_120 = arith.constant dense<0.000000e+00> : vector<128x128xf32>
    %132 = tpu.matmul %130, %131, %cst_120 {dimension_numbers = #tpu.dot_dimension_numbers<[1], [0], [0], [1], [0, 0, 1, 1], [], []>} : vector<128x128xbf16>, vector<128x128xbf16>, vector<128x128xf32> -> vector<128x128xf32>
    %cst_121 = arith.constant 0.000000e+00 : f32
    %133 = vector.broadcast %cst_121 : f32 to vector<128x128xf32>
    %134 = arith.maximumf %132, %133 : vector<128x128xf32>
    %c9 = arith.constant 9 : index
    %135 = memref.load %arg6[%c9] : memref<14xf32, #tpu.memory_space<smem>>
    %c0_122 = arith.constant 0 : index
    %c0_123 = arith.constant 0 : index
    %136 = vector.load %arg9[%c0_122, %c0_123] : memref<128x128xf32, #tpu.memory_space<vmem>>, vector<128x128xf32>
    %137 = vector.broadcast %135 : f32 to vector<128x128xf32>
    %138 = arith.mulf %137, %136 : vector<128x128xf32>
    %c10 = arith.constant 10 : index
    %139 = memref.load %arg6[%c10] : memref<14xf32, #tpu.memory_space<smem>>
    %c0_124 = arith.constant 0 : index
    %c0_125 = arith.constant 0 : index
    %140 = vector.load %arg10[%c0_124, %c0_125] : memref<128x128xf32, #tpu.memory_space<vmem>>, vector<128x128xf32>
    %141 = vector.broadcast %139 : f32 to vector<128x128xf32>
    %142 = arith.mulf %141, %140 : vector<128x128xf32>
    %143 = arith.addf %138, %142 : vector<128x128xf32>
    %c11 = arith.constant 11 : index
    %144 = memref.load %arg6[%c11] : memref<14xf32, #tpu.memory_space<smem>>
    %c0_126 = arith.constant 0 : index
    %c0_127 = arith.constant 0 : index
    %145 = vector.load %arg11[%c0_126, %c0_127] : memref<128x128xf32, #tpu.memory_space<vmem>>, vector<128x128xf32>
    %146 = vector.broadcast %144 : f32 to vector<128x128xf32>
    %147 = arith.mulf %146, %145 : vector<128x128xf32>
    %148 = arith.addf %143, %147 : vector<128x128xf32>
    %c12 = arith.constant 12 : index
    %149 = memref.load %arg6[%c12] : memref<14xf32, #tpu.memory_space<smem>>
    %c0_128 = arith.constant 0 : index
    %c0_129 = arith.constant 0 : index
    %150 = vector.load %arg12[%c0_128, %c0_129] : memref<128x128xf32, #tpu.memory_space<vmem>>, vector<128x128xf32>
    %151 = vector.broadcast %149 : f32 to vector<128x128xf32>
    %152 = arith.mulf %151, %150 : vector<128x128xf32>
    %153 = arith.addf %148, %152 : vector<128x128xf32>
    %c13 = arith.constant 13 : index
    %154 = memref.load %arg6[%c13] : memref<14xf32, #tpu.memory_space<smem>>
    %155 = vector.broadcast %154 : f32 to vector<128x128xf32>
    %156 = arith.mulf %155, %134 : vector<128x128xf32>
    %157 = arith.addf %153, %156 : vector<128x128xf32>
    %c0_130 = arith.constant 0 : index
    %c0_131 = arith.constant 0 : index
    %158 = vector.load %arg0[%c0_130, %c0_131] : memref<128x128xbf16, #tpu.memory_space<vmem>>, vector<128x128xbf16>
    %159 = arith.truncf %157 : vector<128x128xf32> to vector<128x128xbf16>
    %cst_132 = arith.constant dense<0.000000e+00> : vector<128x128xf32>
    %160 = tpu.matmul %158, %159, %cst_132 {dimension_numbers = #tpu.dot_dimension_numbers<[1], [0], [0], [1], [0, 0, 1, 1], [], []>} : vector<128x128xbf16>, vector<128x128xbf16>, vector<128x128xf32> -> vector<128x128xf32>
    %c0_133 = arith.constant 0 : index
    %c0_134 = arith.constant 0 : index
    %161 = vector.load %arg8[%c0_133, %c0_134] : memref<128x256xf32, #tpu.memory_space<vmem>>, vector<128x128xf32>
    tpu.vector_store %arg8[%c0_133, %c0_134], %160 {strides = array<i32>} : memref<128x256xf32, #tpu.memory_space<vmem>>, vector<128x128xf32>,
    %c0_135 = arith.constant 0 : index
    %c0_136 = arith.constant 0 : index
    %162 = vector.load %arg8[%c0_135, %c0_136] : memref<128x256xf32, #tpu.memory_space<vmem>>, vector<128x256xf32>
    %c5_137 = arith.constant 5 : index
    %c0_138 = arith.constant 0 : index
    %c0_139 = arith.constant 0 : index
    %163 = vector.load %arg4[%c5_137, %c0_138, %c0_139] : memref<6x256x128xf32, #tpu.memory_space<vmem>>, vector<1x256x128xf32>
    %164 = vector.shape_cast %163 : vector<1x256x128xf32> to vector<256x128xf32>
    %cst_140 = arith.constant dense<0.000000e+00> : vector<128x128xf32>
    %165 = tpu.matmul %162, %164, %cst_140 {dimension_numbers = #tpu.dot_dimension_numbers<[1], [0], [0], [1], [0, 0, 1, 1], [], []>} : vector<128x256xf32>, vector<256x128xf32>, vector<128x128xf32> -> vector<128x128xf32>
    %c5_141 = arith.constant 5 : index
    %c0_142 = arith.constant 0 : index
    %c0_143 = arith.constant 0 : index
    %166 = vector.load %arg5[%c5_141, %c0_142, %c0_143] : memref<6x1x128xf32, #tpu.memory_space<vmem>>, vector<1x1x128xf32>
    %167 = vector.shape_cast %166 : vector<1x1x128xf32> to vector<1x128xf32>
    %168 = vector.broadcast %167 : vector<1x128xf32> to vector<128x128xf32>
    %169 = arith.addf %165, %168 : vector<128x128xf32>
    %c0_144 = arith.constant 0 : index
    %c0_145 = arith.constant 0 : index
    %170 = vector.load %arg1[%c0_144, %c0_145] : memref<128x128xbf16, #tpu.memory_space<vmem>>, vector<128x128xbf16>
    %171 = arith.truncf %169 : vector<128x128xf32> to vector<128x128xbf16>
    %cst_146 = arith.constant dense<0.000000e+00> : vector<128x128xf32>
    %172 = tpu.matmul %170, %171, %cst_146 {dimension_numbers = #tpu.dot_dimension_numbers<[1], [0], [0], [1], [0, 0, 1, 1], [], []>} : vector<128x128xbf16>, vector<128x128xbf16>, vector<128x128xf32> -> vector<128x128xf32>
    %cst_147 = arith.constant 0.000000e+00 : f32
    %173 = vector.broadcast %cst_147 : f32 to vector<128x128xf32>
    %174 = arith.maximumf %172, %173 : vector<128x128xf32>
    %c0_148 = arith.constant 0 : index
    %c0_149 = arith.constant 0 : index
    %175 = vector.load %arg7[%c0_148, %c0_149] : memref<128x128xf32, #tpu.memory_space<vmem>>, vector<128x128xf32>
    tpu.vector_store %arg7[%c0_148, %c0_149], %174 {strides = array<i32>} : memref<128x128xf32, #tpu.memory_space<vmem>>, vector<128x128xf32>,
    return
  }
}

</mosaic_0001>

<llo_original>
// kernel: gnn_forward.1
$region0: #{gnn_forward.1}
  #allocation0 [shape = 'u32[]', space=smem, size = 0x4, offset = 0x4, fixed_abs, tag = 'smem constant byte address 0x4 - core index']
  #allocation1 [shape = 'u32[144,128]{1,0:T(1,128)}', space=vmem, size = 0x12000, scoped, tag = 'internal scratch']
  #allocation2 [shape = 'f32[128,256]{1,0:T(8,128)}', space=vmem, size = 0x20000, scoped, tag = 'scratch operand']
  #allocation3 [shape = 'f32[128,128]{1,0:T(8,128)}', space=vmem, size = 0x10000, scoped, tag = 'scratch operand']
  #allocation4 [shape = 'f32[128,128]{1,0:T(8,128)}', space=vmem, size = 0x10000, scoped, tag = 'scratch operand']
  #allocation5 [shape = 'f32[128,128]{1,0:T(8,128)}', space=vmem, size = 0x10000, scoped, tag = 'scratch operand']
  #allocation6 [shape = 'f32[128,128]{1,0:T(8,128)}', space=vmem, size = 0x10000, scoped, tag = 'scratch operand']
  %s0 = inlined_call_operand.vmem [shape: bf16[128,128], index: 0, kind: input, shape index: {}]
  %s1 = inlined_call_operand.vmem [shape: bf16[128,128], index: 1, kind: input, shape index: {}]
  %s2 = inlined_call_operand.vmem [shape: f32[128,128], index: 2, kind: input, shape index: {}]
  %s3 = inlined_call_operand.vmem [shape: f32[128,128], index: 3, kind: input, shape index: {}]
  %s4 = inlined_call_operand.vmem [shape: f32[6,256,128], index: 4, kind: input, shape index: {}]
  %s5 = inlined_call_operand.vmem [shape: f32[6,1,128], index: 5, kind: input, shape index: {}]
  %s6 = inlined_call_operand.vmem [shape: f32[14], index: 6, kind: input, shape index: {}]
  %s7 = inlined_call_operand.vmem [shape: f32[128,128], index: 7, kind: output, shape index: {}]
  %s8 = sld [smem:[#allocation0]]
  $region42: #{gnn_forward.1} parent=0
    _
  %s10 = ssub.s32 1, %s8
  %s11 = scalar_select 0, %s10, %s8
  $region1: #{gnn_forward.1} parent=0
    #allocation7 [shape = 'u8[512]{0}', space=smem, size = 0x200, scoped, tag = 'input window, operand 6, single buffered']
    #allocation8 [shape = 's32[1]{0}', space=sflag, size = 0x4, scoped, tag = 'scoped memory for gnn_forward.1']
    %12 = vsyncpa [#allocation8], 0
    // Predicated region
    $region2: #{gnn_forward.1} parent=1 // pred_check
      _
    $region3: #{gnn_forward.1} parent=1 // pred_check_branch
      %14 = sbr.rel (0) target = $region5
    $region4: #{gnn_forward.1} parent=1 // pred_region
      _
    $region5: #{gnn_forward.1} parent=1 // pred_fallthru
      _
    // Predicated region
    $region6: #{gnn_forward.1} parent=1 // pred_check
      _
    $region7: #{gnn_forward.1} parent=1 // pred_check_branch
      %16 = sbr.rel (0) target = $region9
    $region8: #{gnn_forward.1} parent=1 // pred_region
      _
    $region9: #{gnn_forward.1} parent=1 // pred_fallthru
      _
    // Predicated region
    $region10: #{gnn_forward.1} parent=1 // pred_check
      _
    $region11: #{gnn_forward.1} parent=1 // pred_check_branch
      %18 = sbr.rel (0) target = $region13
    $region12: #{gnn_forward.1} parent=1 // pred_region
      _
    $region13: #{gnn_forward.1} parent=1 // pred_fallthru
      _
    // Predicated region
    $region14: #{gnn_forward.1} parent=1 // pred_check
      _
    $region15: #{gnn_forward.1} parent=1 // pred_check_branch
      %20 = sbr.rel (0) target = $region17
    $region16: #{gnn_forward.1} parent=1 // pred_region
      _
    $region17: #{gnn_forward.1} parent=1 // pred_fallthru
      _
    // Predicated region
    $region18: #{gnn_forward.1} parent=1 // pred_check
      _
    $region19: #{gnn_forward.1} parent=1 // pred_check_branch
      %22 = sbr.rel (0) target = $region21
    $region20: #{gnn_forward.1} parent=1 // pred_region
      _
    $region21: #{gnn_forward.1} parent=1 // pred_fallthru
      _
    // Predicated region
    $region22: #{gnn_forward.1} parent=1 // pred_check
      _
    $region23: #{gnn_forward.1} parent=1 // pred_check_branch
      %24 = sbr.rel (0) target = $region25
    $region24: #{gnn_forward.1} parent=1 // pred_region
      _
    $region25: #{gnn_forward.1} parent=1 // pred_fallthru
      _
    // Predicated region
    $region26: #{gnn_forward.1} parent=1 // pred_check
      _
    $region27: #{gnn_forward.1} parent=1 // pred_check_branch
      %26 = sbr.rel (0) target = $region29
    $region28: #{gnn_forward.1} parent=1 // pred_region
      %s28 = ssub.s32 16, 16
      %29 = vsyncadd [#allocation8], %s28
      %s31 = sshll.u32 %s6, 4
      %s32 = int_to_ptr.vmem [resolvable:$true] %s31
      %34 = dma.vmem_to_smem %s32, 16, [#allocation7], [#allocation8]
    $region29: #{gnn_forward.1} parent=1 // pred_fallthru
      _
    // Predicated region
    $region30: #{gnn_forward.1} parent=1 // pred_check
      _
    $region31: #{gnn_forward.1} parent=1 // pred_check_branch
      %36 = sbr.rel (0) target = $region33
    $region32: #{gnn_forward.1} parent=1 // pred_region
      %37 = dma.done [#allocation8], 16
    $region33: #{gnn_forward.1} parent=1 // pred_fallthru
      _
    %38 = sfence
    %v40 = vld [vmem:[%s3] sm:$0xff]
    %v41 = vld [vmem:[%s3 + $0x8] sm:$0xff]
    %v42 = vld [vmem:[%s3 + $0x10] sm:$0xff]
    %v43 = vld [vmem:[%s3 + $0x18] sm:$0xff]
    %v44 = vld [vmem:[%s3 + $0x20] sm:$0xff]
    %v45 = vld [vmem:[%s3 + $0x28] sm:$0xff]
    %v46 = vld [vmem:[%s3 + $0x30] sm:$0xff]
    %v47 = vld [vmem:[%s3 + $0x38] sm:$0xff]
    %v48 = vld [vmem:[%s3 + $0x40] sm:$0xff]
    %v49 = vld [vmem:[%s3 + $0x48] sm:$0xff]
    %v50 = vld [vmem:[%s3 + $0x50] sm:$0xff]
    %v51 = vld [vmem:[%s3 + $0x58] sm:$0xff]
    %v52 = vld [vmem:[%s3 + $0x60] sm:$0xff]
    %v53 = vld [vmem:[%s3 + $0x68] sm:$0xff]
    %v54 = vld [vmem:[%s3 + $0x70] sm:$0xff]
    %v55 = vld [vmem:[%s3 + $0x78] sm:$0xff]
    %56 = vst [vmem:[#allocation2 + $0x8] sm:$0xff] %v40
    %57 = vst [vmem:[#allocation2 + $0x18] sm:$0xff] %v41
    %58 = vst [vmem:[#allocation2 + $0x28] sm:$0xff] %v42
    %59 = vst [vmem:[#allocation2 + $0x38] sm:$0xff] %v43
    %60 = vst [vmem:[#allocation2 + $0x48] sm:$0xff] %v44
    %61 = vst [vmem:[#allocation2 + $0x58] sm:$0xff] %v45
    %62 = vst [vmem:[#allocation2 + $0x68] sm:$0xff] %v46
    %63 = vst [vmem:[#allocation2 + $0x78] sm:$0xff] %v47
    %64 = vst [vmem:[#allocation2 + $0x88] sm:$0xff] %v48
    %65 = vst [vmem:[#allocation2 + $0x98] sm:$0xff] %v49
    %66 = vst [vmem:[#allocation2 + $0xa8] sm:$0xff] %v50
    %67 = vst [vmem:[#allocation2 + $0xb8] sm:$0xff] %v51
    %68 = vst [vmem:[#allocation2 + $0xc8] sm:$0xff] %v52
    %69 = vst [vmem:[#allocation2 + $0xd8] sm:$0xff] %v53
    %70 = vst [vmem:[#allocation2 + $0xe8] sm:$0xff] %v54
    %71 = vst [vmem:[#allocation2 + $0xf8] sm:$0xff] %v55
    %v72 = vld [vmem:[%s2] sm:$0xff]
    %v73 = vld [vmem:[%s2 + $0x8] sm:$0xff]
    %v74 = vld [vmem:[%s2 + $0x10] sm:$0xff]
    %v75 = vld [vmem:[%s2 + $0x18] sm:$0xff]
    %v76 = vld [vmem:[%s2 + $0x20] sm:$0xff]
    %v77 = vld [vmem:[%s2 + $0x28] sm:$0xff]
    %v78 = vld [vmem:[%s2 + $0x30] sm:$0xff]
    %v79 = vld [vmem:[%s2 + $0x38] sm:$0xff]
    %v80 = vld [vmem:[%s2 + $0x40] sm:$0xff]
    %v81 = vld [vmem:[%s2 + $0x48] sm:$0xff]
    %v82 = vld [vmem:[%s2 + $0x50] sm:$0xff]
    %v83 = vld [vmem:[%s2 + $0x58] sm:$0xff]
    %v84 = vld [vmem:[%s2 + $0x60] sm:$0xff]
    %v85 = vld [vmem:[%s2 + $0x68] sm:$0xff]
    %v86 = vld [vmem:[%s2 + $0x70] sm:$0xff]
    %v87 = vld [vmem:[%s2 + $0x78] sm:$0xff]
    %v88 = vld [vmem:[%s0] sm:$0xf]
    %v89 = vld [vmem:[%s0 + $0x4] sm:$0xf]
    %v90 = vld [vmem:[%s0 + $0x8] sm:$0xf]
    %v91 = vld [vmem:[%s0 + $0xc] sm:$0xf]
    %v92 = vld [vmem:[%s0 + $0x10] sm:$0xf]
    %v93 = vld [vmem:[%s0 + $0x14] sm:$0xf]
    %v94 = vld [vmem:[%s0 + $0x18] sm:$0xf]
    %v95 = vld [vmem:[%s0 + $0x1c] sm:$0xf]
    %v96 = vld [vmem:[%s0 + $0x20] sm:$0xf]
    %v97 = vld [vmem:[%s0 + $0x24] sm:$0xf]
    %v98 = vld [vmem:[%s0 + $0x28] sm:$0xf]
    %v99 = vld [vmem:[%s0 + $0x2c] sm:$0xf]
    %v100 = vld [vmem:[%s0 + $0x30] sm:$0xf]
    %v101 = vld [vmem:[%s0 + $0x34] sm:$0xf]
    %v102 = vld [vmem:[%s0 + $0x38] sm:$0xf]
    %v103 = vld [vmem:[%s0 + $0x3c] sm:$0xf]
    %v104 = vpack.c.bf16 %v73, %v72
    %v105 = vpack.c.bf16 %v75, %v74
    %v106 = vpack.c.bf16 %v77, %v76
    %v107 = vpack.c.bf16 %v79, %v78
    %v108 = vpack.c.bf16 %v81, %v80
    %v109 = vpack.c.bf16 %v83, %v82
    %v110 = vpack.c.bf16 %v85, %v84
    %v111 = vpack.c.bf16 %v87, %v86
    %v128 = vunpack.c.l.b16 %v88
    %v129 = vunpack.c.l.b16 %v89
    %v130 = vunpack.c.l.b16 %v90
    %v131 = vunpack.c.l.b16 %v91
    %v132 = vunpack.c.l.b16 %v92
    %v133 = vunpack.c.l.b16 %v93
    %v134 = vunpack.c.l.b16 %v94
    %v135 = vunpack.c.l.b16 %v95
    %v136 = vunpack.c.l.b16 %v96
    %v137 = vunpack.c.l.b16 %v97
    %v138 = vunpack.c.l.b16 %v98
    %v139 = vunpack.c.l.b16 %v99
    %v140 = vunpack.c.l.b16 %v100
    %v141 = vunpack.c.l.b16 %v101
    %v142 = vunpack.c.l.b16 %v102
    %v143 = vunpack.c.l.b16 %v103
    %v144 = vpack.c.b16 %v129, %v128
    %v145 = vpack.c.b16 %v131, %v130
    %v146 = vpack.c.b16 %v133, %v132
    %v147 = vpack.c.b16 %v135, %v134
    %v148 = vpack.c.b16 %v137, %v136
    %v149 = vpack.c.b16 %v139, %v138
    %v150 = vpack.c.b16 %v141, %v140
    %v151 = vpack.c.b16 %v143, %v142
    %160 = vmatprep.subr.bf16.mxu0 0
    %161 = vmatpush1.bf16.msra.mxu0 %v104
    %162 = vmatprep.subr.bf16.mxu0 0
    %163 = vmatpush1.bf16.msra.mxu0 %v105
    %164 = vmatprep.subr.bf16.mxu0 0
    %165 = vmatpush1.bf16.msra.mxu0 %v106
    %166 = vmatprep.subr.bf16.mxu0 0
    %167 = vmatpush1.bf16.msra.mxu0 %v107
    %168 = vmatprep.subr.bf16.mxu0 0
    %169 = vmatpush1.bf16.msra.mxu0 %v108
    %170 = vmatprep.subr.bf16.mxu0 0
    %171 = vmatpush1.bf16.msra.mxu0 %v109
    %172 = vmatprep.subr.bf16.mxu0 0
    %173 = vmatpush1.bf16.msra.mxu0 %v110
    %174 = vmatprep.subr.bf16.mxu0 0
    %175 = vmatpush1.bf16.msra.mxu0 %v111
    %176 = vmatprep.subr.bf16.mxu0 0
    %177 = vmatpush1.bf16.msra.mxu0 0
    %178 = vmatprep.subr.bf16.mxu0 0
    %179 = vmatpush1.bf16.msra.mxu0 0
    %180 = vmatprep.subr.bf16.mxu0 0
    %181 = vmatpush1.bf16.msra.mxu0 0
    %182 = vmatprep.subr.bf16.mxu0 0
    %183 = vmatpush1.bf16.msra.mxu0 0
    %184 = vmatprep.subr.bf16.mxu0 0
    %185 = vmatpush1.bf16.msra.mxu0 0
    %186 = vmatprep.subr.bf16.mxu0 0
    %187 = vmatpush1.bf16.msra.mxu0 0
    %188 = vmatprep.subr.bf16.mxu0 0
    %189 = vmatpush1.bf16.msra.mxu0 0
    %190 = vmatprep.subr.bf16.mxu0 0
    %191 = vmatpush1.bf16.msra.mxu0 0
    %192 = vmatprep.mubr.bf16.mxu0 0
    %193 = vmatmul.mubr.bf16.gmra.mrb[0].mxu0 %v144
    %v194 = vpop.f32.mrb[0].mxu0
    %v195 = vadd.f32 0.0, %v194
    %v196 = vpop.f32.mrb[0].mxu0
    %v197 = vpop.f32.mrb[0].mxu0
    %v198 = vadd.f32 0.0, %v197
    %v199 = vpop.f32.mrb[0].mxu0
    %200 = vmatprep.mubr.bf16.mxu0 0
    %201 = vmatmul.mubr.bf16.gmra.mrb[0].mxu0 %v145
    %v202 = vpop.f32.mrb[0].mxu0
    %v203 = vadd.f32 0.0, %v202
    %v204 = vpop.f32.mrb[0].mxu0
    %v205 = vpop.f32.mrb[0].mxu0
    %v206 = vadd.f32 0.0, %v205
    %v207 = vpop.f32.mrb[0].mxu0
    %208 = vmatprep.mubr.bf16.mxu0 0
    %209 = vmatmul.mubr.bf16.gmra.mrb[0].mxu0 %v146
    %v210 = vpop.f32.mrb[0].mxu0
    %v211 = vadd.f32 0.0, %v210
    %v212 = vpop.f32.mrb[0].mxu0
    %v213 = vpop.f32.mrb[0].mxu0
    %v214 = vadd.f32 0.0, %v213
    %v215 = vpop.f32.mrb[0].mxu0
    %216 = vmatprep.mubr.bf16.mxu0 0
    %217 = vmatmul.mubr.bf16.gmra.mrb[0].mxu0 %v147
    %v218 = vpop.f32.mrb[0].mxu0
    %v219 = vadd.f32 0.0, %v218
    %v220 = vpop.f32.mrb[0].mxu0
    %v221 = vpop.f32.mrb[0].mxu0
    %v222 = vadd.f32 0.0, %v221
    %v223 = vpop.f32.mrb[0].mxu0
    %224 = vmatprep.mubr.bf16.mxu0 0
    %225 = vmatmul.mubr.bf16.gmra.mrb[0].mxu0 %v148
    %v226 = vpop.f32.mrb[0].mxu0
    %v227 = vadd.f32 0.0, %v226
    %v228 = vpop.f32.mrb[0].mxu0
    %v229 = vpop.f32.mrb[0].mxu0
    %v230 = vadd.f32 0.0, %v229
    %v231 = vpop.f32.mrb[0].mxu0
    %232 = vmatprep.mubr.bf16.mxu0 0
    %233 = vmatmul.mubr.bf16.gmra.mrb[0].mxu0 %v149
    %v234 = vpop.f32.mrb[0].mxu0
    %v235 = vadd.f32 0.0, %v234
    %v236 = vpop.f32.mrb[0].mxu0
    %v237 = vpop.f32.mrb[0].mxu0
    %v238 = vadd.f32 0.0, %v237
    %v239 = vpop.f32.mrb[0].mxu0
    %240 = vmatprep.mubr.bf16.mxu0 0
    %241 = vmatmul.mubr.bf16.gmra.mrb[0].mxu0 %v150
    %v242 = vpop.f32.mrb[0].mxu0
    %v243 = vadd.f32 0.0, %v242
    %v244 = vpop.f32.mrb[0].mxu0
    %v245 = vpop.f32.mrb[0].mxu0
    %v246 = vadd.f32 0.0, %v245
    %v247 = vpop.f32.mrb[0].mxu0
    %248 = vmatprep.mubr.bf16.mxu0 0
    %249 = vmatmul.mubr.bf16.gmra.mrb[0].mxu0 %v151
    %v250 = vpop.f32.mrb[0].mxu0
    %v251 = vadd.f32 0.0, %v250
    %v252 = vpop.f32.mrb[0].mxu0
    %v253 = vpop.f32.mrb[0].mxu0
    %v254 = vadd.f32 0.0, %v253
    %v255 = vpop.f32.mrb[0].mxu0
    %256 = vdwg.mxu0
    %257 = vst [vmem:[#allocation2] sm:$0xff] %v195
    %258 = vst [vmem:[#allocation2 + $0x10] sm:$0xff] %v198
    %259 = vst [vmem:[#allocation2 + $0x20] sm:$0xff] %v203
    %260 = vst [vmem:[#allocation2 + $0x30] sm:$0xff] %v206
    %261 = vst [vmem:[#allocation2 + $0x40] sm:$0xff] %v211
    %262 = vst [vmem:[#allocation2 + $0x50] sm:$0xff] %v214
    %263 = vst [vmem:[#allocation2 + $0x60] sm:$0xff] %v219
    %264 = vst [vmem:[#allocation2 + $0x70] sm:$0xff] %v222
    %265 = vst [vmem:[#allocation2 + $0x80] sm:$0xff] %v227
    %266 = vst [vmem:[#allocation2 + $0x90] sm:$0xff] %v230
    %267 = vst [vmem:[#allocation2 + $0xa0] sm:$0xff] %v235
    %268 = vst [vmem:[#allocation2 + $0xb0] sm:$0xff] %v238
    %269 = vst [vmem:[#allocation2 + $0xc0] sm:$0xff] %v243
    %270 = vst [vmem:[#allocation2 + $0xd0] sm:$0xff] %v246
    %271 = vst [vmem:[#allocation2 + $0xe0] sm:$0xff] %v251
    %272 = vst [vmem:[#allocation2 + $0xf0] sm:$0xff] %v254
    %v273 = vld [vmem:[#allocation2] sm:$0xff]
    %v274 = vld [vmem:[#allocation2 + $0x8] sm:$0xff]
    %v275 = vld [vmem:[#allocation2 + $0x10] sm:$0xff]
    %v276 = vld [vmem:[#allocation2 + $0x18] sm:$0xff]
    %v277 = vld [vmem:[#allocation2 + $0x20] sm:$0xff]
    %v278 = vld [vmem:[#allocation2 + $0x28] sm:$0xff]
    %v279 = vld [vmem:[#allocation2 + $0x30] sm:$0xff]
    %v280 = vld [vmem:[#allocation2 + $0x38] sm:$0xff]
    %v281 = vld [vmem:[#allocation2 + $0x40] sm:$0xff]
    %v282 = vld [vmem:[#allocation2 + $0x48] sm:$0xff]
    %v283 = vld [vmem:[#allocation2 + $0x50] sm:$0xff]
    %v284 = vld [vmem:[#allocation2 + $0x58] sm:$0xff]
    %v285 = vld [vmem:[#allocation2 + $0x60] sm:$0xff]
    %v286 = vld [vmem:[#allocation2 + $0x68] sm:$0xff]
    %v287 = vld [vmem:[#allocation2 + $0x70] sm:$0xff]
    %v288 = vld [vmem:[#allocation2 + $0x78] sm:$0xff]
    %v289 = vld [vmem:[#allocation2 + $0x80] sm:$0xff]
    %v290 = vld [vmem:[#allocation2 + $0x88] sm:$0xff]
    %v291 = vld [vmem:[#allocation2 + $0x90] sm:$0xff]
    %v292 = vld [vmem:[#allocation2 + $0x98] sm:$0xff]
    %v293 = vld [vmem:[#allocation2 + $0xa0] sm:$0xff]
    %v294 = vld [vmem:[#allocation2 + $0xa8] sm:$0xff]
    %v295 = vld [vmem:[#allocation2 + $0xb0] sm:$0xff]
    %v296 = vld [vmem:[#allocation2 + $0xb8] sm:$0xff]
    %v297 = vld [vmem:[#allocation2 + $0xc0] sm:$0xff]
    %v298 = vld [vmem:[#allocation2 + $0xc8] sm:$0xff]
    %v299 = vld [vmem:[#allocation2 + $0xd0] sm:$0xff]
    %v300 = vld [vmem:[#allocation2 + $0xd8] sm:$0xff]
    %v301 = vld [vmem:[#allocation2 + $0xe0] sm:$0xff]
    %v302 = vld [vmem:[#allocation2 + $0xe8] sm:$0xff]
    %v303 = vld [vmem:[#allocation2 + $0xf0] sm:$0xff]
    %v304 = vld [vmem:[#allocation2 + $0xf8] sm:$0xff]
    %v305 = vld [vmem:[%s4] sm:$0xff]
    %v306 = vld [vmem:[%s4 + $0x8] sm:$0xff]
    %v307 = vld [vmem:[%s4 + $0x10] sm:$0xff]
    %v308 = vld [vmem:[%s4 + $0x18] sm:$0xff]
    %v309 = vld [vmem:[%s4 + $0x20] sm:$0xff]
    %v310 = vld [vmem:[%s4 + $0x28] sm:$0xff]
    %v311 = vld [vmem:[%s4 + $0x30] sm:$0xff]
    %v312 = vld [vmem:[%s4 + $0x38] sm:$0xff]
    %v313 = vld [vmem:[%s4 + $0x40] sm:$0xff]
    %v314 = vld [vmem:[%s4 + $0x48] sm:$0xff]
    %v315 = vld [vmem:[%s4 + $0x50] sm:$0xff]
    %v316 = vld [vmem:[%s4 + $0x58] sm:$0xff]
    %v317 = vld [vmem:[%s4 + $0x60] sm:$0xff]
    %v318 = vld [vmem:[%s4 + $0x68] sm:$0xff]
    %v319 = vld [vmem:[%s4 + $0x70] sm:$0xff]
    %v320 = vld [vmem:[%s4 + $0x78] sm:$0xff]
    %v321 = vld [vmem:[%s4 + $0x80] sm:$0xff]
    %v322 = vld [vmem:[%s4 + $0x88] sm:$0xff]
    %v323 = vld [vmem:[%s4 + $0x90] sm:$0xff]
    %v324 = vld [vmem:[%s4 + $0x98] sm:$0xff]
    %v325 = vld [vmem:[%s4 + $0xa0] sm:$0xff]
    %v326 = vld [vmem:[%s4 + $0xa8] sm:$0xff]
    %v327 = vld [vmem:[%s4 + $0xb0] sm:$0xff]
    %v328 = vld [vmem:[%s4 + $0xb8] sm:$0xff]
    %v329 = vld [vmem:[%s4 + $0xc0] sm:$0xff]
    %v330 = vld [vmem:[%s4 + $0xc8] sm:$0xff]
    %v331 = vld [vmem:[%s4 + $0xd0] sm:$0xff]
    %v332 = vld [vmem:[%s4 + $0xd8] sm:$0xff]
    %v333 = vld [vmem:[%s4 + $0xe0] sm:$0xff]
    %v334 = vld [vmem:[%s4 + $0xe8] sm:$0xff]
    %v335 = vld [vmem:[%s4 + $0xf0] sm:$0xff]
    %v336 = vld [vmem:[%s4 + $0xf8] sm:$0xff]
    %v337 = vld [vmem:[%s5] sm:$0x1]
    %v339 = vlaneseq
    %v340 = vshrl.u32 %v339, 7
    %v341 = vsub.s32 0, %v340
    %v342 = vrot.slane %v337, %v341
    %344 = vmatprep.subr.mxu0 0.0
    %345 = vmatpush1.msra.mxu0 %v305
    %346 = vmatprep.subr.mxu0 0.0
    %347 = vmatpush1.msra.mxu0 %v306
    %348 = vmatprep.subr.mxu0 0.0
    %349 = vmatpush1.msra.mxu0 %v307
    %350 = vmatprep.subr.mxu0 0.0
    %351 = vmatpush1.msra.mxu0 %v308
    %352 = vmatprep.subr.mxu0 0.0
    %353 = vmatpush1.msra.mxu0 %v309
    %354 = vmatprep.subr.mxu0 0.0
    %355 = vmatpush1.msra.mxu0 %v310
    %356 = vmatprep.subr.mxu0 0.0
    %357 = vmatpush1.msra.mxu0 %v311
    %358 = vmatprep.subr.mxu0 0.0
    %359 = vmatpush1.msra.mxu0 %v312
    %360 = vmatprep.subr.mxu0 0.0
    %361 = vmatpush1.msra.mxu0 %v313
    %362 = vmatprep.subr.mxu0 0.0
    %363 = vmatpush1.msra.mxu0 %v314
    %364 = vmatprep.subr.mxu0 0.0
    %365 = vmatpush1.msra.mxu0 %v315
    %366 = vmatprep.subr.mxu0 0.0
    %367 = vmatpush1.msra.mxu0 %v316
    %368 = vmatprep.subr.mxu0 0.0
    %369 = vmatpush1.msra.mxu0 %v317
    %370 = vmatprep.subr.mxu0 0.0
    %371 = vmatpush1.msra.mxu0 %v318
    %372 = vmatprep.subr.mxu0 0.0
    %373 = vmatpush1.msra.mxu0 %v319
    %374 = vmatprep.subr.mxu0 0.0
    %375 = vmatpush1.msra.mxu0 %v320
    %376 = vmatprep.subr.mxu0 0.0
    %377 = vmatpush1.msra.mxu0 %v321
    %378 = vmatprep.subr.mxu0 0.0
    %379 = vmatpush1.msra.mxu0 %v322
    %380 = vmatprep.subr.mxu0 0.0
    %381 = vmatpush1.msra.mxu0 %v323
    %382 = vmatprep.subr.mxu0 0.0
    %383 = vmatpush1.msra.mxu0 %v324
    %384 = vmatprep.subr.mxu0 0.0
    %385 = vmatpush1.msra.mxu0 %v325
    %386 = vmatprep.subr.mxu0 0.0
    %387 = vmatpush1.msra.mxu0 %v326
    %388 = vmatprep.subr.mxu0 0.0
    %389 = vmatpush1.msra.mxu0 %v327
    %390 = vmatprep.subr.mxu0 0.0
    %391 = vmatpush1.msra.mxu0 %v328
    %392 = vmatprep.subr.mxu0 0.0
    %393 = vmatpush1.msra.mxu0 %v329
    %394 = vmatprep.subr.mxu0 0.0
    %395 = vmatpush1.msra.mxu0 %v330
    %396 = vmatprep.subr.mxu0 0.0
    %397 = vmatpush1.msra.mxu0 %v331
    %398 = vmatprep.subr.mxu0 0.0
    %399 = vmatpush1.msra.mxu0 %v332
    %400 = vmatprep.subr.mxu0 0.0
    %401 = vmatpush1.msra.mxu0 %v333
    %402 = vmatprep.subr.mxu0 0.0
    %403 = vmatpush1.msra.mxu0 %v334
    %404 = vmatprep.subr.mxu0 0.0
    %405 = vmatpush1.msra.mxu0 %v335
    %406 = vmatprep.subr.mxu0 0.0
    %407 = vmatpush1.msra.mxu0 %v336
    %408 = vmatprep.mubr.f32.mxu0 %v274
    %409 = vmatmul.mubr.f32.gmra.mrb[0].mxu0 %v273
    %v410 = vpop.f32.mrb[0].mxu0
    %v411 = vadd.f32 %v342, %v410
    %v412 = vpop.f32.mrb[0].mxu0
    %413 = vmatprep.mubr.f32.mxu0 %v276
    %414 = vmatmul.mubr.f32.gmra.mrb[0].mxu0 %v275
    %v415 = vpop.f32.mrb[0].mxu0
    %v416 = vadd.f32 %v342, %v415
    %v417 = vpop.f32.mrb[0].mxu0
    %418 = vmatprep.mubr.f32.mxu0 %v278
    %419 = vmatmul.mubr.f32.gmra.mrb[0].mxu0 %v277
    %v420 = vpop.f32.mrb[0].mxu0
    %v421 = vadd.f32 %v342, %v420
    %v422 = vpop.f32.mrb[0].mxu0
    %423 = vmatprep.mubr.f32.mxu0 %v280
    %424 = vmatmul.mubr.f32.gmra.mrb[0].mxu0 %v279
    %v425 = vpop.f32.mrb[0].mxu0
    %v426 = vadd.f32 %v342, %v425
    %v427 = vpop.f32.mrb[0].mxu0
    %428 = vmatprep.mubr.f32.mxu0 %v282
    %429 = vmatmul.mubr.f32.gmra.mrb[0].mxu0 %v281
    %v430 = vpop.f32.mrb[0].mxu0
    %v431 = vadd.f32 %v342, %v430
    %v432 = vpop.f32.mrb[0].mxu0
    %433 = vmatprep.mubr.f32.mxu0 %v284
    %434 = vmatmul.mubr.f32.gmra.mrb[0].mxu0 %v283
    %v435 = vpop.f32.mrb[0].mxu0
    %v436 = vadd.f32 %v342, %v435
    %v437 = vpop.f32.mrb[0].mxu0
    %438 = vmatprep.mubr.f32.mxu0 %v286
    %439 = vmatmul.mubr.f32.gmra.mrb[0].mxu0 %v285
    %v440 = vpop.f32.mrb[0].mxu0
    %v441 = vadd.f32 %v342, %v440
    %v442 = vpop.f32.mrb[0].mxu0
    %443 = vmatprep.mubr.f32.mxu0 %v288
    %444 = vmatmul.mubr.f32.gmra.mrb[0].mxu0 %v287
    %v445 = vpop.f32.mrb[0].mxu0
    %v446 = vadd.f32 %v342, %v445
    %v447 = vpop.f32.mrb[0].mxu0
    %448 = vmatprep.mubr.f32.mxu0 %v290
    %449 = vmatmul.mubr.f32.gmra.mrb[0].mxu0 %v289
    %v450 = vpop.f32.mrb[0].mxu0
    %v451 = vadd.f32 %v342, %v450
    %v452 = vpop.f32.mrb[0].mxu0
    %453 = vmatprep.mubr.f32.mxu0 %v292
    %454 = vmatmul.mubr.f32.gmra.mrb[0].mxu0 %v291
    %v455 = vpop.f32.mrb[0].mxu0
    %v456 = vadd.f32 %v342, %v455
    %v457 = vpop.f32.mrb[0].mxu0
    %458 = vmatprep.mubr.f32.mxu0 %v294
    %459 = vmatmul.mubr.f32.gmra.mrb[0].mxu0 %v293
    %v460 = vpop.f32.mrb[0].mxu0
    %v461 = vadd.f32 %v342, %v460
    %v462 = vpop.f32.mrb[0].mxu0
    %463 = vmatprep.mubr.f32.mxu0 %v296
    %464 = vmatmul.mubr.f32.gmra.mrb[0].mxu0 %v295
    %v465 = vpop.f32.mrb[0].mxu0
    %v466 = vadd.f32 %v342, %v465
    %v467 = vpop.f32.mrb[0].mxu0
    %468 = vmatprep.mubr.f32.mxu0 %v298
    %469 = vmatmul.mubr.f32.gmra.mrb[0].mxu0 %v297
    %v470 = vpop.f32.mrb[0].mxu0
    %v471 = vadd.f32 %v342, %v470
    %v472 = vpop.f32.mrb[0].mxu0
    %473 = vmatprep.mubr.f32.mxu0 %v300
    %474 = vmatmul.mubr.f32.gmra.mrb[0].mxu0 %v299
    %v475 = vpop.f32.mrb[0].mxu0
    %v476 = vadd.f32 %v342, %v475
    %v477 = vpop.f32.mrb[0].mxu0
    %478 = vmatprep.mubr.f32.mxu0 %v302
    %479 = vmatmul.mubr.f32.gmra.mrb[0].mxu0 %v301
    %v480 = vpop.f32.mrb[0].mxu0
    %v481 = vadd.f32 %v342, %v480
    %v482 = vpop.f32.mrb[0].mxu0
    %483 = vmatprep.mubr.f32.mxu0 %v304
    %484 = vmatmul.mubr.f32.gmra.mrb[0].mxu0 %v303
    %v485 = vpop.f32.mrb[0].mxu0
    %v486 = vadd.f32 %v342, %v485
    %v487 = vpop.f32.mrb[0].mxu0
    %488 = vdwg.mxu0
    %v489 = vld [vmem:[%s1] sm:$0xf]
    %v490 = vld [vmem:[%s1 + $0x4] sm:$0xf]
    %v491 = vld [vmem:[%s1 + $0x8] sm:$0xf]
    %v492 = vld [vmem:[%s1 + $0xc] sm:$0xf]
    %v493 = vld [vmem:[%s1 + $0x10] sm:$0xf]
    %v494 = vld [vmem:[%s1 + $0x14] sm:$0xf]
    %v495 = vld [vmem:[%s1 + $0x18] sm:$0xf]
    %v496 = vld [vmem:[%s1 + $0x1c] sm:$0xf]
    %v497 = vld [vmem:[%s1 + $0x20] sm:$0xf]
    %v498 = vld [vmem:[%s1 + $0x24] sm:$0xf]
    %v499 = vld [vmem:[%s1 + $0x28] sm:$0xf]
    %v500 = vld [vmem:[%s1 + $0x2c] sm:$0xf]
    %v501 = vld [vmem:[%s1 + $0x30] sm:$0xf]
    %v502 = vld [vmem:[%s1 + $0x34] sm:$0xf]
    %v503 = vld [vmem:[%s1 + $0x38] sm:$0xf]
    %v504 = vld [vmem:[%s1 + $0x3c] sm:$0xf]
    %v505 = vpack.c.bf16 %v416, %v411
    %v506 = vpack.c.bf16 %v426, %v421
    %v507 = vpack.c.bf16 %v436, %v431
    %v508 = vpack.c.bf16 %v446, %v441
    %v509 = vpack.c.bf16 %v456, %v451
    %v510 = vpack.c.bf16 %v466, %v461
    %v511 = vpack.c.bf16 %v476, %v471
    %v512 = vpack.c.bf16 %v486, %v481
    %v529 = vunpack.c.l.b16 %v489
    %v530 = vunpack.c.l.b16 %v490
    %v531 = vunpack.c.l.b16 %v491
    %v532 = vunpack.c.l.b16 %v492
    %v533 = vunpack.c.l.b16 %v493
    %v534 = vunpack.c.l.b16 %v494
    %v535 = vunpack.c.l.b16 %v495
    %v536 = vunpack.c.l.b16 %v496
    %v537 = vunpack.c.l.b16 %v497
    %v538 = vunpack.c.l.b16 %v498
    %v539 = vunpack.c.l.b16 %v499
    %v540 = vunpack.c.l.b16 %v500
    %v541 = vunpack.c.l.b16 %v501
    %v542 = vunpack.c.l.b16 %v502
    %v543 = vunpack.c.l.b16 %v503
    %v544 = vunpack.c.l.b16 %v504
    %v545 = vpack.c.b16 %v530, %v529
    %v546 = vpack.c.b16 %v532, %v531
    %v547 = vpack.c.b16 %v534, %v533
    %v548 = vpack.c.b16 %v536, %v535
    %v549 = vpack.c.b16 %v538, %v537
    %v550 = vpack.c.b16 %v540, %v539
    %v551 = vpack.c.b16 %v542, %v541
    %v552 = vpack.c.b16 %v544, %v543
    %561 = vmatprep.subr.bf16.mxu0 0
    %562 = vmatpush1.bf16.msra.mxu0 %v505
    %563 = vmatprep.subr.bf16.mxu0 0
    %564 = vmatpush1.bf16.msra.mxu0 %v506
    %565 = vmatprep.subr.bf16.mxu0 0
    %566 = vmatpush1.bf16.msra.mxu0 %v507
    %567 = vmatprep.subr.bf16.mxu0 0
    %568 = vmatpush1.bf16.msra.mxu0 %v508
    %569 = vmatprep.subr.bf16.mxu0 0
    %570 = vmatpush1.bf16.msra.mxu0 %v509
    %571 = vmatprep.subr.bf16.mxu0 0
    %572 = vmatpush1.bf16.msra.mxu0 %v510
    %573 = vmatprep.subr.bf16.mxu0 0
    %574 = vmatpush1.bf16.msra.mxu0 %v511
    %575 = vmatprep.subr.bf16.mxu0 0
    %576 = vmatpush1.bf16.msra.mxu0 %v512
    %577 = vmatprep.subr.bf16.mxu0 0
    %578 = vmatpush1.bf16.msra.mxu0 0
    %579 = vmatprep.subr.bf16.mxu0 0
    %580 = vmatpush1.bf16.msra.mxu0 0
    %581 = vmatprep.subr.bf16.mxu0 0
    %582 = vmatpush1.bf16.msra.mxu0 0
    %583 = vmatprep.subr.bf16.mxu0 0
    %584 = vmatpush1.bf16.msra.mxu0 0
    %585 = vmatprep.subr.bf16.mxu0 0
    %586 = vmatpush1.bf16.msra.mxu0 0
    %587 = vmatprep.subr.bf16.mxu0 0
    %588 = vmatpush1.bf16.msra.mxu0 0
    %589 = vmatprep.subr.bf16.mxu0 0
    %590 = vmatpush1.bf16.msra.mxu0 0
    %591 = vmatprep.subr.bf16.mxu0 0
    %592 = vmatpush1.bf16.msra.mxu0 0
    %593 = vmatprep.mubr.bf16.mxu0 0
    %594 = vmatmul.mubr.bf16.gmra.mrb[0].mxu0 %v545
    %v595 = vpop.f32.mrb[0].mxu0
    %v596 = vadd.f32 0.0, %v595
    %v597 = vpop.f32.mrb[0].mxu0
    %v598 = vpop.f32.mrb[0].mxu0
    %v599 = vadd.f32 0.0, %v598
    %v600 = vpop.f32.mrb[0].mxu0
    %601 = vmatprep.mubr.bf16.mxu0 0
    %602 = vmatmul.mubr.bf16.gmra.mrb[0].mxu0 %v546
    %v603 = vpop.f32.mrb[0].mxu0
    %v604 = vadd.f32 0.0, %v603
    %v605 = vpop.f32.mrb[0].mxu0
    %v606 = vpop.f32.mrb[0].mxu0
    %v607 = vadd.f32 0.0, %v606
    %v608 = vpop.f32.mrb[0].mxu0
    %609 = vmatprep.mubr.bf16.mxu0 0
    %610 = vmatmul.mubr.bf16.gmra.mrb[0].mxu0 %v547
    %v611 = vpop.f32.mrb[0].mxu0
    %v612 = vadd.f32 0.0, %v611
    %v613 = vpop.f32.mrb[0].mxu0
    %v614 = vpop.f32.mrb[0].mxu0
    %v615 = vadd.f32 0.0, %v614
    %v616 = vpop.f32.mrb[0].mxu0
    %617 = vmatprep.mubr.bf16.mxu0 0
    %618 = vmatmul.mubr.bf16.gmra.mrb[0].mxu0 %v548
    %v619 = vpop.f32.mrb[0].mxu0
    %v620 = vadd.f32 0.0, %v619
    %v621 = vpop.f32.mrb[0].mxu0
    %v622 = vpop.f32.mrb[0].mxu0
    %v623 = vadd.f32 0.0, %v622
    %v624 = vpop.f32.mrb[0].mxu0
    %625 = vmatprep.mubr.bf16.mxu0 0
    %626 = vmatmul.mubr.bf16.gmra.mrb[0].mxu0 %v549
    %v627 = vpop.f32.mrb[0].mxu0
    %v628 = vadd.f32 0.0, %v627
    %v629 = vpop.f32.mrb[0].mxu0
    %v630 = vpop.f32.mrb[0].mxu0
    %v631 = vadd.f32 0.0, %v630
    %v632 = vpop.f32.mrb[0].mxu0
    %633 = vmatprep.mubr.bf16.mxu0 0
    %634 = vmatmul.mubr.bf16.gmra.mrb[0].mxu0 %v550
    %v635 = vpop.f32.mrb[0].mxu0
    %v636 = vadd.f32 0.0, %v635
    %v637 = vpop.f32.mrb[0].mxu0
    %v638 = vpop.f32.mrb[0].mxu0
    %v639 = vadd.f32 0.0, %v638
    %v640 = vpop.f32.mrb[0].mxu0
    %641 = vmatprep.mubr.bf16.mxu0 0
    %642 = vmatmul.mubr.bf16.gmra.mrb[0].mxu0 %v551
    %v643 = vpop.f32.mrb[0].mxu0
    %v644 = vadd.f32 0.0, %v643
    %v645 = vpop.f32.mrb[0].mxu0
    %v646 = vpop.f32.mrb[0].mxu0
    %v647 = vadd.f32 0.0, %v646
    %v648 = vpop.f32.mrb[0].mxu0
    %649 = vmatprep.mubr.bf16.mxu0 0
    %650 = vmatmul.mubr.bf16.gmra.mrb[0].mxu0 %v552
    %v651 = vpop.f32.mrb[0].mxu0
    %v652 = vadd.f32 0.0, %v651
    %v653 = vpop.f32.mrb[0].mxu0
    %v654 = vpop.f32.mrb[0].mxu0
    %v655 = vadd.f32 0.0, %v654
    %v656 = vpop.f32.mrb[0].mxu0
    %657 = vdwg.mxu0
    %v658 = vmax.f32 %v596, 0.0
    %v659 = vmax.f32 %v599, 0.0
    %v660 = vmax.f32 %v604, 0.0
    %v661 = vmax.f32 %v607, 0.0
    %v662 = vmax.f32 %v612, 0.0
    %v663 = vmax.f32 %v615, 0.0
    %v664 = vmax.f32 %v620, 0.0
    %v665 = vmax.f32 %v623, 0.0
    %v666 = vmax.f32 %v628, 0.0
    %v667 = vmax.f32 %v631, 0.0
    %v668 = vmax.f32 %v636, 0.0
    %v669 = vmax.f32 %v639, 0.0
    %v670 = vmax.f32 %v644, 0.0
    %v671 = vmax.f32 %v647, 0.0
    %v672 = vmax.f32 %v652, 0.0
    %v673 = vmax.f32 %v655, 0.0
    %674 = vst [vmem:[#allocation3] sm:$0xff] %v658
    %675 = vst [vmem:[#allocation3 + $0x8] sm:$0xff] %v659
    %676 = vst [vmem:[#allocation3 + $0x10] sm:$0xff] %v660
    %677 = vst [vmem:[#allocation3 + $0x18] sm:$0xff] %v661
    %678 = vst [vmem:[#allocation3 + $0x20] sm:$0xff] %v662
    %679 = vst [vmem:[#allocation3 + $0x28] sm:$0xff] %v663
    %680 = vst [vmem:[#allocation3 + $0x30] sm:$0xff] %v664
    %681 = vst [vmem:[#allocation3 + $0x38] sm:$0xff] %v665
    %682 = vst [vmem:[#allocation3 + $0x40] sm:$0xff] %v666
    %683 = vst [vmem:[#allocation3 + $0x48] sm:$0xff] %v667
    %684 = vst [vmem:[#allocation3 + $0x50] sm:$0xff] %v668
    %685 = vst [vmem:[#allocation3 + $0x58] sm:$0xff] %v669
    %686 = vst [vmem:[#allocation3 + $0x60] sm:$0xff] %v670
    %687 = vst [vmem:[#allocation3 + $0x68] sm:$0xff] %v671
    %688 = vst [vmem:[#allocation3 + $0x70] sm:$0xff] %v672
    %689 = vst [vmem:[#allocation3 + $0x78] sm:$0xff] %v673
    %v690 = vld [vmem:[#allocation3] sm:$0xff]
    %v691 = vld [vmem:[#allocation3 + $0x8] sm:$0xff]
    %v692 = vld [vmem:[#allocation3 + $0x10] sm:$0xff]
    %v693 = vld [vmem:[#allocation3 + $0x18] sm:$0xff]
    %v694 = vld [vmem:[#allocation3 + $0x20] sm:$0xff]
    %v695 = vld [vmem:[#allocation3 + $0x28] sm:$0xff]
    %v696 = vld [vmem:[#allocation3 + $0x30] sm:$0xff]
    %v697 = vld [vmem:[#allocation3 + $0x38] sm:$0xff]
    %v698 = vld [vmem:[#allocation3 + $0x40] sm:$0xff]
    %v699 = vld [vmem:[#allocation3 + $0x48] sm:$0xff]
    %v700 = vld [vmem:[#allocation3 + $0x50] sm:$0xff]
    %v701 = vld [vmem:[#allocation3 + $0x58] sm:$0xff]
    %v702 = vld [vmem:[#allocation3 + $0x60] sm:$0xff]
    %v703 = vld [vmem:[#allocation3 + $0x68] sm:$0xff]
    %v704 = vld [vmem:[#allocation3 + $0x70] sm:$0xff]
    %v705 = vld [vmem:[#allocation3 + $0x78] sm:$0xff]
    %v706 = vld [vmem:[%s0] sm:$0xf]
    %v707 = vld [vmem:[%s0 + $0x4] sm:$0xf]
    %v708 = vld [vmem:[%s0 + $0x8] sm:$0xf]
    %v709 = vld [vmem:[%s0 + $0xc] sm:$0xf]
    %v710 = vld [vmem:[%s0 + $0x10] sm:$0xf]
    %v711 = vld [vmem:[%s0 + $0x14] sm:$0xf]
    %v712 = vld [vmem:[%s0 + $0x18] sm:$0xf]
    %v713 = vld [vmem:[%s0 + $0x1c] sm:$0xf]
    %v714 = vld [vmem:[%s0 + $0x20] sm:$0xf]
    %v715 = vld [vmem:[%s0 + $0x24] sm:$0xf]
    %v716 = vld [vmem:[%s0 + $0x28] sm:$0xf]
    %v717 = vld [vmem:[%s0 + $0x2c] sm:$0xf]
    %v718 = vld [vmem:[%s0 + $0x30] sm:$0xf]
    %v719 = vld [vmem:[%s0 + $0x34] sm:$0xf]
    %v720 = vld [vmem:[%s0 + $0x38] sm:$0xf]
    %v721 = vld [vmem:[%s0 + $0x3c] sm:$0xf]
    %v722 = vpack.c.bf16 %v691, %v690
    %v723 = vpack.c.bf16 %v693, %v692
    %v724 = vpack.c.bf16 %v695, %v694
    %v725 = vpack.c.bf16 %v697, %v696
    %v726 = vpack.c.bf16 %v699, %v698
    %v727 = vpack.c.bf16 %v701, %v700
    %v728 = vpack.c.bf16 %v703, %v702
    %v729 = vpack.c.bf16 %v705, %v704
    %v746 = vunpack.c.l.b16 %v706
    %v747 = vunpack.c.l.b16 %v707
    %v748 = vunpack.c.l.b16 %v708
    %v749 = vunpack.c.l.b16 %v709
    %v750 = vunpack.c.l.b16 %v710
    %v751 = vunpack.c.l.b16 %v711
    %v752 = vunpack.c.l.b16 %v712
    %v753 = vunpack.c.l.b16 %v713
    %v754 = vunpack.c.l.b16 %v714
    %v755 = vunpack.c.l.b16 %v715
    %v756 = vunpack.c.l.b16 %v716
    %v757 = vunpack.c.l.b16 %v717
    %v758 = vunpack.c.l.b16 %v718
    %v759 = vunpack.c.l.b16 %v719
    %v760 = vunpack.c.l.b16 %v720
    %v761 = vunpack.c.l.b16 %v721
    %v762 = vpack.c.b16 %v747, %v746
    %v763 = vpack.c.b16 %v749, %v748
    %v764 = vpack.c.b16 %v751, %v750
    %v765 = vpack.c.b16 %v753, %v752
    %v766 = vpack.c.b16 %v755, %v754
    %v767 = vpack.c.b16 %v757, %v756
    %v768 = vpack.c.b16 %v759, %v758
    %v769 = vpack.c.b16 %v761, %v760
    %778 = vmatprep.subr.bf16.mxu0 0
    %779 = vmatpush1.bf16.msra.mxu0 %v722
    %780 = vmatprep.subr.bf16.mxu0 0
    %781 = vmatpush1.bf16.msra.mxu0 %v723
    %782 = vmatprep.subr.bf16.mxu0 0
    %783 = vmatpush1.bf16.msra.mxu0 %v724
    %784 = vmatprep.subr.bf16.mxu0 0
    %785 = vmatpush1.bf16.msra.mxu0 %v725
    %786 = vmatprep.subr.bf16.mxu0 0
    %787 = vmatpush1.bf16.msra.mxu0 %v726
    %788 = vmatprep.subr.bf16.mxu0 0
    %789 = vmatpush1.bf16.msra.mxu0 %v727
    %790 = vmatprep.subr.bf16.mxu0 0
    %791 = vmatpush1.bf16.msra.mxu0 %v728
    %792 = vmatprep.subr.bf16.mxu0 0
    %793 = vmatpush1.bf16.msra.mxu0 %v729
    %794 = vmatprep.subr.bf16.mxu0 0
    %795 = vmatpush1.bf16.msra.mxu0 0
    %796 = vmatprep.subr.bf16.mxu0 0
    %797 = vmatpush1.bf16.msra.mxu0 0
    %798 = vmatprep.subr.bf16.mxu0 0
    %799 = vmatpush1.bf16.msra.mxu0 0
    %800 = vmatprep.subr.bf16.mxu0 0
    %801 = vmatpush1.bf16.msra.mxu0 0
    %802 = vmatprep.subr.bf16.mxu0 0
    %803 = vmatpush1.bf16.msra.mxu0 0
    %804 = vmatprep.subr.bf16.mxu0 0
    %805 = vmatpush1.bf16.msra.mxu0 0
    %806 = vmatprep.subr.bf16.mxu0 0
    %807 = vmatpush1.bf16.msra.mxu0 0
    %808 = vmatprep.subr.bf16.mxu0 0
    %809 = vmatpush1.bf16.msra.mxu0 0
    %810 = vmatprep.mubr.bf16.mxu0 0
    %811 = vmatmul.mubr.bf16.gmra.mrb[0].mxu0 %v762
    %v812 = vpop.f32.mrb[0].mxu0
    %v813 = vadd.f32 0.0, %v812
    %v814 = vpop.f32.mrb[0].mxu0
    %v815 = vpop.f32.mrb[0].mxu0
    %v816 = vadd.f32 0.0, %v815
    %v817 = vpop.f32.mrb[0].mxu0
    %818 = vmatprep.mubr.bf16.mxu0 0
    %819 = vmatmul.mubr.bf16.gmra.mrb[0].mxu0 %v763
    %v820 = vpop.f32.mrb[0].mxu0
    %v821 = vadd.f32 0.0, %v820
    %v822 = vpop.f32.mrb[0].mxu0
    %v823 = vpop.f32.mrb[0].mxu0
    %v824 = vadd.f32 0.0, %v823
    %v825 = vpop.f32.mrb[0].mxu0
    %826 = vmatprep.mubr.bf16.mxu0 0
    %827 = vmatmul.mubr.bf16.gmra.mrb[0].mxu0 %v764
    %v828 = vpop.f32.mrb[0].mxu0
    %v829 = vadd.f32 0.0, %v828
    %v830 = vpop.f32.mrb[0].mxu0
    %v831 = vpop.f32.mrb[0].mxu0
    %v832 = vadd.f32 0.0, %v831
    %v833 = vpop.f32.mrb[0].mxu0
    %834 = vmatprep.mubr.bf16.mxu0 0
    %835 = vmatmul.mubr.bf16.gmra.mrb[0].mxu0 %v765
    %v836 = vpop.f32.mrb[0].mxu0
    %v837 = vadd.f32 0.0, %v836
    %v838 = vpop.f32.mrb[0].mxu0
    %v839 = vpop.f32.mrb[0].mxu0
    %v840 = vadd.f32 0.0, %v839
    %v841 = vpop.f32.mrb[0].mxu0
    %842 = vmatprep.mubr.bf16.mxu0 0
    %843 = vmatmul.mubr.bf16.gmra.mrb[0].mxu0 %v766
    %v844 = vpop.f32.mrb[0].mxu0
    %v845 = vadd.f32 0.0, %v844
    %v846 = vpop.f32.mrb[0].mxu0
    %v847 = vpop.f32.mrb[0].mxu0
    %v848 = vadd.f32 0.0, %v847
    %v849 = vpop.f32.mrb[0].mxu0
    %850 = vmatprep.mubr.bf16.mxu0 0
    %851 = vmatmul.mubr.bf16.gmra.mrb[0].mxu0 %v767
    %v852 = vpop.f32.mrb[0].mxu0
    %v853 = vadd.f32 0.0, %v852
    %v854 = vpop.f32.mrb[0].mxu0
    %v855 = vpop.f32.mrb[0].mxu0
    %v856 = vadd.f32 0.0, %v855
    %v857 = vpop.f32.mrb[0].mxu0
    %858 = vmatprep.mubr.bf16.mxu0 0
    %859 = vmatmul.mubr.bf16.gmra.mrb[0].mxu0 %v768
    %v860 = vpop.f32.mrb[0].mxu0
    %v861 = vadd.f32 0.0, %v860
    %v862 = vpop.f32.mrb[0].mxu0
    %v863 = vpop.f32.mrb[0].mxu0
    %v864 = vadd.f32 0.0, %v863
    %v865 = vpop.f32.mrb[0].mxu0
    %866 = vmatprep.mubr.bf16.mxu0 0
    %867 = vmatmul.mubr.bf16.gmra.mrb[0].mxu0 %v769
    %v868 = vpop.f32.mrb[0].mxu0
    %v869 = vadd.f32 0.0, %v868
    %v870 = vpop.f32.mrb[0].mxu0
    %v871 = vpop.f32.mrb[0].mxu0
    %v872 = vadd.f32 0.0, %v871
    %v873 = vpop.f32.mrb[0].mxu0
    %874 = vdwg.mxu0
    %875 = vst [vmem:[#allocation2] sm:$0xff] %v813
    %876 = vst [vmem:[#allocation2 + $0x10] sm:$0xff] %v816
    %877 = vst [vmem:[#allocation2 + $0x20] sm:$0xff] %v821
    %878 = vst [vmem:[#allocation2 + $0x30] sm:$0xff] %v824
    %879 = vst [vmem:[#allocation2 + $0x40] sm:$0xff] %v829
    %880 = vst [vmem:[#allocation2 + $0x50] sm:$0xff] %v832
    %881 = vst [vmem:[#allocation2 + $0x60] sm:$0xff] %v837
    %882 = vst [vmem:[#allocation2 + $0x70] sm:$0xff] %v840
    %883 = vst [vmem:[#allocation2 + $0x80] sm:$0xff] %v845
    %884 = vst [vmem:[#allocation2 + $0x90] sm:$0xff] %v848
    %885 = vst [vmem:[#allocation2 + $0xa0] sm:$0xff] %v853
    %886 = vst [vmem:[#allocation2 + $0xb0] sm:$0xff] %v856
    %887 = vst [vmem:[#allocation2 + $0xc0] sm:$0xff] %v861
    %888 = vst [vmem:[#allocation2 + $0xd0] sm:$0xff] %v864
    %889 = vst [vmem:[#allocation2 + $0xe0] sm:$0xff] %v869
    %890 = vst [vmem:[#allocation2 + $0xf0] sm:$0xff] %v872
    %v891 = vld [vmem:[#allocation2] sm:$0xff]
    %v892 = vld [vmem:[#allocation2 + $0x8] sm:$0xff]
    %v893 = vld [vmem:[#allocation2 + $0x10] sm:$0xff]
    %v894 = vld [vmem:[#allocation2 + $0x18] sm:$0xff]
    %v895 = vld [vmem:[#allocation2 + $0x20] sm:$0xff]
    %v896 = vld [vmem:[#allocation2 + $0x28] sm:$0xff]
    %v897 = vld [vmem:[#allocation2 + $0x30] sm:$0xff]
    %v898 = vld [vmem:[#allocation2 + $0x38] sm:$0xff]
    %v899 = vld [vmem:[#allocation2 + $0x40] sm:$0xff]
    %v900 = vld [vmem:[#allocation2 + $0x48] sm:$0xff]
    %v901 = vld [vmem:[#allocation2 + $0x50] sm:$0xff]
    %v902 = vld [vmem:[#allocation2 + $0x58] sm:$0xff]
    %v903 = vld [vmem:[#allocation2 + $0x60] sm:$0xff]
    %v904 = vld [vmem:[#allocation2 + $0x68] sm:$0xff]
    %v905 = vld [vmem:[#allocation2 + $0x70] sm:$0xff]
    %v906 = vld [vmem:[#allocation2 + $0x78] sm:$0xff]
    %v907 = vld [vmem:[#allocation2 + $0x80] sm:$0xff]
    %v908 = vld [vmem:[#allocation2 + $0x88] sm:$0xff]
    %v909 = vld [vmem:[#allocation2 + $0x90] sm:$0xff]
    %v910 = vld [vmem:[#allocation2 + $0x98] sm:$0xff]
    %v911 = vld [vmem:[#allocation2 + $0xa0] sm:$0xff]
    %v912 = vld [vmem:[#allocation2 + $0xa8] sm:$0xff]
    %v913 = vld [vmem:[#allocation2 + $0xb0] sm:$0xff]
    %v914 = vld [vmem:[#allocation2 + $0xb8] sm:$0xff]
    %v915 = vld [vmem:[#allocation2 + $0xc0] sm:$0xff]
    %v916 = vld [vmem:[#allocation2 + $0xc8] sm:$0xff]
    %v917 = vld [vmem:[#allocation2 + $0xd0] sm:$0xff]
    %v918 = vld [vmem:[#allocation2 + $0xd8] sm:$0xff]
    %v919 = vld [vmem:[#allocation2 + $0xe0] sm:$0xff]
    %v920 = vld [vmem:[#allocation2 + $0xe8] sm:$0xff]
    %v921 = vld [vmem:[#allocation2 + $0xf0] sm:$0xff]
    %v922 = vld [vmem:[#allocation2 + $0xf8] sm:$0xff]
    %s923 = scalar_lea.vmem %s4, 256
    %v924 = vld [vmem:[%s923] sm:$0xff]
    %v925 = vld [vmem:[%s923 + $0x8] sm:$0xff]
    %v926 = vld [vmem:[%s923 + $0x10] sm:$0xff]
    %v927 = vld [vmem:[%s923 + $0x18] sm:$0xff]
    %v928 = vld [vmem:[%s923 + $0x20] sm:$0xff]
    %v929 = vld [vmem:[%s923 + $0x28] sm:$0xff]
    %v930 = vld [vmem:[%s923 + $0x30] sm:$0xff]
    %v931 = vld [vmem:[%s923 + $0x38] sm:$0xff]
    %v932 = vld [vmem:[%s923 + $0x40] sm:$0xff]
    %v933 = vld [vmem:[%s923 + $0x48] sm:$0xff]
    %v934 = vld [vmem:[%s923 + $0x50] sm:$0xff]
    %v935 = vld [vmem:[%s923 + $0x58] sm:$0xff]
    %v936 = vld [vmem:[%s923 + $0x60] sm:$0xff]
    %v937 = vld [vmem:[%s923 + $0x68] sm:$0xff]
    %v938 = vld [vmem:[%s923 + $0x70] sm:$0xff]
    %v939 = vld [vmem:[%s923 + $0x78] sm:$0xff]
    %v940 = vld [vmem:[%s923 + $0x80] sm:$0xff]
    %v941 = vld [vmem:[%s923 + $0x88] sm:$0xff]
    %v942 = vld [vmem:[%s923 + $0x90] sm:$0xff]
    %v943 = vld [vmem:[%s923 + $0x98] sm:$0xff]
    %v944 = vld [vmem:[%s923 + $0xa0] sm:$0xff]
    %v945 = vld [vmem:[%s923 + $0xa8] sm:$0xff]
    %v946 = vld [vmem:[%s923 + $0xb0] sm:$0xff]
    %v947 = vld [vmem:[%s923 + $0xb8] sm:$0xff]
    %v948 = vld [vmem:[%s923 + $0xc0] sm:$0xff]
    %v949 = vld [vmem:[%s923 + $0xc8] sm:$0xff]
    %v950 = vld [vmem:[%s923 + $0xd0] sm:$0xff]
    %v951 = vld [vmem:[%s923 + $0xd8] sm:$0xff]
    %v952 = vld [vmem:[%s923 + $0xe0] sm:$0xff]
    %v953 = vld [vmem:[%s923 + $0xe8] sm:$0xff]
    %v954 = vld [vmem:[%s923 + $0xf0] sm:$0xff]
    %v955 = vld [vmem:[%s923 + $0xf8] sm:$0xff]
    %s956 = scalar_lea.vmem %s5, 1
    %v957 = vld [vmem:[%s956] sm:$0x1]
    %v959 = vlaneseq
    %v960 = vshrl.u32 %v959, 7
    %v961 = vsub.s32 0, %v960
    %v962 = vrot.slane %v957, %v961
    %964 = vmatprep.subr.mxu0 0.0
    %965 = vmatpush1.msra.mxu0 %v924
    %966 = vmatprep.subr.mxu0 0.0
    %967 = vmatpush1.msra.mxu0 %v925
    %968 = vmatprep.subr.mxu0 0.0
    %969 = vmatpush1.msra.mxu0 %v926
    %970 = vmatprep.subr.mxu0 0.0
    %971 = vmatpush1.msra.mxu0 %v927
    %972 = vmatprep.subr.mxu0 0.0
    %973 = vmatpush1.msra.mxu0 %v928
    %974 = vmatprep.subr.mxu0 0.0
    %975 = vmatpush1.msra.mxu0 %v929
    %976 = vmatprep.subr.mxu0 0.0
    %977 = vmatpush1.msra.mxu0 %v930
    %978 = vmatprep.subr.mxu0 0.0
    %979 = vmatpush1.msra.mxu0 %v931
    %980 = vmatprep.subr.mxu0 0.0
    %981 = vmatpush1.msra.mxu0 %v932
    %982 = vmatprep.subr.mxu0 0.0
    %983 = vmatpush1.msra.mxu0 %v933
    %984 = vmatprep.subr.mxu0 0.0
    %985 = vmatpush1.msra.mxu0 %v934
    %986 = vmatprep.subr.mxu0 0.0
    %987 = vmatpush1.msra.mxu0 %v935
    %988 = vmatprep.subr.mxu0 0.0
    %989 = vmatpush1.msra.mxu0 %v936
    %990 = vmatprep.subr.mxu0 0.0
    %991 = vmatpush1.msra.mxu0 %v937
    %992 = vmatprep.subr.mxu0 0.0
    %993 = vmatpush1.msra.mxu0 %v938
    %994 = vmatprep.subr.mxu0 0.0
    %995 = vmatpush1.msra.mxu0 %v939
    %996 = vmatprep.subr.mxu0 0.0
    %997 = vmatpush1.msra.mxu0 %v940
    %998 = vmatprep.subr.mxu0 0.0
    %999 = vmatpush1.msra.mxu0 %v941
    %1000 = vmatprep.subr.mxu0 0.0
    %1001 = vmatpush1.msra.mxu0 %v942
    %1002 = vmatprep.subr.mxu0 0.0
    %1003 = vmatpush1.msra.mxu0 %v943
    %1004 = vmatprep.subr.mxu0 0.0
    %1005 = vmatpush1.msra.mxu0 %v944
    %1006 = vmatprep.subr.mxu0 0.0
    %1007 = vmatpush1.msra.mxu0 %v945
    %1008 = vmatprep.subr.mxu0 0.0
    %1009 = vmatpush1.msra.mxu0 %v946
    %1010 = vmatprep.subr.mxu0 0.0
    %1011 = vmatpush1.msra.mxu0 %v947
    %1012 = vmatprep.subr.mxu0 0.0
    %1013 = vmatpush1.msra.mxu0 %v948
    %1014 = vmatprep.subr.mxu0 0.0
    %1015 = vmatpush1.msra.mxu0 %v949
    %1016 = vmatprep.subr.mxu0 0.0
    %1017 = vmatpush1.msra.mxu0 %v950
    %1018 = vmatprep.subr.mxu0 0.0
    %1019 = vmatpush1.msra.mxu0 %v951
    %1020 = vmatprep.subr.mxu0 0.0
    %1021 = vmatpush1.msra.mxu0 %v952
    %1022 = vmatprep.subr.mxu0 0.0
    %1023 = vmatpush1.msra.mxu0 %v953
    %1024 = vmatprep.subr.mxu0 0.0
    %1025 = vmatpush1.msra.mxu0 %v954
    %1026 = vmatprep.subr.mxu0 0.0
    %1027 = vmatpush1.msra.mxu0 %v955
    %1028 = vmatprep.mubr.f32.mxu0 %v892
    %1029 = vmatmul.mubr.f32.gmra.mrb[0].mxu0 %v891
    %v1030 = vpop.f32.mrb[0].mxu0
    %v1031 = vadd.f32 %v962, %v1030
    %v1032 = vpop.f32.mrb[0].mxu0
    %1033 = vmatprep.mubr.f32.mxu0 %v894
    %1034 = vmatmul.mubr.f32.gmra.mrb[0].mxu0 %v893
    %v1035 = vpop.f32.mrb[0].mxu0
    %v1036 = vadd.f32 %v962, %v1035
    %v1037 = vpop.f32.mrb[0].mxu0
    %1038 = vmatprep.mubr.f32.mxu0 %v896
    %1039 = vmatmul.mubr.f32.gmra.mrb[0].mxu0 %v895
    %v1040 = vpop.f32.mrb[0].mxu0
    %v1041 = vadd.f32 %v962, %v1040
    %v1042 = vpop.f32.mrb[0].mxu0
    %1043 = vmatprep.mubr.f32.mxu0 %v898
    %1044 = vmatmul.mubr.f32.gmra.mrb[0].mxu0 %v897
    %v1045 = vpop.f32.mrb[0].mxu0
    %v1046 = vadd.f32 %v962, %v1045
    %v1047 = vpop.f32.mrb[0].mxu0
    %1048 = vmatprep.mubr.f32.mxu0 %v900
    %1049 = vmatmul.mubr.f32.gmra.mrb[0].mxu0 %v899
    %v1050 = vpop.f32.mrb[0].mxu0
    %v1051 = vadd.f32 %v962, %v1050
    %v1052 = vpop.f32.mrb[0].mxu0
    %1053 = vmatprep.mubr.f32.mxu0 %v902
    %1054 = vmatmul.mubr.f32.gmra.mrb[0].mxu0 %v901
    %v1055 = vpop.f32.mrb[0].mxu0
    %v1056 = vadd.f32 %v962, %v1055
    %v1057 = vpop.f32.mrb[0].mxu0
    %1058 = vmatprep.mubr.f32.mxu0 %v904
    %1059 = vmatmul.mubr.f32.gmra.mrb[0].mxu0 %v903
    %v1060 = vpop.f32.mrb[0].mxu0
    %v1061 = vadd.f32 %v962, %v1060
    %v1062 = vpop.f32.mrb[0].mxu0
    %1063 = vmatprep.mubr.f32.mxu0 %v906
    %1064 = vmatmul.mubr.f32.gmra.mrb[0].mxu0 %v905
    %v1065 = vpop.f32.mrb[0].mxu0
    %v1066 = vadd.f32 %v962, %v1065
    %v1067 = vpop.f32.mrb[0].mxu0
    %1068 = vmatprep.mubr.f32.mxu0 %v908
    %1069 = vmatmul.mubr.f32.gmra.mrb[0].mxu0 %v907
    %v1070 = vpop.f32.mrb[0].mxu0
    %v1071 = vadd.f32 %v962, %v1070
    %v1072 = vpop.f32.mrb[0].mxu0
    %1073 = vmatprep.mubr.f32.mxu0 %v910
    %1074 = vmatmul.mubr.f32.gmra.mrb[0].mxu0 %v909
    %v1075 = vpop.f32.mrb[0].mxu0
    %v1076 = vadd.f32 %v962, %v1075
    %v1077 = vpop.f32.mrb[0].mxu0
    %1078 = vmatprep.mubr.f32.mxu0 %v912
    %1079 = vmatmul.mubr.f32.gmra.mrb[0].mxu0 %v911
    %v1080 = vpop.f32.mrb[0].mxu0
    %v1081 = vadd.f32 %v962, %v1080
    %v1082 = vpop.f32.mrb[0].mxu0
    %1083 = vmatprep.mubr.f32.mxu0 %v914
    %1084 = vmatmul.mubr.f32.gmra.mrb[0].mxu0 %v913
    %v1085 = vpop.f32.mrb[0].mxu0
    %v1086 = vadd.f32 %v962, %v1085
    %v1087 = vpop.f32.mrb[0].mxu0
    %1088 = vmatprep.mubr.f32.mxu0 %v916
    %1089 = vmatmul.mubr.f32.gmra.mrb[0].mxu0 %v915
    %v1090 = vpop.f32.mrb[0].mxu0
    %v1091 = vadd.f32 %v962, %v1090
    %v1092 = vpop.f32.mrb[0].mxu0
    %1093 = vmatprep.mubr.f32.mxu0 %v918
    %1094 = vmatmul.mubr.f32.gmra.mrb[0].mxu0 %v917
    %v1095 = vpop.f32.mrb[0].mxu0
    %v1096 = vadd.f32 %v962, %v1095
    %v1097 = vpop.f32.mrb[0].mxu0
    %1098 = vmatprep.mubr.f32.mxu0 %v920
    %1099 = vmatmul.mubr.f32.gmra.mrb[0].mxu0 %v919
    %v1100 = vpop.f32.mrb[0].mxu0
    %v1101 = vadd.f32 %v962, %v1100
    %v1102 = vpop.f32.mrb[0].mxu0
    %1103 = vmatprep.mubr.f32.mxu0 %v922
    %1104 = vmatmul.mubr.f32.gmra.mrb[0].mxu0 %v921
    %v1105 = vpop.f32.mrb[0].mxu0
    %v1106 = vadd.f32 %v962, %v1105
    %v1107 = vpop.f32.mrb[0].mxu0
    %1108 = vdwg.mxu0
    %v1109 = vld [vmem:[%s1] sm:$0xf]
    %v1110 = vld [vmem:[%s1 + $0x4] sm:$0xf]
    %v1111 = vld [vmem:[%s1 + $0x8] sm:$0xf]
    %v1112 = vld [vmem:[%s1 + $0xc] sm:$0xf]
    %v1113 = vld [vmem:[%s1 + $0x10] sm:$0xf]
    %v1114 = vld [vmem:[%s1 + $0x14] sm:$0xf]
    %v1115 = vld [vmem:[%s1 + $0x18] sm:$0xf]
    %v1116 = vld [vmem:[%s1 + $0x1c] sm:$0xf]
    %v1117 = vld [vmem:[%s1 + $0x20] sm:$0xf]
    %v1118 = vld [vmem:[%s1 + $0x24] sm:$0xf]
    %v1119 = vld [vmem:[%s1 + $0x28] sm:$0xf]
    %v1120 = vld [vmem:[%s1 + $0x2c] sm:$0xf]
    %v1121 = vld [vmem:[%s1 + $0x30] sm:$0xf]
    %v1122 = vld [vmem:[%s1 + $0x34] sm:$0xf]
    %v1123 = vld [vmem:[%s1 + $0x38] sm:$0xf]
    %v1124 = vld [vmem:[%s1 + $0x3c] sm:$0xf]
    %v1125 = vpack.c.bf16 %v1036, %v1031
    %v1126 = vpack.c.bf16 %v1046, %v1041
    %v1127 = vpack.c.bf16 %v1056, %v1051
    %v1128 = vpack.c.bf16 %v1066, %v1061
    %v1129 = vpack.c.bf16 %v1076, %v1071
    %v1130 = vpack.c.bf16 %v1086, %v1081
    %v1131 = vpack.c.bf16 %v1096, %v1091
    %v1132 = vpack.c.bf16 %v1106, %v1101
    %v1149 = vunpack.c.l.b16 %v1109
    %v1150 = vunpack.c.l.b16 %v1110
    %v1151 = vunpack.c.l.b16 %v1111
    %v1152 = vunpack.c.l.b16 %v1112
    %v1153 = vunpack.c.l.b16 %v1113
    %v1154 = vunpack.c.l.b16 %v1114
    %v1155 = vunpack.c.l.b16 %v1115
    %v1156 = vunpack.c.l.b16 %v1116
    %v1157 = vunpack.c.l.b16 %v1117
    %v1158 = vunpack.c.l.b16 %v1118
    %v1159 = vunpack.c.l.b16 %v1119
    %v1160 = vunpack.c.l.b16 %v1120
    %v1161 = vunpack.c.l.b16 %v1121
    %v1162 = vunpack.c.l.b16 %v1122
    %v1163 = vunpack.c.l.b16 %v1123
    %v1164 = vunpack.c.l.b16 %v1124
    %v1165 = vpack.c.b16 %v1150, %v1149
    %v1166 = vpack.c.b16 %v1152, %v1151
    %v1167 = vpack.c.b16 %v1154, %v1153
    %v1168 = vpack.c.b16 %v1156, %v1155
    %v1169 = vpack.c.b16 %v1158, %v1157
    %v1170 = vpack.c.b16 %v1160, %v1159
    %v1171 = vpack.c.b16 %v1162, %v1161
    %v1172 = vpack.c.b16 %v1164, %v1163
    %1181 = vmatprep.subr.bf16.mxu0 0
    %1182 = vmatpush1.bf16.msra.mxu0 %v1125
    %1183 = vmatprep.subr.bf16.mxu0 0
    %1184 = vmatpush1.bf16.msra.mxu0 %v1126
    %1185 = vmatprep.subr.bf16.mxu0 0
    %1186 = vmatpush1.bf16.msra.mxu0 %v1127
    %1187 = vmatprep.subr.bf16.mxu0 0
    %1188 = vmatpush1.bf16.msra.mxu0 %v1128
    %1189 = vmatprep.subr.bf16.mxu0 0
    %1190 = vmatpush1.bf16.msra.mxu0 %v1129
    %1191 = vmatprep.subr.bf16.mxu0 0
    %1192 = vmatpush1.bf16.msra.mxu0 %v1130
    %1193 = vmatprep.subr.bf16.mxu0 0
    %1194 = vmatpush1.bf16.msra.mxu0 %v1131
    %1195 = vmatprep.subr.bf16.mxu0 0
    %1196 = vmatpush1.bf16.msra.mxu0 %v1132
    %1197 = vmatprep.subr.bf16.mxu0 0
    %1198 = vmatpush1.bf16.msra.mxu0 0
    %1199 = vmatprep.subr.bf16.mxu0 0
    %1200 = vmatpush1.bf16.msra.mxu0 0
    %1201 = vmatprep.subr.bf16.mxu0 0
    %1202 = vmatpush1.bf16.msra.mxu0 0
    %1203 = vmatprep.subr.bf16.mxu0 0
    %1204 = vmatpush1.bf16.msra.mxu0 0
    %1205 = vmatprep.subr.bf16.mxu0 0
    %1206 = vmatpush1.bf16.msra.mxu0 0
    %1207 = vmatprep.subr.bf16.mxu0 0
    %1208 = vmatpush1.bf16.msra.mxu0 0
    %1209 = vmatprep.subr.bf16.mxu0 0
    %1210 = vmatpush1.bf16.msra.mxu0 0
    %1211 = vmatprep.subr.bf16.mxu0 0
    %1212 = vmatpush1.bf16.msra.mxu0 0
    %1213 = vmatprep.mubr.bf16.mxu0 0
    %1214 = vmatmul.mubr.bf16.gmra.mrb[0].mxu0 %v1165
    %v1215 = vpop.f32.mrb[0].mxu0
    %v1216 = vadd.f32 0.0, %v1215
    %v1217 = vpop.f32.mrb[0].mxu0
    %v1218 = vpop.f32.mrb[0].mxu0
    %v1219 = vadd.f32 0.0, %v1218
    %v1220 = vpop.f32.mrb[0].mxu0
    %1221 = vmatprep.mubr.bf16.mxu0 0
    %1222 = vmatmul.mubr.bf16.gmra.mrb[0].mxu0 %v1166
    %v1223 = vpop.f32.mrb[0].mxu0
    %v1224 = vadd.f32 0.0, %v1223
    %v1225 = vpop.f32.mrb[0].mxu0
    %v1226 = vpop.f32.mrb[0].mxu0
    %v1227 = vadd.f32 0.0, %v1226
    %v1228 = vpop.f32.mrb[0].mxu0
    %1229 = vmatprep.mubr.bf16.mxu0 0
    %1230 = vmatmul.mubr.bf16.gmra.mrb[0].mxu0 %v1167
    %v1231 = vpop.f32.mrb[0].mxu0
    %v1232 = vadd.f32 0.0, %v1231
    %v1233 = vpop.f32.mrb[0].mxu0
    %v1234 = vpop.f32.mrb[0].mxu0
    %v1235 = vadd.f32 0.0, %v1234
    %v1236 = vpop.f32.mrb[0].mxu0
    %1237 = vmatprep.mubr.bf16.mxu0 0
    %1238 = vmatmul.mubr.bf16.gmra.mrb[0].mxu0 %v1168
    %v1239 = vpop.f32.mrb[0].mxu0
    %v1240 = vadd.f32 0.0, %v1239
    %v1241 = vpop.f32.mrb[0].mxu0
    %v1242 = vpop.f32.mrb[0].mxu0
    %v1243 = vadd.f32 0.0, %v1242
    %v1244 = vpop.f32.mrb[0].mxu0
    %1245 = vmatprep.mubr.bf16.mxu0 0
    %1246 = vmatmul.mubr.bf16.gmra.mrb[0].mxu0 %v1169
    %v1247 = vpop.f32.mrb[0].mxu0
    %v1248 = vadd.f32 0.0, %v1247
    %v1249 = vpop.f32.mrb[0].mxu0
    %v1250 = vpop.f32.mrb[0].mxu0
    %v1251 = vadd.f32 0.0, %v1250
    %v1252 = vpop.f32.mrb[0].mxu0
    %1253 = vmatprep.mubr.bf16.mxu0 0
    %1254 = vmatmul.mubr.bf16.gmra.mrb[0].mxu0 %v1170
    %v1255 = vpop.f32.mrb[0].mxu0
    %v1256 = vadd.f32 0.0, %v1255
    %v1257 = vpop.f32.mrb[0].mxu0
    %v1258 = vpop.f32.mrb[0].mxu0
    %v1259 = vadd.f32 0.0, %v1258
    %v1260 = vpop.f32.mrb[0].mxu0
    %1261 = vmatprep.mubr.bf16.mxu0 0
    %1262 = vmatmul.mubr.bf16.gmra.mrb[0].mxu0 %v1171
    %v1263 = vpop.f32.mrb[0].mxu0
    %v1264 = vadd.f32 0.0, %v1263
    %v1265 = vpop.f32.mrb[0].mxu0
    %v1266 = vpop.f32.mrb[0].mxu0
    %v1267 = vadd.f32 0.0, %v1266
    %v1268 = vpop.f32.mrb[0].mxu0
    %1269 = vmatprep.mubr.bf16.mxu0 0
    %1270 = vmatmul.mubr.bf16.gmra.mrb[0].mxu0 %v1172
    %v1271 = vpop.f32.mrb[0].mxu0
    %v1272 = vadd.f32 0.0, %v1271
    %v1273 = vpop.f32.mrb[0].mxu0
    %v1274 = vpop.f32.mrb[0].mxu0
    %v1275 = vadd.f32 0.0, %v1274
    %v1276 = vpop.f32.mrb[0].mxu0
    %1277 = vdwg.mxu0
    %v1278 = vmax.f32 %v1216, 0.0
    %v1279 = vmax.f32 %v1219, 0.0
    %v1280 = vmax.f32 %v1224, 0.0
    %v1281 = vmax.f32 %v1227, 0.0
    %v1282 = vmax.f32 %v1232, 0.0
    %v1283 = vmax.f32 %v1235, 0.0
    %v1284 = vmax.f32 %v1240, 0.0
    %v1285 = vmax.f32 %v1243, 0.0
    %v1286 = vmax.f32 %v1248, 0.0
    %v1287 = vmax.f32 %v1251, 0.0
    %v1288 = vmax.f32 %v1256, 0.0
    %v1289 = vmax.f32 %v1259, 0.0
    %v1290 = vmax.f32 %v1264, 0.0
    %v1291 = vmax.f32 %v1267, 0.0
    %v1292 = vmax.f32 %v1272, 0.0
    %v1293 = vmax.f32 %v1275, 0.0
    %s1294 = sld [smem:[#allocation7]]
    %v1295 = vld [vmem:[#allocation3] sm:$0xff]
    %v1296 = vld [vmem:[#allocation3 + $0x8] sm:$0xff]
    %v1297 = vld [vmem:[#allocation3 + $0x10] sm:$0xff]
    %v1298 = vld [vmem:[#allocation3 + $0x18] sm:$0xff]
    %v1299 = vld [vmem:[#allocation3 + $0x20] sm:$0xff]
    %v1300 = vld [vmem:[#allocation3 + $0x28] sm:$0xff]
    %v1301 = vld [vmem:[#allocation3 + $0x30] sm:$0xff]
    %v1302 = vld [vmem:[#allocation3 + $0x38] sm:$0xff]
    %v1303 = vld [vmem:[#allocation3 + $0x40] sm:$0xff]
    %v1304 = vld [vmem:[#allocation3 + $0x48] sm:$0xff]
    %v1305 = vld [vmem:[#allocation3 + $0x50] sm:$0xff]
    %v1306 = vld [vmem:[#allocation3 + $0x58] sm:$0xff]
    %v1307 = vld [vmem:[#allocation3 + $0x60] sm:$0xff]
    %v1308 = vld [vmem:[#allocation3 + $0x68] sm:$0xff]
    %v1309 = vld [vmem:[#allocation3 + $0x70] sm:$0xff]
    %v1310 = vld [vmem:[#allocation3 + $0x78] sm:$0xff]
    %v1311 = vstv %s1294
    %v1312 = vmul.f32 %v1311, %v1295
    %v1313 = vmul.f32 %v1311, %v1296
    %v1314 = vmul.f32 %v1311, %v1297
    %v1315 = vmul.f32 %v1311, %v1298
    %v1316 = vmul.f32 %v1311, %v1299
    %v1317 = vmul.f32 %v1311, %v1300
    %v1318 = vmul.f32 %v1311, %v1301
    %v1319 = vmul.f32 %v1311, %v1302
    %v1320 = vmul.f32 %v1311, %v1303
    %v1321 = vmul.f32 %v1311, %v1304
    %v1322 = vmul.f32 %v1311, %v1305
    %v1323 = vmul.f32 %v1311, %v1306
    %v1324 = vmul.f32 %v1311, %v1307
    %v1325 = vmul.f32 %v1311, %v1308
    %v1326 = vmul.f32 %v1311, %v1309
    %v1327 = vmul.f32 %v1311, %v1310
    %s1328 = sld [smem:[#allocation7 + $0x1]]
    %v1329 = vstv %s1328
    %v1330 = vmul.f32 %v1329, %v1278
    %v1331 = vmul.f32 %v1329, %v1279
    %v1332 = vmul.f32 %v1329, %v1280
    %v1333 = vmul.f32 %v1329, %v1281
    %v1334 = vmul.f32 %v1329, %v1282
    %v1335 = vmul.f32 %v1329, %v1283
    %v1336 = vmul.f32 %v1329, %v1284
    %v1337 = vmul.f32 %v1329, %v1285
    %v1338 = vmul.f32 %v1329, %v1286
    %v1339 = vmul.f32 %v1329, %v1287
    %v1340 = vmul.f32 %v1329, %v1288
    %v1341 = vmul.f32 %v1329, %v1289
    %v1342 = vmul.f32 %v1329, %v1290
    %v1343 = vmul.f32 %v1329, %v1291
    %v1344 = vmul.f32 %v1329, %v1292
    %v1345 = vmul.f32 %v1329, %v1293
    %v1346 = vadd.f32 %v1312, %v1330
    %v1347 = vadd.f32 %v1313, %v1331
    %v1348 = vadd.f32 %v1314, %v1332
    %v1349 = vadd.f32 %v1315, %v1333
    %v1350 = vadd.f32 %v1316, %v1334
    %v1351 = vadd.f32 %v1317, %v1335
    %v1352 = vadd.f32 %v1318, %v1336
    %v1353 = vadd.f32 %v1319, %v1337
    %v1354 = vadd.f32 %v1320, %v1338
    %v1355 = vadd.f32 %v1321, %v1339
    %v1356 = vadd.f32 %v1322, %v1340
    %v1357 = vadd.f32 %v1323, %v1341
    %v1358 = vadd.f32 %v1324, %v1342
    %v1359 = vadd.f32 %v1325, %v1343
    %v1360 = vadd.f32 %v1326, %v1344
    %v1361 = vadd.f32 %v1327, %v1345
    %1362 = vst [vmem:[#allocation4] sm:$0xff] %v1346
    %1363 = vst [vmem:[#allocation4 + $0x8] sm:$0xff] %v1347
    %1364 = vst [vmem:[#allocation4 + $0x10] sm:$0xff] %v1348
    %1365 = vst [vmem:[#allocation4 + $0x18] sm:$0xff] %v1349
    %1366 = vst [vmem:[#allocation4 + $0x20] sm:$0xff] %v1350
    %1367 = vst [vmem:[#allocation4 + $0x28] sm:$0xff] %v1351
    %1368 = vst [vmem:[#allocation4 + $0x30] sm:$0xff] %v1352
    %1369 = vst [vmem:[#allocation4 + $0x38] sm:$0xff] %v1353
    %1370 = vst [vmem:[#allocation4 + $0x40] sm:$0xff] %v1354
    %1371 = vst [vmem:[#allocation4 + $0x48] sm:$0xff] %v1355
    %1372 = vst [vmem:[#allocation4 + $0x50] sm:$0xff] %v1356
    %1373 = vst [vmem:[#allocation4 + $0x58] sm:$0xff] %v1357
    %1374 = vst [vmem:[#allocation4 + $0x60] sm:$0xff] %v1358
    %1375 = vst [vmem:[#allocation4 + $0x68] sm:$0xff] %v1359
    %1376 = vst [vmem:[#allocation4 + $0x70] sm:$0xff] %v1360
    %1377 = vst [vmem:[#allocation4 + $0x78] sm:$0xff] %v1361
    %v1378 = vld [vmem:[#allocation4] sm:$0xff]
    %v1379 = vld [vmem:[#allocation4 + $0x8] sm:$0xff]
    %v1380 = vld [vmem:[#allocation4 + $0x10] sm:$0xff]
    %v1381 = vld [vmem:[#allocation4 + $0x18] sm:$0xff]
    %v1382 = vld [vmem:[#allocation4 + $0x20] sm:$0xff]
    %v1383 = vld [vmem:[#allocation4 + $0x28] sm:$0xff]
    %v1384 = vld [vmem:[#allocation4 + $0x30] sm:$0xff]
    %v1385 = vld [vmem:[#allocation4 + $0x38] sm:$0xff]
    %v1386 = vld [vmem:[#allocation4 + $0x40] sm:$0xff]
    %v1387 = vld [vmem:[#allocation4 + $0x48] sm:$0xff]
    %v1388 = vld [vmem:[#allocation4 + $0x50] sm:$0xff]
    %v1389 = vld [vmem:[#allocation4 + $0x58] sm:$0xff]
    %v1390 = vld [vmem:[#allocation4 + $0x60] sm:$0xff]
    %v1391 = vld [vmem:[#allocation4 + $0x68] sm:$0xff]
    %v1392 = vld [vmem:[#allocation4 + $0x70] sm:$0xff]
    %v1393 = vld [vmem:[#allocation4 + $0x78] sm:$0xff]
    %v1394 = vld [vmem:[%s0] sm:$0xf]
    %v1395 = vld [vmem:[%s0 + $0x4] sm:$0xf]
    %v1396 = vld [vmem:[%s0 + $0x8] sm:$0xf]
    %v1397 = vld [vmem:[%s0 + $0xc] sm:$0xf]
    %v1398 = vld [vmem:[%s0 + $0x10] sm:$0xf]
    %v1399 = vld [vmem:[%s0 + $0x14] sm:$0xf]
    %v1400 = vld [vmem:[%s0 + $0x18] sm:$0xf]
    %v1401 = vld [vmem:[%s0 + $0x1c] sm:$0xf]
    %v1402 = vld [vmem:[%s0 + $0x20] sm:$0xf]
    %v1403 = vld [vmem:[%s0 + $0x24] sm:$0xf]
    %v1404 = vld [vmem:[%s0 + $0x28] sm:$0xf]
    %v1405 = vld [vmem:[%s0 + $0x2c] sm:$0xf]
    %v1406 = vld [vmem:[%s0 + $0x30] sm:$0xf]
    %v1407 = vld [vmem:[%s0 + $0x34] sm:$0xf]
    %v1408 = vld [vmem:[%s0 + $0x38] sm:$0xf]
    %v1409 = vld [vmem:[%s0 + $0x3c] sm:$0xf]
    %v1410 = vpack.c.bf16 %v1379, %v1378
    %v1411 = vpack.c.bf16 %v1381, %v1380
    %v1412 = vpack.c.bf16 %v1383, %v1382
    %v1413 = vpack.c.bf16 %v1385, %v1384
    %v1414 = vpack.c.bf16 %v1387, %v1386
    %v1415 = vpack.c.bf16 %v1389, %v1388
    %v1416 = vpack.c.bf16 %v1391, %v1390
    %v1417 = vpack.c.bf16 %v1393, %v1392
    %v1434 = vunpack.c.l.b16 %v1394
    %v1435 = vunpack.c.l.b16 %v1395
    %v1436 = vunpack.c.l.b16 %v1396
    %v1437 = vunpack.c.l.b16 %v1397
    %v1438 = vunpack.c.l.b16 %v1398
    %v1439 = vunpack.c.l.b16 %v1399
    %v1440 = vunpack.c.l.b16 %v1400
    %v1441 = vunpack.c.l.b16 %v1401
    %v1442 = vunpack.c.l.b16 %v1402
    %v1443 = vunpack.c.l.b16 %v1403
    %v1444 = vunpack.c.l.b16 %v1404
    %v1445 = vunpack.c.l.b16 %v1405
    %v1446 = vunpack.c.l.b16 %v1406
    %v1447 = vunpack.c.l.b16 %v1407
    %v1448 = vunpack.c.l.b16 %v1408
    %v1449 = vunpack.c.l.b16 %v1409
    %v1450 = vpack.c.b16 %v1435, %v1434
    %v1451 = vpack.c.b16 %v1437, %v1436
    %v1452 = vpack.c.b16 %v1439, %v1438
    %v1453 = vpack.c.b16 %v1441, %v1440
    %v1454 = vpack.c.b16 %v1443, %v1442
    %v1455 = vpack.c.b16 %v1445, %v1444
    %v1456 = vpack.c.b16 %v1447, %v1446
    %v1457 = vpack.c.b16 %v1449, %v1448
    %1466 = vmatprep.subr.bf16.mxu0 0
    %1467 = vmatpush1.bf16.msra.mxu0 %v1410
    %1468 = vmatprep.subr.bf16.mxu0 0
    %1469 = vmatpush1.bf16.msra.mxu0 %v1411
    %1470 = vmatprep.subr.bf16.mxu0 0
    %1471 = vmatpush1.bf16.msra.mxu0 %v1412
    %1472 = vmatprep.subr.bf16.mxu0 0
    %1473 = vmatpush1.bf16.msra.mxu0 %v1413
    %1474 = vmatprep.subr.bf16.mxu0 0
    %1475 = vmatpush1.bf16.msra.mxu0 %v1414
    %1476 = vmatprep.subr.bf16.mxu0 0
    %1477 = vmatpush1.bf16.msra.mxu0 %v1415
    %1478 = vmatprep.subr.bf16.mxu0 0
    %1479 = vmatpush1.bf16.msra.mxu0 %v1416
    %1480 = vmatprep.subr.bf16.mxu0 0
    %1481 = vmatpush1.bf16.msra.mxu0 %v1417
    %1482 = vmatprep.subr.bf16.mxu0 0
    %1483 = vmatpush1.bf16.msra.mxu0 0
    %1484 = vmatprep.subr.bf16.mxu0 0
    %1485 = vmatpush1.bf16.msra.mxu0 0
    %1486 = vmatprep.subr.bf16.mxu0 0
    %1487 = vmatpush1.bf16.msra.mxu0 0
    %1488 = vmatprep.subr.bf16.mxu0 0
    %1489 = vmatpush1.bf16.msra.mxu0 0
    %1490 = vmatprep.subr.bf16.mxu0 0
    %1491 = vmatpush1.bf16.msra.mxu0 0
    %1492 = vmatprep.subr.bf16.mxu0 0
    %1493 = vmatpush1.bf16.msra.mxu0 0
    %1494 = vmatprep.subr.bf16.mxu0 0
    %1495 = vmatpush1.bf16.msra.mxu0 0
    %1496 = vmatprep.subr.bf16.mxu0 0
    %1497 = vmatpush1.bf16.msra.mxu0 0
    %1498 = vmatprep.mubr.bf16.mxu0 0
    %1499 = vmatmul.mubr.bf16.gmra.mrb[0].mxu0 %v1450
    %v1500 = vpop.f32.mrb[0].mxu0
    %v1501 = vadd.f32 0.0, %v1500
    %v1502 = vpop.f32.mrb[0].mxu0
    %v1503 = vpop.f32.mrb[0].mxu0
    %v1504 = vadd.f32 0.0, %v1503
    %v1505 = vpop.f32.mrb[0].mxu0
    %1506 = vmatprep.mubr.bf16.mxu0 0
    %1507 = vmatmul.mubr.bf16.gmra.mrb[0].mxu0 %v1451
    %v1508 = vpop.f32.mrb[0].mxu0
    %v1509 = vadd.f32 0.0, %v1508
    %v1510 = vpop.f32.mrb[0].mxu0
    %v1511 = vpop.f32.mrb[0].mxu0
    %v1512 = vadd.f32 0.0, %v1511
    %v1513 = vpop.f32.mrb[0].mxu0
    %1514 = vmatprep.mubr.bf16.mxu0 0
    %1515 = vmatmul.mubr.bf16.gmra.mrb[0].mxu0 %v1452
    %v1516 = vpop.f32.mrb[0].mxu0
    %v1517 = vadd.f32 0.0, %v1516
    %v1518 = vpop.f32.mrb[0].mxu0
    %v1519 = vpop.f32.mrb[0].mxu0
    %v1520 = vadd.f32 0.0, %v1519
    %v1521 = vpop.f32.mrb[0].mxu0
    %1522 = vmatprep.mubr.bf16.mxu0 0
    %1523 = vmatmul.mubr.bf16.gmra.mrb[0].mxu0 %v1453
    %v1524 = vpop.f32.mrb[0].mxu0
    %v1525 = vadd.f32 0.0, %v1524
    %v1526 = vpop.f32.mrb[0].mxu0
    %v1527 = vpop.f32.mrb[0].mxu0
    %v1528 = vadd.f32 0.0, %v1527
    %v1529 = vpop.f32.mrb[0].mxu0
    %1530 = vmatprep.mubr.bf16.mxu0 0
    %1531 = vmatmul.mubr.bf16.gmra.mrb[0].mxu0 %v1454
    %v1532 = vpop.f32.mrb[0].mxu0
    %v1533 = vadd.f32 0.0, %v1532
    %v1534 = vpop.f32.mrb[0].mxu0
    %v1535 = vpop.f32.mrb[0].mxu0
    %v1536 = vadd.f32 0.0, %v1535
    %v1537 = vpop.f32.mrb[0].mxu0
    %1538 = vmatprep.mubr.bf16.mxu0 0
    %1539 = vmatmul.mubr.bf16.gmra.mrb[0].mxu0 %v1455
    %v1540 = vpop.f32.mrb[0].mxu0
    %v1541 = vadd.f32 0.0, %v1540
    %v1542 = vpop.f32.mrb[0].mxu0
    %v1543 = vpop.f32.mrb[0].mxu0
    %v1544 = vadd.f32 0.0, %v1543
    %v1545 = vpop.f32.mrb[0].mxu0
    %1546 = vmatprep.mubr.bf16.mxu0 0
    %1547 = vmatmul.mubr.bf16.gmra.mrb[0].mxu0 %v1456
    %v1548 = vpop.f32.mrb[0].mxu0
    %v1549 = vadd.f32 0.0, %v1548
    %v1550 = vpop.f32.mrb[0].mxu0
    %v1551 = vpop.f32.mrb[0].mxu0
    %v1552 = vadd.f32 0.0, %v1551
    %v1553 = vpop.f32.mrb[0].mxu0
    %1554 = vmatprep.mubr.bf16.mxu0 0
    %1555 = vmatmul.mubr.bf16.gmra.mrb[0].mxu0 %v1457
    %v1556 = vpop.f32.mrb[0].mxu0
    %v1557 = vadd.f32 0.0, %v1556
    %v1558 = vpop.f32.mrb[0].mxu0
    %v1559 = vpop.f32.mrb[0].mxu0
    %v1560 = vadd.f32 0.0, %v1559
    %v1561 = vpop.f32.mrb[0].mxu0
    %1562 = vdwg.mxu0
    %1563 = vst [vmem:[#allocation2] sm:$0xff] %v1501
    %1564 = vst [vmem:[#allocation2 + $0x10] sm:$0xff] %v1504
    %1565 = vst [vmem:[#allocation2 + $0x20] sm:$0xff] %v1509
    %1566 = vst [vmem:[#allocation2 + $0x30] sm:$0xff] %v1512
    %1567 = vst [vmem:[#allocation2 + $0x40] sm:$0xff] %v1517
    %1568 = vst [vmem:[#allocation2 + $0x50] sm:$0xff] %v1520
    %1569 = vst [vmem:[#allocation2 + $0x60] sm:$0xff] %v1525
    %1570 = vst [vmem:[#allocation2 + $0x70] sm:$0xff] %v1528
    %1571 = vst [vmem:[#allocation2 + $0x80] sm:$0xff] %v1533
    %1572 = vst [vmem:[#allocation2 + $0x90] sm:$0xff] %v1536
    %1573 = vst [vmem:[#allocation2 + $0xa0] sm:$0xff] %v1541
    %1574 = vst [vmem:[#allocation2 + $0xb0] sm:$0xff] %v1544
    %1575 = vst [vmem:[#allocation2 + $0xc0] sm:$0xff] %v1549
    %1576 = vst [vmem:[#allocation2 + $0xd0] sm:$0xff] %v1552
    %1577 = vst [vmem:[#allocation2 + $0xe0] sm:$0xff] %v1557
    %1578 = vst [vmem:[#allocation2 + $0xf0] sm:$0xff] %v1560
    %v1579 = vld [vmem:[#allocation2] sm:$0xff]
    %v1580 = vld [vmem:[#allocation2 + $0x8] sm:$0xff]
    %v1581 = vld [vmem:[#allocation2 + $0x10] sm:$0xff]
    %v1582 = vld [vmem:[#allocation2 + $0x18] sm:$0xff]
    %v1583 = vld [vmem:[#allocation2 + $0x20] sm:$0xff]
    %v1584 = vld [vmem:[#allocation2 + $0x28] sm:$0xff]
    %v1585 = vld [vmem:[#allocation2 + $0x30] sm:$0xff]
    %v1586 = vld [vmem:[#allocation2 + $0x38] sm:$0xff]
    %v1587 = vld [vmem:[#allocation2 + $0x40] sm:$0xff]
    %v1588 = vld [vmem:[#allocation2 + $0x48] sm:$0xff]
    %v1589 = vld [vmem:[#allocation2 + $0x50] sm:$0xff]
    %v1590 = vld [vmem:[#allocation2 + $0x58] sm:$0xff]
    %v1591 = vld [vmem:[#allocation2 + $0x60] sm:$0xff]
    %v1592 = vld [vmem:[#allocation2 + $0x68] sm:$0xff]
    %v1593 = vld [vmem:[#allocation2 + $0x70] sm:$0xff]
    %v1594 = vld [vmem:[#allocation2 + $0x78] sm:$0xff]
    %v1595 = vld [vmem:[#allocation2 + $0x80] sm:$0xff]
    %v1596 = vld [vmem:[#allocation2 + $0x88] sm:$0xff]
    %v1597 = vld [vmem:[#allocation2 + $0x90] sm:$0xff]
    %v1598 = vld [vmem:[#allocation2 + $0x98] sm:$0xff]
    %v1599 = vld [vmem:[#allocation2 + $0xa0] sm:$0xff]
    %v1600 = vld [vmem:[#allocation2 + $0xa8] sm:$0xff]
    %v1601 = vld [vmem:[#allocation2 + $0xb0] sm:$0xff]
    %v1602 = vld [vmem:[#allocation2 + $0xb8] sm:$0xff]
    %v1603 = vld [vmem:[#allocation2 + $0xc0] sm:$0xff]
    %v1604 = vld [vmem:[#allocation2 + $0xc8] sm:$0xff]
    %v1605 = vld [vmem:[#allocation2 + $0xd0] sm:$0xff]
    %v1606 = vld [vmem:[#allocation2 + $0xd8] sm:$0xff]
    %v1607 = vld [vmem:[#allocation2 + $0xe0] sm:$0xff]
    %v1608 = vld [vmem:[#allocation2 + $0xe8] sm:$0xff]
    %v1609 = vld [vmem:[#allocation2 + $0xf0] sm:$0xff]
    %v1610 = vld [vmem:[#allocation2 + $0xf8] sm:$0xff]
    %s1611 = scalar_lea.vmem %s4, 512
    %v1612 = vld [vmem:[%s1611] sm:$0xff]
    %v1613 = vld [vmem:[%s1611 + $0x8] sm:$0xff]
    %v1614 = vld [vmem:[%s1611 + $0x10] sm:$0xff]
    %v1615 = vld [vmem:[%s1611 + $0x18] sm:$0xff]
    %v1616 = vld [vmem:[%s1611 + $0x20] sm:$0xff]
    %v1617 = vld [vmem:[%s1611 + $0x28] sm:$0xff]
    %v1618 = vld [vmem:[%s1611 + $0x30] sm:$0xff]
    %v1619 = vld [vmem:[%s1611 + $0x38] sm:$0xff]
    %v1620 = vld [vmem:[%s1611 + $0x40] sm:$0xff]
    %v1621 = vld [vmem:[%s1611 + $0x48] sm:$0xff]
    %v1622 = vld [vmem:[%s1611 + $0x50] sm:$0xff]
    %v1623 = vld [vmem:[%s1611 + $0x58] sm:$0xff]
    %v1624 = vld [vmem:[%s1611 + $0x60] sm:$0xff]
    %v1625 = vld [vmem:[%s1611 + $0x68] sm:$0xff]
    %v1626 = vld [vmem:[%s1611 + $0x70] sm:$0xff]
    %v1627 = vld [vmem:[%s1611 + $0x78] sm:$0xff]
    %v1628 = vld [vmem:[%s1611 + $0x80] sm:$0xff]
    %v1629 = vld [vmem:[%s1611 + $0x88] sm:$0xff]
    %v1630 = vld [vmem:[%s1611 + $0x90] sm:$0xff]
    %v1631 = vld [vmem:[%s1611 + $0x98] sm:$0xff]
    %v1632 = vld [vmem:[%s1611 + $0xa0] sm:$0xff]
    %v1633 = vld [vmem:[%s1611 + $0xa8] sm:$0xff]
    %v1634 = vld [vmem:[%s1611 + $0xb0] sm:$0xff]
    %v1635 = vld [vmem:[%s1611 + $0xb8] sm:$0xff]
    %v1636 = vld [vmem:[%s1611 + $0xc0] sm:$0xff]
    %v1637 = vld [vmem:[%s1611 + $0xc8] sm:$0xff]
    %v1638 = vld [vmem:[%s1611 + $0xd0] sm:$0xff]
    %v1639 = vld [vmem:[%s1611 + $0xd8] sm:$0xff]
    %v1640 = vld [vmem:[%s1611 + $0xe0] sm:$0xff]
    %v1641 = vld [vmem:[%s1611 + $0xe8] sm:$0xff]
    %v1642 = vld [vmem:[%s1611 + $0xf0] sm:$0xff]
    %v1643 = vld [vmem:[%s1611 + $0xf8] sm:$0xff]
    %s1644 = scalar_lea.vmem %s5, 2
    %v1645 = vld [vmem:[%s1644] sm:$0x1]
    %v1647 = vlaneseq
    %v1648 = vshrl.u32 %v1647, 7
    %v1649 = vsub.s32 0, %v1648
    %v1650 = vrot.slane %v1645, %v1649
    %1652 = vmatprep.subr.mxu0 0.0
    %1653 = vmatpush1.msra.mxu0 %v1612
    %1654 = vmatprep.subr.mxu0 0.0
    %1655 = vmatpush1.msra.mxu0 %v1613
    %1656 = vmatprep.subr.mxu0 0.0
    %1657 = vmatpush1.msra.mxu0 %v1614
    %1658 = vmatprep.subr.mxu0 0.0
    %1659 = vmatpush1.msra.mxu0 %v1615
    %1660 = vmatprep.subr.mxu0 0.0
    %1661 = vmatpush1.msra.mxu0 %v1616
    %1662 = vmatprep.subr.mxu0 0.0
    %1663 = vmatpush1.msra.mxu0 %v1617
    %1664 = vmatprep.subr.mxu0 0.0
    %1665 = vmatpush1.msra.mxu0 %v1618
    %1666 = vmatprep.subr.mxu0 0.0
    %1667 = vmatpush1.msra.mxu0 %v1619
    %1668 = vmatprep.subr.mxu0 0.0
    %1669 = vmatpush1.msra.mxu0 %v1620
    %1670 = vmatprep.subr.mxu0 0.0
    %1671 = vmatpush1.msra.mxu0 %v1621
    %1672 = vmatprep.subr.mxu0 0.0
    %1673 = vmatpush1.msra.mxu0 %v1622
    %1674 = vmatprep.subr.mxu0 0.0
    %1675 = vmatpush1.msra.mxu0 %v1623
    %1676 = vmatprep.subr.mxu0 0.0
    %1677 = vmatpush1.msra.mxu0 %v1624
    %1678 = vmatprep.subr.mxu0 0.0
    %1679 = vmatpush1.msra.mxu0 %v1625
    %1680 = vmatprep.subr.mxu0 0.0
    %1681 = vmatpush1.msra.mxu0 %v1626
    %1682 = vmatprep.subr.mxu0 0.0
    %1683 = vmatpush1.msra.mxu0 %v1627
    %1684 = vmatprep.subr.mxu0 0.0
    %1685 = vmatpush1.msra.mxu0 %v1628
    %1686 = vmatprep.subr.mxu0 0.0
    %1687 = vmatpush1.msra.mxu0 %v1629
    %1688 = vmatprep.subr.mxu0 0.0
    %1689 = vmatpush1.msra.mxu0 %v1630
    %1690 = vmatprep.subr.mxu0 0.0
    %1691 = vmatpush1.msra.mxu0 %v1631
    %1692 = vmatprep.subr.mxu0 0.0
    %1693 = vmatpush1.msra.mxu0 %v1632
    %1694 = vmatprep.subr.mxu0 0.0
    %1695 = vmatpush1.msra.mxu0 %v1633
    %1696 = vmatprep.subr.mxu0 0.0
    %1697 = vmatpush1.msra.mxu0 %v1634
    %1698 = vmatprep.subr.mxu0 0.0
    %1699 = vmatpush1.msra.mxu0 %v1635
    %1700 = vmatprep.subr.mxu0 0.0
    %1701 = vmatpush1.msra.mxu0 %v1636
    %1702 = vmatprep.subr.mxu0 0.0
    %1703 = vmatpush1.msra.mxu0 %v1637
    %1704 = vmatprep.subr.mxu0 0.0
    %1705 = vmatpush1.msra.mxu0 %v1638
    %1706 = vmatprep.subr.mxu0 0.0
    %1707 = vmatpush1.msra.mxu0 %v1639
    %1708 = vmatprep.subr.mxu0 0.0
    %1709 = vmatpush1.msra.mxu0 %v1640
    %1710 = vmatprep.subr.mxu0 0.0
    %1711 = vmatpush1.msra.mxu0 %v1641
    %1712 = vmatprep.subr.mxu0 0.0
    %1713 = vmatpush1.msra.mxu0 %v1642
    %1714 = vmatprep.subr.mxu0 0.0
    %1715 = vmatpush1.msra.mxu0 %v1643
    %1716 = vmatprep.mubr.f32.mxu0 %v1580
    %1717 = vmatmul.mubr.f32.gmra.mrb[0].mxu0 %v1579
    %v1718 = vpop.f32.mrb[0].mxu0
    %v1719 = vadd.f32 %v1650, %v1718
    %v1720 = vpop.f32.mrb[0].mxu0
    %1721 = vmatprep.mubr.f32.mxu0 %v1582
    %1722 = vmatmul.mubr.f32.gmra.mrb[0].mxu0 %v1581
    %v1723 = vpop.f32.mrb[0].mxu0
    %v1724 = vadd.f32 %v1650, %v1723
    %v1725 = vpop.f32.mrb[0].mxu0
    %1726 = vmatprep.mubr.f32.mxu0 %v1584
    %1727 = vmatmul.mubr.f32.gmra.mrb[0].mxu0 %v1583
    %v1728 = vpop.f32.mrb[0].mxu0
    %v1729 = vadd.f32 %v1650, %v1728
    %v1730 = vpop.f32.mrb[0].mxu0
    %1731 = vmatprep.mubr.f32.mxu0 %v1586
    %1732 = vmatmul.mubr.f32.gmra.mrb[0].mxu0 %v1585
    %v1733 = vpop.f32.mrb[0].mxu0
    %v1734 = vadd.f32 %v1650, %v1733
    %v1735 = vpop.f32.mrb[0].mxu0
    %1736 = vmatprep.mubr.f32.mxu0 %v1588
    %1737 = vmatmul.mubr.f32.gmra.mrb[0].mxu0 %v1587
    %v1738 = vpop.f32.mrb[0].mxu0
    %v1739 = vadd.f32 %v1650, %v1738
    %v1740 = vpop.f32.mrb[0].mxu0
    %1741 = vmatprep.mubr.f32.mxu0 %v1590
    %1742 = vmatmul.mubr.f32.gmra.mrb[0].mxu0 %v1589
    %v1743 = vpop.f32.mrb[0].mxu0
    %v1744 = vadd.f32 %v1650, %v1743
    %v1745 = vpop.f32.mrb[0].mxu0
    %1746 = vmatprep.mubr.f32.mxu0 %v1592
    %1747 = vmatmul.mubr.f32.gmra.mrb[0].mxu0 %v1591
    %v1748 = vpop.f32.mrb[0].mxu0
    %v1749 = vadd.f32 %v1650, %v1748
    %v1750 = vpop.f32.mrb[0].mxu0
    %1751 = vmatprep.mubr.f32.mxu0 %v1594
    %1752 = vmatmul.mubr.f32.gmra.mrb[0].mxu0 %v1593
    %v1753 = vpop.f32.mrb[0].mxu0
    %v1754 = vadd.f32 %v1650, %v1753
    %v1755 = vpop.f32.mrb[0].mxu0
    %1756 = vmatprep.mubr.f32.mxu0 %v1596
    %1757 = vmatmul.mubr.f32.gmra.mrb[0].mxu0 %v1595
    %v1758 = vpop.f32.mrb[0].mxu0
    %v1759 = vadd.f32 %v1650, %v1758
    %v1760 = vpop.f32.mrb[0].mxu0
    %1761 = vmatprep.mubr.f32.mxu0 %v1598
    %1762 = vmatmul.mubr.f32.gmra.mrb[0].mxu0 %v1597
    %v1763 = vpop.f32.mrb[0].mxu0
    %v1764 = vadd.f32 %v1650, %v1763
    %v1765 = vpop.f32.mrb[0].mxu0
    %1766 = vmatprep.mubr.f32.mxu0 %v1600
    %1767 = vmatmul.mubr.f32.gmra.mrb[0].mxu0 %v1599
    %v1768 = vpop.f32.mrb[0].mxu0
    %v1769 = vadd.f32 %v1650, %v1768
    %v1770 = vpop.f32.mrb[0].mxu0
    %1771 = vmatprep.mubr.f32.mxu0 %v1602
    %1772 = vmatmul.mubr.f32.gmra.mrb[0].mxu0 %v1601
    %v1773 = vpop.f32.mrb[0].mxu0
    %v1774 = vadd.f32 %v1650, %v1773
    %v1775 = vpop.f32.mrb[0].mxu0
    %1776 = vmatprep.mubr.f32.mxu0 %v1604
    %1777 = vmatmul.mubr.f32.gmra.mrb[0].mxu0 %v1603
    %v1778 = vpop.f32.mrb[0].mxu0
    %v1779 = vadd.f32 %v1650, %v1778
    %v1780 = vpop.f32.mrb[0].mxu0
    %1781 = vmatprep.mubr.f32.mxu0 %v1606
    %1782 = vmatmul.mubr.f32.gmra.mrb[0].mxu0 %v1605
    %v1783 = vpop.f32.mrb[0].mxu0
    %v1784 = vadd.f32 %v1650, %v1783
    %v1785 = vpop.f32.mrb[0].mxu0
    %1786 = vmatprep.mubr.f32.mxu0 %v1608
    %1787 = vmatmul.mubr.f32.gmra.mrb[0].mxu0 %v1607
    %v1788 = vpop.f32.mrb[0].mxu0
    %v1789 = vadd.f32 %v1650, %v1788
    %v1790 = vpop.f32.mrb[0].mxu0
    %1791 = vmatprep.mubr.f32.mxu0 %v1610
    %1792 = vmatmul.mubr.f32.gmra.mrb[0].mxu0 %v1609
    %v1793 = vpop.f32.mrb[0].mxu0
    %v1794 = vadd.f32 %v1650, %v1793
    %v1795 = vpop.f32.mrb[0].mxu0
    %1796 = vdwg.mxu0
    %v1797 = vld [vmem:[%s1] sm:$0xf]
    %v1798 = vld [vmem:[%s1 + $0x4] sm:$0xf]
    %v1799 = vld [vmem:[%s1 + $0x8] sm:$0xf]
    %v1800 = vld [vmem:[%s1 + $0xc] sm:$0xf]
    %v1801 = vld [vmem:[%s1 + $0x10] sm:$0xf]
    %v1802 = vld [vmem:[%s1 + $0x14] sm:$0xf]
    %v1803 = vld [vmem:[%s1 + $0x18] sm:$0xf]
    %v1804 = vld [vmem:[%s1 + $0x1c] sm:$0xf]
    %v1805 = vld [vmem:[%s1 + $0x20] sm:$0xf]
    %v1806 = vld [vmem:[%s1 + $0x24] sm:$0xf]
    %v1807 = vld [vmem:[%s1 + $0x28] sm:$0xf]
    %v1808 = vld [vmem:[%s1 + $0x2c] sm:$0xf]
    %v1809 = vld [vmem:[%s1 + $0x30] sm:$0xf]
    %v1810 = vld [vmem:[%s1 + $0x34] sm:$0xf]
    %v1811 = vld [vmem:[%s1 + $0x38] sm:$0xf]
    %v1812 = vld [vmem:[%s1 + $0x3c] sm:$0xf]
    %v1813 = vpack.c.bf16 %v1724, %v1719
    %v1814 = vpack.c.bf16 %v1734, %v1729
    %v1815 = vpack.c.bf16 %v1744, %v1739
    %v1816 = vpack.c.bf16 %v1754, %v1749
    %v1817 = vpack.c.bf16 %v1764, %v1759
    %v1818 = vpack.c.bf16 %v1774, %v1769
    %v1819 = vpack.c.bf16 %v1784, %v1779
    %v1820 = vpack.c.bf16 %v1794, %v1789
    %v1837 = vunpack.c.l.b16 %v1797
    %v1838 = vunpack.c.l.b16 %v1798
    %v1839 = vunpack.c.l.b16 %v1799
    %v1840 = vunpack.c.l.b16 %v1800
    %v1841 = vunpack.c.l.b16 %v1801
    %v1842 = vunpack.c.l.b16 %v1802
    %v1843 = vunpack.c.l.b16 %v1803
    %v1844 = vunpack.c.l.b16 %v1804
    %v1845 = vunpack.c.l.b16 %v1805
    %v1846 = vunpack.c.l.b16 %v1806
    %v1847 = vunpack.c.l.b16 %v1807
    %v1848 = vunpack.c.l.b16 %v1808
    %v1849 = vunpack.c.l.b16 %v1809
    %v1850 = vunpack.c.l.b16 %v1810
    %v1851 = vunpack.c.l.b16 %v1811
    %v1852 = vunpack.c.l.b16 %v1812
    %v1853 = vpack.c.b16 %v1838, %v1837
    %v1854 = vpack.c.b16 %v1840, %v1839
    %v1855 = vpack.c.b16 %v1842, %v1841
    %v1856 = vpack.c.b16 %v1844, %v1843
    %v1857 = vpack.c.b16 %v1846, %v1845
    %v1858 = vpack.c.b16 %v1848, %v1847
    %v1859 = vpack.c.b16 %v1850, %v1849
    %v1860 = vpack.c.b16 %v1852, %v1851
    %1869 = vmatprep.subr.bf16.mxu0 0
    %1870 = vmatpush1.bf16.msra.mxu0 %v1813
    %1871 = vmatprep.subr.bf16.mxu0 0
    %1872 = vmatpush1.bf16.msra.mxu0 %v1814
    %1873 = vmatprep.subr.bf16.mxu0 0
    %1874 = vmatpush1.bf16.msra.mxu0 %v1815
    %1875 = vmatprep.subr.bf16.mxu0 0
    %1876 = vmatpush1.bf16.msra.mxu0 %v1816
    %1877 = vmatprep.subr.bf16.mxu0 0
    %1878 = vmatpush1.bf16.msra.mxu0 %v1817
    %1879 = vmatprep.subr.bf16.mxu0 0
    %1880 = vmatpush1.bf16.msra.mxu0 %v1818
    %1881 = vmatprep.subr.bf16.mxu0 0
    %1882 = vmatpush1.bf16.msra.mxu0 %v1819
    %1883 = vmatprep.subr.bf16.mxu0 0
    %1884 = vmatpush1.bf16.msra.mxu0 %v1820
    %1885 = vmatprep.subr.bf16.mxu0 0
    %1886 = vmatpush1.bf16.msra.mxu0 0
    %1887 = vmatprep.subr.bf16.mxu0 0
    %1888 = vmatpush1.bf16.msra.mxu0 0
    %1889 = vmatprep.subr.bf16.mxu0 0
    %1890 = vmatpush1.bf16.msra.mxu0 0
    %1891 = vmatprep.subr.bf16.mxu0 0
    %1892 = vmatpush1.bf16.msra.mxu0 0
    %1893 = vmatprep.subr.bf16.mxu0 0
    %1894 = vmatpush1.bf16.msra.mxu0 0
    %1895 = vmatprep.subr.bf16.mxu0 0
    %1896 = vmatpush1.bf16.msra.mxu0 0
    %1897 = vmatprep.subr.bf16.mxu0 0
    %1898 = vmatpush1.bf16.msra.mxu0 0
    %1899 = vmatprep.subr.bf16.mxu0 0
    %1900 = vmatpush1.bf16.msra.mxu0 0
    %1901 = vmatprep.mubr.bf16.mxu0 0
    %1902 = vmatmul.mubr.bf16.gmra.mrb[0].mxu0 %v1853
    %v1903 = vpop.f32.mrb[0].mxu0
    %v1904 = vadd.f32 0.0, %v1903
    %v1905 = vpop.f32.mrb[0].mxu0
    %v1906 = vpop.f32.mrb[0].mxu0
    %v1907 = vadd.f32 0.0, %v1906
    %v1908 = vpop.f32.mrb[0].mxu0
    %1909 = vmatprep.mubr.bf16.mxu0 0
    %1910 = vmatmul.mubr.bf16.gmra.mrb[0].mxu0 %v1854
    %v1911 = vpop.f32.mrb[0].mxu0
    %v1912 = vadd.f32 0.0, %v1911
    %v1913 = vpop.f32.mrb[0].mxu0
    %v1914 = vpop.f32.mrb[0].mxu0
    %v1915 = vadd.f32 0.0, %v1914
    %v1916 = vpop.f32.mrb[0].mxu0
    %1917 = vmatprep.mubr.bf16.mxu0 0
    %1918 = vmatmul.mubr.bf16.gmra.mrb[0].mxu0 %v1855
    %v1919 = vpop.f32.mrb[0].mxu0
    %v1920 = vadd.f32 0.0, %v1919
    %v1921 = vpop.f32.mrb[0].mxu0
    %v1922 = vpop.f32.mrb[0].mxu0
    %v1923 = vadd.f32 0.0, %v1922
    %v1924 = vpop.f32.mrb[0].mxu0
    %1925 = vmatprep.mubr.bf16.mxu0 0
    %1926 = vmatmul.mubr.bf16.gmra.mrb[0].mxu0 %v1856
    %v1927 = vpop.f32.mrb[0].mxu0
    %v1928 = vadd.f32 0.0, %v1927
    %v1929 = vpop.f32.mrb[0].mxu0
    %v1930 = vpop.f32.mrb[0].mxu0
    %v1931 = vadd.f32 0.0, %v1930
    %v1932 = vpop.f32.mrb[0].mxu0
    %1933 = vmatprep.mubr.bf16.mxu0 0
    %1934 = vmatmul.mubr.bf16.gmra.mrb[0].mxu0 %v1857
    %v1935 = vpop.f32.mrb[0].mxu0
    %v1936 = vadd.f32 0.0, %v1935
    %v1937 = vpop.f32.mrb[0].mxu0
    %v1938 = vpop.f32.mrb[0].mxu0
    %v1939 = vadd.f32 0.0, %v1938
    %v1940 = vpop.f32.mrb[0].mxu0
    %1941 = vmatprep.mubr.bf16.mxu0 0
    %1942 = vmatmul.mubr.bf16.gmra.mrb[0].mxu0 %v1858
    %v1943 = vpop.f32.mrb[0].mxu0
    %v1944 = vadd.f32 0.0, %v1943
    %v1945 = vpop.f32.mrb[0].mxu0
    %v1946 = vpop.f32.mrb[0].mxu0
    %v1947 = vadd.f32 0.0, %v1946
    %v1948 = vpop.f32.mrb[0].mxu0
    %1949 = vmatprep.mubr.bf16.mxu0 0
    %1950 = vmatmul.mubr.bf16.gmra.mrb[0].mxu0 %v1859
    %v1951 = vpop.f32.mrb[0].mxu0
    %v1952 = vadd.f32 0.0, %v1951
    %v1953 = vpop.f32.mrb[0].mxu0
    %v1954 = vpop.f32.mrb[0].mxu0
    %v1955 = vadd.f32 0.0, %v1954
    %v1956 = vpop.f32.mrb[0].mxu0
    %1957 = vmatprep.mubr.bf16.mxu0 0
    %1958 = vmatmul.mubr.bf16.gmra.mrb[0].mxu0 %v1860
    %v1959 = vpop.f32.mrb[0].mxu0
    %v1960 = vadd.f32 0.0, %v1959
    %v1961 = vpop.f32.mrb[0].mxu0
    %v1962 = vpop.f32.mrb[0].mxu0
    %v1963 = vadd.f32 0.0, %v1962
    %v1964 = vpop.f32.mrb[0].mxu0
    %1965 = vdwg.mxu0
    %v1966 = vmax.f32 %v1904, 0.0
    %v1967 = vmax.f32 %v1907, 0.0
    %v1968 = vmax.f32 %v1912, 0.0
    %v1969 = vmax.f32 %v1915, 0.0
    %v1970 = vmax.f32 %v1920, 0.0
    %v1971 = vmax.f32 %v1923, 0.0
    %v1972 = vmax.f32 %v1928, 0.0
    %v1973 = vmax.f32 %v1931, 0.0
    %v1974 = vmax.f32 %v1936, 0.0
    %v1975 = vmax.f32 %v1939, 0.0
    %v1976 = vmax.f32 %v1944, 0.0
    %v1977 = vmax.f32 %v1947, 0.0
    %v1978 = vmax.f32 %v1952, 0.0
    %v1979 = vmax.f32 %v1955, 0.0
    %v1980 = vmax.f32 %v1960, 0.0
    %v1981 = vmax.f32 %v1963, 0.0
    %s1982 = sld [smem:[#allocation7 + $0x2]]
    %v1983 = vld [vmem:[#allocation3] sm:$0xff]
    %v1984 = vld [vmem:[#allocation3 + $0x8] sm:$0xff]
    %v1985 = vld [vmem:[#allocation3 + $0x10] sm:$0xff]
    %v1986 = vld [vmem:[#allocation3 + $0x18] sm:$0xff]
    %v1987 = vld [vmem:[#allocation3 + $0x20] sm:$0xff]
    %v1988 = vld [vmem:[#allocation3 + $0x28] sm:$0xff]
    %v1989 = vld [vmem:[#allocation3 + $0x30] sm:$0xff]
    %v1990 = vld [vmem:[#allocation3 + $0x38] sm:$0xff]
    %v1991 = vld [vmem:[#allocation3 + $0x40] sm:$0xff]
    %v1992 = vld [vmem:[#allocation3 + $0x48] sm:$0xff]
    %v1993 = vld [vmem:[#allocation3 + $0x50] sm:$0xff]
    %v1994 = vld [vmem:[#allocation3 + $0x58] sm:$0xff]
    %v1995 = vld [vmem:[#allocation3 + $0x60] sm:$0xff]
    %v1996 = vld [vmem:[#allocation3 + $0x68] sm:$0xff]
    %v1997 = vld [vmem:[#allocation3 + $0x70] sm:$0xff]
    %v1998 = vld [vmem:[#allocation3 + $0x78] sm:$0xff]
    %v1999 = vstv %s1982
    %v2000 = vmul.f32 %v1999, %v1983
    %v2001 = vmul.f32 %v1999, %v1984
    %v2002 = vmul.f32 %v1999, %v1985
    %v2003 = vmul.f32 %v1999, %v1986
    %v2004 = vmul.f32 %v1999, %v1987
    %v2005 = vmul.f32 %v1999, %v1988
    %v2006 = vmul.f32 %v1999, %v1989
    %v2007 = vmul.f32 %v1999, %v1990
    %v2008 = vmul.f32 %v1999, %v1991
    %v2009 = vmul.f32 %v1999, %v1992
    %v2010 = vmul.f32 %v1999, %v1993
    %v2011 = vmul.f32 %v1999, %v1994
    %v2012 = vmul.f32 %v1999, %v1995
    %v2013 = vmul.f32 %v1999, %v1996
    %v2014 = vmul.f32 %v1999, %v1997
    %v2015 = vmul.f32 %v1999, %v1998
    %s2016 = sld [smem:[#allocation7 + $0x3]]
    %v2017 = vld [vmem:[#allocation4] sm:$0xff]
    %v2018 = vld [vmem:[#allocation4 + $0x8] sm:$0xff]
    %v2019 = vld [vmem:[#allocation4 + $0x10] sm:$0xff]
    %v2020 = vld [vmem:[#allocation4 + $0x18] sm:$0xff]
    %v2021 = vld [vmem:[#allocation4 + $0x20] sm:$0xff]
    %v2022 = vld [vmem:[#allocation4 + $0x28] sm:$0xff]
    %v2023 = vld [vmem:[#allocation4 + $0x30] sm:$0xff]
    %v2024 = vld [vmem:[#allocation4 + $0x38] sm:$0xff]
    %v2025 = vld [vmem:[#allocation4 + $0x40] sm:$0xff]
    %v2026 = vld [vmem:[#allocation4 + $0x48] sm:$0xff]
    %v2027 = vld [vmem:[#allocation4 + $0x50] sm:$0xff]
    %v2028 = vld [vmem:[#allocation4 + $0x58] sm:$0xff]
    %v2029 = vld [vmem:[#allocation4 + $0x60] sm:$0xff]
    %v2030 = vld [vmem:[#allocation4 + $0x68] sm:$0xff]
    %v2031 = vld [vmem:[#allocation4 + $0x70] sm:$0xff]
    %v2032 = vld [vmem:[#allocation4 + $0x78] sm:$0xff]
    %v2033 = vstv %s2016
    %v2034 = vmul.f32 %v2033, %v2017
    %v2035 = vmul.f32 %v2033, %v2018
    %v2036 = vmul.f32 %v2033, %v2019
    %v2037 = vmul.f32 %v2033, %v2020
    %v2038 = vmul.f32 %v2033, %v2021
    %v2039 = vmul.f32 %v2033, %v2022
    %v2040 = vmul.f32 %v2033, %v2023
    %v2041 = vmul.f32 %v2033, %v2024
    %v2042 = vmul.f32 %v2033, %v2025
    %v2043 = vmul.f32 %v2033, %v2026
    %v2044 = vmul.f32 %v2033, %v2027
    %v2045 = vmul.f32 %v2033, %v2028
    %v2046 = vmul.f32 %v2033, %v2029
    %v2047 = vmul.f32 %v2033, %v2030
    %v2048 = vmul.f32 %v2033, %v2031
    %v2049 = vmul.f32 %v2033, %v2032
    %v2050 = vadd.f32 %v2000, %v2034
    %v2051 = vadd.f32 %v2001, %v2035
    %v2052 = vadd.f32 %v2002, %v2036
    %v2053 = vadd.f32 %v2003, %v2037
    %v2054 = vadd.f32 %v2004, %v2038
    %v2055 = vadd.f32 %v2005, %v2039
    %v2056 = vadd.f32 %v2006, %v2040
    %v2057 = vadd.f32 %v2007, %v2041
    %v2058 = vadd.f32 %v2008, %v2042
    %v2059 = vadd.f32 %v2009, %v2043
    %v2060 = vadd.f32 %v2010, %v2044
    %v2061 = vadd.f32 %v2011, %v2045
    %v2062 = vadd.f32 %v2012, %v2046
    %v2063 = vadd.f32 %v2013, %v2047
    %v2064 = vadd.f32 %v2014, %v2048
    %v2065 = vadd.f32 %v2015, %v2049
    %s2066 = sld [smem:[#allocation7 + $0x4]]
    %v2067 = vstv %s2066
    %v2068 = vmul.f32 %v2067, %v1966
    %v2069 = vmul.f32 %v2067, %v1967
    %v2070 = vmul.f32 %v2067, %v1968
    %v2071 = vmul.f32 %v2067, %v1969
    %v2072 = vmul.f32 %v2067, %v1970
    %v2073 = vmul.f32 %v2067, %v1971
    %v2074 = vmul.f32 %v2067, %v1972
    %v2075 = vmul.f32 %v2067, %v1973
    %v2076 = vmul.f32 %v2067, %v1974
    %v2077 = vmul.f32 %v2067, %v1975
    %v2078 = vmul.f32 %v2067, %v1976
    %v2079 = vmul.f32 %v2067, %v1977
    %v2080 = vmul.f32 %v2067, %v1978
    %v2081 = vmul.f32 %v2067, %v1979
    %v2082 = vmul.f32 %v2067, %v1980
    %v2083 = vmul.f32 %v2067, %v1981
    %v2084 = vadd.f32 %v2050, %v2068
    %v2085 = vadd.f32 %v2051, %v2069
    %v2086 = vadd.f32 %v2052, %v2070
    %v2087 = vadd.f32 %v2053, %v2071
    %v2088 = vadd.f32 %v2054, %v2072
    %v2089 = vadd.f32 %v2055, %v2073
    %v2090 = vadd.f32 %v2056, %v2074
    %v2091 = vadd.f32 %v2057, %v2075
    %v2092 = vadd.f32 %v2058, %v2076
    %v2093 = vadd.f32 %v2059, %v2077
    %v2094 = vadd.f32 %v2060, %v2078
    %v2095 = vadd.f32 %v2061, %v2079
    %v2096 = vadd.f32 %v2062, %v2080
    %v2097 = vadd.f32 %v2063, %v2081
    %v2098 = vadd.f32 %v2064, %v2082
    %v2099 = vadd.f32 %v2065, %v2083
    %2100 = vst [vmem:[#allocation5] sm:$0xff] %v2084
    %2101 = vst [vmem:[#allocation5 + $0x8] sm:$0xff] %v2085
    %2102 = vst [vmem:[#allocation5 + $0x10] sm:$0xff] %v2086
    %2103 = vst [vmem:[#allocation5 + $0x18] sm:$0xff] %v2087
    %2104 = vst [vmem:[#allocation5 + $0x20] sm:$0xff] %v2088
    %2105 = vst [vmem:[#allocation5 + $0x28] sm:$0xff] %v2089
    %2106 = vst [vmem:[#allocation5 + $0x30] sm:$0xff] %v2090
    %2107 = vst [vmem:[#allocation5 + $0x38] sm:$0xff] %v2091
    %2108 = vst [vmem:[#allocation5 + $0x40] sm:$0xff] %v2092
    %2109 = vst [vmem:[#allocation5 + $0x48] sm:$0xff] %v2093
    %2110 = vst [vmem:[#allocation5 + $0x50] sm:$0xff] %v2094
    %2111 = vst [vmem:[#allocation5 + $0x58] sm:$0xff] %v2095
    %2112 = vst [vmem:[#allocation5 + $0x60] sm:$0xff] %v2096
    %2113 = vst [vmem:[#allocation5 + $0x68] sm:$0xff] %v2097
    %2114 = vst [vmem:[#allocation5 + $0x70] sm:$0xff] %v2098
    %2115 = vst [vmem:[#allocation5 + $0x78] sm:$0xff] %v2099
    %v2116 = vld [vmem:[#allocation5] sm:$0xff]
    %v2117 = vld [vmem:[#allocation5 + $0x8] sm:$0xff]
    %v2118 = vld [vmem:[#allocation5 + $0x10] sm:$0xff]
    %v2119 = vld [vmem:[#allocation5 + $0x18] sm:$0xff]
    %v2120 = vld [vmem:[#allocation5 + $0x20] sm:$0xff]
    %v2121 = vld [vmem:[#allocation5 + $0x28] sm:$0xff]
    %v2122 = vld [vmem:[#allocation5 + $0x30] sm:$0xff]
    %v2123 = vld [vmem:[#allocation5 + $0x38] sm:$0xff]
    %v2124 = vld [vmem:[#allocation5 + $0x40] sm:$0xff]
    %v2125 = vld [vmem:[#allocation5 + $0x48] sm:$0xff]
    %v2126 = vld [vmem:[#allocation5 + $0x50] sm:$0xff]
    %v2127 = vld [vmem:[#allocation5 + $0x58] sm:$0xff]
    %v2128 = vld [vmem:[#allocation5 + $0x60] sm:$0xff]
    %v2129 = vld [vmem:[#allocation5 + $0x68] sm:$0xff]
    %v2130 = vld [vmem:[#allocation5 + $0x70] sm:$0xff]
    %v2131 = vld [vmem:[#allocation5 + $0x78] sm:$0xff]
    %v2132 = vld [vmem:[%s0] sm:$0xf]
    %v2133 = vld [vmem:[%s0 + $0x4] sm:$0xf]
    %v2134 = vld [vmem:[%s0 + $0x8] sm:$0xf]
    %v2135 = vld [vmem:[%s0 + $0xc] sm:$0xf]
    %v2136 = vld [vmem:[%s0 + $0x10] sm:$0xf]
    %v2137 = vld [vmem:[%s0 + $0x14] sm:$0xf]
    %v2138 = vld [vmem:[%s0 + $0x18] sm:$0xf]
    %v2139 = vld [vmem:[%s0 + $0x1c] sm:$0xf]
    %v2140 = vld [vmem:[%s0 + $0x20] sm:$0xf]
    %v2141 = vld [vmem:[%s0 + $0x24] sm:$0xf]
    %v2142 = vld [vmem:[%s0 + $0x28] sm:$0xf]
    %v2143 = vld [vmem:[%s0 + $0x2c] sm:$0xf]
    %v2144 = vld [vmem:[%s0 + $0x30] sm:$0xf]
    %v2145 = vld [vmem:[%s0 + $0x34] sm:$0xf]
    %v2146 = vld [vmem:[%s0 + $0x38] sm:$0xf]
    %v2147 = vld [vmem:[%s0 + $0x3c] sm:$0xf]
    %v2148 = vpack.c.bf16 %v2117, %v2116
    %v2149 = vpack.c.bf16 %v2119, %v2118
    %v2150 = vpack.c.bf16 %v2121, %v2120
    %v2151 = vpack.c.bf16 %v2123, %v2122
    %v2152 = vpack.c.bf16 %v2125, %v2124
    %v2153 = vpack.c.bf16 %v2127, %v2126
    %v2154 = vpack.c.bf16 %v2129, %v2128
    %v2155 = vpack.c.bf16 %v2131, %v2130
    %v2172 = vunpack.c.l.b16 %v2132
    %v2173 = vunpack.c.l.b16 %v2133
    %v2174 = vunpack.c.l.b16 %v2134
    %v2175 = vunpack.c.l.b16 %v2135
    %v2176 = vunpack.c.l.b16 %v2136
    %v2177 = vunpack.c.l.b16 %v2137
    %v2178 = vunpack.c.l.b16 %v2138
    %v2179 = vunpack.c.l.b16 %v2139
    %v2180 = vunpack.c.l.b16 %v2140
    %v2181 = vunpack.c.l.b16 %v2141
    %v2182 = vunpack.c.l.b16 %v2142
    %v2183 = vunpack.c.l.b16 %v2143
    %v2184 = vunpack.c.l.b16 %v2144
    %v2185 = vunpack.c.l.b16 %v2145
    %v2186 = vunpack.c.l.b16 %v2146
    %v2187 = vunpack.c.l.b16 %v2147
    %v2188 = vpack.c.b16 %v2173, %v2172
    %v2189 = vpack.c.b16 %v2175, %v2174
    %v2190 = vpack.c.b16 %v2177, %v2176
    %v2191 = vpack.c.b16 %v2179, %v2178
    %v2192 = vpack.c.b16 %v2181, %v2180
    %v2193 = vpack.c.b16 %v2183, %v2182
    %v2194 = vpack.c.b16 %v2185, %v2184
    %v2195 = vpack.c.b16 %v2187, %v2186
    %2204 = vmatprep.subr.bf16.mxu0 0
    %2205 = vmatpush1.bf16.msra.mxu0 %v2148
    %2206 = vmatprep.subr.bf16.mxu0 0
    %2207 = vmatpush1.bf16.msra.mxu0 %v2149
    %2208 = vmatprep.subr.bf16.mxu0 0
    %2209 = vmatpush1.bf16.msra.mxu0 %v2150
    %2210 = vmatprep.subr.bf16.mxu0 0
    %2211 = vmatpush1.bf16.msra.mxu0 %v2151
    %2212 = vmatprep.subr.bf16.mxu0 0
    %2213 = vmatpush1.bf16.msra.mxu0 %v2152
    %2214 = vmatprep.subr.bf16.mxu0 0
    %2215 = vmatpush1.bf16.msra.mxu0 %v2153
    %2216 = vmatprep.subr.bf16.mxu0 0
    %2217 = vmatpush1.bf16.msra.mxu0 %v2154
    %2218 = vmatprep.subr.bf16.mxu0 0
    %2219 = vmatpush1.bf16.msra.mxu0 %v2155
    %2220 = vmatprep.subr.bf16.mxu0 0
    %2221 = vmatpush1.bf16.msra.mxu0 0
    %2222 = vmatprep.subr.bf16.mxu0 0
    %2223 = vmatpush1.bf16.msra.mxu0 0
    %2224 = vmatprep.subr.bf16.mxu0 0
    %2225 = vmatpush1.bf16.msra.mxu0 0
    %2226 = vmatprep.subr.bf16.mxu0 0
    %2227 = vmatpush1.bf16.msra.mxu0 0
    %2228 = vmatprep.subr.bf16.mxu0 0
    %2229 = vmatpush1.bf16.msra.mxu0 0
    %2230 = vmatprep.subr.bf16.mxu0 0
    %2231 = vmatpush1.bf16.msra.mxu0 0
    %2232 = vmatprep.subr.bf16.mxu0 0
    %2233 = vmatpush1.bf16.msra.mxu0 0
    %2234 = vmatprep.subr.bf16.mxu0 0
    %2235 = vmatpush1.bf16.msra.mxu0 0
    %2236 = vmatprep.mubr.bf16.mxu0 0
    %2237 = vmatmul.mubr.bf16.gmra.mrb[0].mxu0 %v2188
    %v2238 = vpop.f32.mrb[0].mxu0
    %v2239 = vadd.f32 0.0, %v2238
    %v2240 = vpop.f32.mrb[0].mxu0
    %v2241 = vpop.f32.mrb[0].mxu0
    %v2242 = vadd.f32 0.0, %v2241
    %v2243 = vpop.f32.mrb[0].mxu0
    %2244 = vmatprep.mubr.bf16.mxu0 0
    %2245 = vmatmul.mubr.bf16.gmra.mrb[0].mxu0 %v2189
    %v2246 = vpop.f32.mrb[0].mxu0
    %v2247 = vadd.f32 0.0, %v2246
    %v2248 = vpop.f32.mrb[0].mxu0
    %v2249 = vpop.f32.mrb[0].mxu0
    %v2250 = vadd.f32 0.0, %v2249
    %v2251 = vpop.f32.mrb[0].mxu0
    %2252 = vmatprep.mubr.bf16.mxu0 0
    %2253 = vmatmul.mubr.bf16.gmra.mrb[0].mxu0 %v2190
    %v2254 = vpop.f32.mrb[0].mxu0
    %v2255 = vadd.f32 0.0, %v2254
    %v2256 = vpop.f32.mrb[0].mxu0
    %v2257 = vpop.f32.mrb[0].mxu0
    %v2258 = vadd.f32 0.0, %v2257
    %v2259 = vpop.f32.mrb[0].mxu0
    %2260 = vmatprep.mubr.bf16.mxu0 0
    %2261 = vmatmul.mubr.bf16.gmra.mrb[0].mxu0 %v2191
    %v2262 = vpop.f32.mrb[0].mxu0
    %v2263 = vadd.f32 0.0, %v2262
    %v2264 = vpop.f32.mrb[0].mxu0
    %v2265 = vpop.f32.mrb[0].mxu0
    %v2266 = vadd.f32 0.0, %v2265
    %v2267 = vpop.f32.mrb[0].mxu0
    %2268 = vmatprep.mubr.bf16.mxu0 0
    %2269 = vmatmul.mubr.bf16.gmra.mrb[0].mxu0 %v2192
    %v2270 = vpop.f32.mrb[0].mxu0
    %v2271 = vadd.f32 0.0, %v2270
    %v2272 = vpop.f32.mrb[0].mxu0
    %v2273 = vpop.f32.mrb[0].mxu0
    %v2274 = vadd.f32 0.0, %v2273
    %v2275 = vpop.f32.mrb[0].mxu0
    %2276 = vmatprep.mubr.bf16.mxu0 0
    %2277 = vmatmul.mubr.bf16.gmra.mrb[0].mxu0 %v2193
    %v2278 = vpop.f32.mrb[0].mxu0
    %v2279 = vadd.f32 0.0, %v2278
    %v2280 = vpop.f32.mrb[0].mxu0
    %v2281 = vpop.f32.mrb[0].mxu0
    %v2282 = vadd.f32 0.0, %v2281
    %v2283 = vpop.f32.mrb[0].mxu0
    %2284 = vmatprep.mubr.bf16.mxu0 0
    %2285 = vmatmul.mubr.bf16.gmra.mrb[0].mxu0 %v2194
    %v2286 = vpop.f32.mrb[0].mxu0
    %v2287 = vadd.f32 0.0, %v2286
    %v2288 = vpop.f32.mrb[0].mxu0
    %v2289 = vpop.f32.mrb[0].mxu0
    %v2290 = vadd.f32 0.0, %v2289
    %v2291 = vpop.f32.mrb[0].mxu0
    %2292 = vmatprep.mubr.bf16.mxu0 0
    %2293 = vmatmul.mubr.bf16.gmra.mrb[0].mxu0 %v2195
    %v2294 = vpop.f32.mrb[0].mxu0
    %v2295 = vadd.f32 0.0, %v2294
    %v2296 = vpop.f32.mrb[0].mxu0
    %v2297 = vpop.f32.mrb[0].mxu0
    %v2298 = vadd.f32 0.0, %v2297
    %v2299 = vpop.f32.mrb[0].mxu0
    %2300 = vdwg.mxu0
    %2301 = vst [vmem:[#allocation2] sm:$0xff] %v2239
    %2302 = vst [vmem:[#allocation2 + $0x10] sm:$0xff] %v2242
    %2303 = vst [vmem:[#allocation2 + $0x20] sm:$0xff] %v2247
    %2304 = vst [vmem:[#allocation2 + $0x30] sm:$0xff] %v2250
    %2305 = vst [vmem:[#allocation2 + $0x40] sm:$0xff] %v2255
    %2306 = vst [vmem:[#allocation2 + $0x50] sm:$0xff] %v2258
    %2307 = vst [vmem:[#allocation2 + $0x60] sm:$0xff] %v2263
    %2308 = vst [vmem:[#allocation2 + $0x70] sm:$0xff] %v2266
    %2309 = vst [vmem:[#allocation2 + $0x80] sm:$0xff] %v2271
    %2310 = vst [vmem:[#allocation2 + $0x90] sm:$0xff] %v2274
    %2311 = vst [vmem:[#allocation2 + $0xa0] sm:$0xff] %v2279
    %2312 = vst [vmem:[#allocation2 + $0xb0] sm:$0xff] %v2282
    %2313 = vst [vmem:[#allocation2 + $0xc0] sm:$0xff] %v2287
    %2314 = vst [vmem:[#allocation2 + $0xd0] sm:$0xff] %v2290
    %2315 = vst [vmem:[#allocation2 + $0xe0] sm:$0xff] %v2295
    %2316 = vst [vmem:[#allocation2 + $0xf0] sm:$0xff] %v2298
    %v2317 = vld [vmem:[#allocation2] sm:$0xff]
    %v2318 = vld [vmem:[#allocation2 + $0x8] sm:$0xff]
    %v2319 = vld [vmem:[#allocation2 + $0x10] sm:$0xff]
    %v2320 = vld [vmem:[#allocation2 + $0x18] sm:$0xff]
    %v2321 = vld [vmem:[#allocation2 + $0x20] sm:$0xff]
    %v2322 = vld [vmem:[#allocation2 + $0x28] sm:$0xff]
    %v2323 = vld [vmem:[#allocation2 + $0x30] sm:$0xff]
    %v2324 = vld [vmem:[#allocation2 + $0x38] sm:$0xff]
    %v2325 = vld [vmem:[#allocation2 + $0x40] sm:$0xff]
    %v2326 = vld [vmem:[#allocation2 + $0x48] sm:$0xff]
    %v2327 = vld [vmem:[#allocation2 + $0x50] sm:$0xff]
    %v2328 = vld [vmem:[#allocation2 + $0x58] sm:$0xff]
    %v2329 = vld [vmem:[#allocation2 + $0x60] sm:$0xff]
    %v2330 = vld [vmem:[#allocation2 + $0x68] sm:$0xff]
    %v2331 = vld [vmem:[#allocation2 + $0x70] sm:$0xff]
    %v2332 = vld [vmem:[#allocation2 + $0x78] sm:$0xff]
    %v2333 = vld [vmem:[#allocation2 + $0x80] sm:$0xff]
    %v2334 = vld [vmem:[#allocation2 + $0x88] sm:$0xff]
    %v2335 = vld [vmem:[#allocation2 + $0x90] sm:$0xff]
    %v2336 = vld [vmem:[#allocation2 + $0x98] sm:$0xff]
    %v2337 = vld [vmem:[#allocation2 + $0xa0] sm:$0xff]
    %v2338 = vld [vmem:[#allocation2 + $0xa8] sm:$0xff]
    %v2339 = vld [vmem:[#allocation2 + $0xb0] sm:$0xff]
    %v2340 = vld [vmem:[#allocation2 + $0xb8] sm:$0xff]
    %v2341 = vld [vmem:[#allocation2 + $0xc0] sm:$0xff]
    %v2342 = vld [vmem:[#allocation2 + $0xc8] sm:$0xff]
    %v2343 = vld [vmem:[#allocation2 + $0xd0] sm:$0xff]
    %v2344 = vld [vmem:[#allocation2 + $0xd8] sm:$0xff]
    %v2345 = vld [vmem:[#allocation2 + $0xe0] sm:$0xff]
    %v2346 = vld [vmem:[#allocation2 + $0xe8] sm:$0xff]
    %v2347 = vld [vmem:[#allocation2 + $0xf0] sm:$0xff]
    %v2348 = vld [vmem:[#allocation2 + $0xf8] sm:$0xff]
    %s2349 = scalar_lea.vmem %s4, 768
    %v2350 = vld [vmem:[%s2349] sm:$0xff]
    %v2351 = vld [vmem:[%s2349 + $0x8] sm:$0xff]
    %v2352 = vld [vmem:[%s2349 + $0x10] sm:$0xff]
    %v2353 = vld [vmem:[%s2349 + $0x18] sm:$0xff]
    %v2354 = vld [vmem:[%s2349 + $0x20] sm:$0xff]
    %v2355 = vld [vmem:[%s2349 + $0x28] sm:$0xff]
    %v2356 = vld [vmem:[%s2349 + $0x30] sm:$0xff]
    %v2357 = vld [vmem:[%s2349 + $0x38] sm:$0xff]
    %v2358 = vld [vmem:[%s2349 + $0x40] sm:$0xff]
    %v2359 = vld [vmem:[%s2349 + $0x48] sm:$0xff]
    %v2360 = vld [vmem:[%s2349 + $0x50] sm:$0xff]
    %v2361 = vld [vmem:[%s2349 + $0x58] sm:$0xff]
    %v2362 = vld [vmem:[%s2349 + $0x60] sm:$0xff]
    %v2363 = vld [vmem:[%s2349 + $0x68] sm:$0xff]
    %v2364 = vld [vmem:[%s2349 + $0x70] sm:$0xff]
    %v2365 = vld [vmem:[%s2349 + $0x78] sm:$0xff]
    %v2366 = vld [vmem:[%s2349 + $0x80] sm:$0xff]
    %v2367 = vld [vmem:[%s2349 + $0x88] sm:$0xff]
    %v2368 = vld [vmem:[%s2349 + $0x90] sm:$0xff]
    %v2369 = vld [vmem:[%s2349 + $0x98] sm:$0xff]
    %v2370 = vld [vmem:[%s2349 + $0xa0] sm:$0xff]
    %v2371 = vld [vmem:[%s2349 + $0xa8] sm:$0xff]
    %v2372 = vld [vmem:[%s2349 + $0xb0] sm:$0xff]
    %v2373 = vld [vmem:[%s2349 + $0xb8] sm:$0xff]
    %v2374 = vld [vmem:[%s2349 + $0xc0] sm:$0xff]
    %v2375 = vld [vmem:[%s2349 + $0xc8] sm:$0xff]
    %v2376 = vld [vmem:[%s2349 + $0xd0] sm:$0xff]
    %v2377 = vld [vmem:[%s2349 + $0xd8] sm:$0xff]
    %v2378 = vld [vmem:[%s2349 + $0xe0] sm:$0xff]
    %v2379 = vld [vmem:[%s2349 + $0xe8] sm:$0xff]
    %v2380 = vld [vmem:[%s2349 + $0xf0] sm:$0xff]
    %v2381 = vld [vmem:[%s2349 + $0xf8] sm:$0xff]
    %s2382 = scalar_lea.vmem %s5, 3
    %v2383 = vld [vmem:[%s2382] sm:$0x1]
    %v2385 = vlaneseq
    %v2386 = vshrl.u32 %v2385, 7
    %v2387 = vsub.s32 0, %v2386
    %v2388 = vrot.slane %v2383, %v2387
    %2390 = vmatprep.subr.mxu0 0.0
    %2391 = vmatpush1.msra.mxu0 %v2350
    %2392 = vmatprep.subr.mxu0 0.0
    %2393 = vmatpush1.msra.mxu0 %v2351
    %2394 = vmatprep.subr.mxu0 0.0
    %2395 = vmatpush1.msra.mxu0 %v2352
    %2396 = vmatprep.subr.mxu0 0.0
    %2397 = vmatpush1.msra.mxu0 %v2353
    %2398 = vmatprep.subr.mxu0 0.0
    %2399 = vmatpush1.msra.mxu0 %v2354
    %2400 = vmatprep.subr.mxu0 0.0
    %2401 = vmatpush1.msra.mxu0 %v2355
    %2402 = vmatprep.subr.mxu0 0.0
    %2403 = vmatpush1.msra.mxu0 %v2356
    %2404 = vmatprep.subr.mxu0 0.0
    %2405 = vmatpush1.msra.mxu0 %v2357
    %2406 = vmatprep.subr.mxu0 0.0
    %2407 = vmatpush1.msra.mxu0 %v2358
    %2408 = vmatprep.subr.mxu0 0.0
    %2409 = vmatpush1.msra.mxu0 %v2359
    %2410 = vmatprep.subr.mxu0 0.0
    %2411 = vmatpush1.msra.mxu0 %v2360
    %2412 = vmatprep.subr.mxu0 0.0
    %2413 = vmatpush1.msra.mxu0 %v2361
    %2414 = vmatprep.subr.mxu0 0.0
    %2415 = vmatpush1.msra.mxu0 %v2362
    %2416 = vmatprep.subr.mxu0 0.0
    %2417 = vmatpush1.msra.mxu0 %v2363
    %2418 = vmatprep.subr.mxu0 0.0
    %2419 = vmatpush1.msra.mxu0 %v2364
    %2420 = vmatprep.subr.mxu0 0.0
    %2421 = vmatpush1.msra.mxu0 %v2365
    %2422 = vmatprep.subr.mxu0 0.0
    %2423 = vmatpush1.msra.mxu0 %v2366
    %2424 = vmatprep.subr.mxu0 0.0
    %2425 = vmatpush1.msra.mxu0 %v2367
    %2426 = vmatprep.subr.mxu0 0.0
    %2427 = vmatpush1.msra.mxu0 %v2368
    %2428 = vmatprep.subr.mxu0 0.0
    %2429 = vmatpush1.msra.mxu0 %v2369
    %2430 = vmatprep.subr.mxu0 0.0
    %2431 = vmatpush1.msra.mxu0 %v2370
    %2432 = vmatprep.subr.mxu0 0.0
    %2433 = vmatpush1.msra.mxu0 %v2371
    %2434 = vmatprep.subr.mxu0 0.0
    %2435 = vmatpush1.msra.mxu0 %v2372
    %2436 = vmatprep.subr.mxu0 0.0
    %2437 = vmatpush1.msra.mxu0 %v2373
    %2438 = vmatprep.subr.mxu0 0.0
    %2439 = vmatpush1.msra.mxu0 %v2374
    %2440 = vmatprep.subr.mxu0 0.0
    %2441 = vmatpush1.msra.mxu0 %v2375
    %2442 = vmatprep.subr.mxu0 0.0
    %2443 = vmatpush1.msra.mxu0 %v2376
    %2444 = vmatprep.subr.mxu0 0.0
    %2445 = vmatpush1.msra.mxu0 %v2377
    %2446 = vmatprep.subr.mxu0 0.0
    %2447 = vmatpush1.msra.mxu0 %v2378
    %2448 = vmatprep.subr.mxu0 0.0
    %2449 = vmatpush1.msra.mxu0 %v2379
    %2450 = vmatprep.subr.mxu0 0.0
    %2451 = vmatpush1.msra.mxu0 %v2380
    %2452 = vmatprep.subr.mxu0 0.0
    %2453 = vmatpush1.msra.mxu0 %v2381
    %2454 = vmatprep.mubr.f32.mxu0 %v2318
    %2455 = vmatmul.mubr.f32.gmra.mrb[0].mxu0 %v2317
    %v2456 = vpop.f32.mrb[0].mxu0
    %v2457 = vadd.f32 %v2388, %v2456
    %v2458 = vpop.f32.mrb[0].mxu0
    %2459 = vmatprep.mubr.f32.mxu0 %v2320
    %2460 = vmatmul.mubr.f32.gmra.mrb[0].mxu0 %v2319
    %v2461 = vpop.f32.mrb[0].mxu0
    %v2462 = vadd.f32 %v2388, %v2461
    %v2463 = vpop.f32.mrb[0].mxu0
    %2464 = vmatprep.mubr.f32.mxu0 %v2322
    %2465 = vmatmul.mubr.f32.gmra.mrb[0].mxu0 %v2321
    %v2466 = vpop.f32.mrb[0].mxu0
    %v2467 = vadd.f32 %v2388, %v2466
    %v2468 = vpop.f32.mrb[0].mxu0
    %2469 = vmatprep.mubr.f32.mxu0 %v2324
    %2470 = vmatmul.mubr.f32.gmra.mrb[0].mxu0 %v2323
    %v2471 = vpop.f32.mrb[0].mxu0
    %v2472 = vadd.f32 %v2388, %v2471
    %v2473 = vpop.f32.mrb[0].mxu0
    %2474 = vmatprep.mubr.f32.mxu0 %v2326
    %2475 = vmatmul.mubr.f32.gmra.mrb[0].mxu0 %v2325
    %v2476 = vpop.f32.mrb[0].mxu0
    %v2477 = vadd.f32 %v2388, %v2476
    %v2478 = vpop.f32.mrb[0].mxu0
    %2479 = vmatprep.mubr.f32.mxu0 %v2328
    %2480 = vmatmul.mubr.f32.gmra.mrb[0].mxu0 %v2327
    %v2481 = vpop.f32.mrb[0].mxu0
    %v2482 = vadd.f32 %v2388, %v2481
    %v2483 = vpop.f32.mrb[0].mxu0
    %2484 = vmatprep.mubr.f32.mxu0 %v2330
    %2485 = vmatmul.mubr.f32.gmra.mrb[0].mxu0 %v2329
    %v2486 = vpop.f32.mrb[0].mxu0
    %v2487 = vadd.f32 %v2388, %v2486
    %v2488 = vpop.f32.mrb[0].mxu0
    %2489 = vmatprep.mubr.f32.mxu0 %v2332
    %2490 = vmatmul.mubr.f32.gmra.mrb[0].mxu0 %v2331
    %v2491 = vpop.f32.mrb[0].mxu0
    %v2492 = vadd.f32 %v2388, %v2491
    %v2493 = vpop.f32.mrb[0].mxu0
    %2494 = vmatprep.mubr.f32.mxu0 %v2334
    %2495 = vmatmul.mubr.f32.gmra.mrb[0].mxu0 %v2333
    %v2496 = vpop.f32.mrb[0].mxu0
    %v2497 = vadd.f32 %v2388, %v2496
    %v2498 = vpop.f32.mrb[0].mxu0
    %2499 = vmatprep.mubr.f32.mxu0 %v2336
    %2500 = vmatmul.mubr.f32.gmra.mrb[0].mxu0 %v2335
    %v2501 = vpop.f32.mrb[0].mxu0
    %v2502 = vadd.f32 %v2388, %v2501
    %v2503 = vpop.f32.mrb[0].mxu0
    %2504 = vmatprep.mubr.f32.mxu0 %v2338
    %2505 = vmatmul.mubr.f32.gmra.mrb[0].mxu0 %v2337
    %v2506 = vpop.f32.mrb[0].mxu0
    %v2507 = vadd.f32 %v2388, %v2506
    %v2508 = vpop.f32.mrb[0].mxu0
    %2509 = vmatprep.mubr.f32.mxu0 %v2340
    %2510 = vmatmul.mubr.f32.gmra.mrb[0].mxu0 %v2339
    %v2511 = vpop.f32.mrb[0].mxu0
    %v2512 = vadd.f32 %v2388, %v2511
    %v2513 = vpop.f32.mrb[0].mxu0
    %2514 = vmatprep.mubr.f32.mxu0 %v2342
    %2515 = vmatmul.mubr.f32.gmra.mrb[0].mxu0 %v2341
    %v2516 = vpop.f32.mrb[0].mxu0
    %v2517 = vadd.f32 %v2388, %v2516
    %v2518 = vpop.f32.mrb[0].mxu0
    %2519 = vmatprep.mubr.f32.mxu0 %v2344
    %2520 = vmatmul.mubr.f32.gmra.mrb[0].mxu0 %v2343
    %v2521 = vpop.f32.mrb[0].mxu0
    %v2522 = vadd.f32 %v2388, %v2521
    %v2523 = vpop.f32.mrb[0].mxu0
    %2524 = vmatprep.mubr.f32.mxu0 %v2346
    %2525 = vmatmul.mubr.f32.gmra.mrb[0].mxu0 %v2345
    %v2526 = vpop.f32.mrb[0].mxu0
    %v2527 = vadd.f32 %v2388, %v2526
    %v2528 = vpop.f32.mrb[0].mxu0
    %2529 = vmatprep.mubr.f32.mxu0 %v2348
    %2530 = vmatmul.mubr.f32.gmra.mrb[0].mxu0 %v2347
    %v2531 = vpop.f32.mrb[0].mxu0
    %v2532 = vadd.f32 %v2388, %v2531
    %v2533 = vpop.f32.mrb[0].mxu0
    %2534 = vdwg.mxu0
    %v2535 = vld [vmem:[%s1] sm:$0xf]
    %v2536 = vld [vmem:[%s1 + $0x4] sm:$0xf]
    %v2537 = vld [vmem:[%s1 + $0x8] sm:$0xf]
    %v2538 = vld [vmem:[%s1 + $0xc] sm:$0xf]
    %v2539 = vld [vmem:[%s1 + $0x10] sm:$0xf]
    %v2540 = vld [vmem:[%s1 + $0x14] sm:$0xf]
    %v2541 = vld [vmem:[%s1 + $0x18] sm:$0xf]
    %v2542 = vld [vmem:[%s1 + $0x1c] sm:$0xf]
    %v2543 = vld [vmem:[%s1 + $0x20] sm:$0xf]
    %v2544 = vld [vmem:[%s1 + $0x24] sm:$0xf]
    %v2545 = vld [vmem:[%s1 + $0x28] sm:$0xf]
    %v2546 = vld [vmem:[%s1 + $0x2c] sm:$0xf]
    %v2547 = vld [vmem:[%s1 + $0x30] sm:$0xf]
    %v2548 = vld [vmem:[%s1 + $0x34] sm:$0xf]
    %v2549 = vld [vmem:[%s1 + $0x38] sm:$0xf]
    %v2550 = vld [vmem:[%s1 + $0x3c] sm:$0xf]
    %v2551 = vpack.c.bf16 %v2462, %v2457
    %v2552 = vpack.c.bf16 %v2472, %v2467
    %v2553 = vpack.c.bf16 %v2482, %v2477
    %v2554 = vpack.c.bf16 %v2492, %v2487
    %v2555 = vpack.c.bf16 %v2502, %v2497
    %v2556 = vpack.c.bf16 %v2512, %v2507
    %v2557 = vpack.c.bf16 %v2522, %v2517
    %v2558 = vpack.c.bf16 %v2532, %v2527
    %v2575 = vunpack.c.l.b16 %v2535
    %v2576 = vunpack.c.l.b16 %v2536
    %v2577 = vunpack.c.l.b16 %v2537
    %v2578 = vunpack.c.l.b16 %v2538
    %v2579 = vunpack.c.l.b16 %v2539
    %v2580 = vunpack.c.l.b16 %v2540
    %v2581 = vunpack.c.l.b16 %v2541
    %v2582 = vunpack.c.l.b16 %v2542
    %v2583 = vunpack.c.l.b16 %v2543
    %v2584 = vunpack.c.l.b16 %v2544
    %v2585 = vunpack.c.l.b16 %v2545
    %v2586 = vunpack.c.l.b16 %v2546
    %v2587 = vunpack.c.l.b16 %v2547
    %v2588 = vunpack.c.l.b16 %v2548
    %v2589 = vunpack.c.l.b16 %v2549
    %v2590 = vunpack.c.l.b16 %v2550
    %v2591 = vpack.c.b16 %v2576, %v2575
    %v2592 = vpack.c.b16 %v2578, %v2577
    %v2593 = vpack.c.b16 %v2580, %v2579
    %v2594 = vpack.c.b16 %v2582, %v2581
    %v2595 = vpack.c.b16 %v2584, %v2583
    %v2596 = vpack.c.b16 %v2586, %v2585
    %v2597 = vpack.c.b16 %v2588, %v2587
    %v2598 = vpack.c.b16 %v2590, %v2589
    %2607 = vmatprep.subr.bf16.mxu0 0
    %2608 = vmatpush1.bf16.msra.mxu0 %v2551
    %2609 = vmatprep.subr.bf16.mxu0 0
    %2610 = vmatpush1.bf16.msra.mxu0 %v2552
    %2611 = vmatprep.subr.bf16.mxu0 0
    %2612 = vmatpush1.bf16.msra.mxu0 %v2553
    %2613 = vmatprep.subr.bf16.mxu0 0
    %2614 = vmatpush1.bf16.msra.mxu0 %v2554
    %2615 = vmatprep.subr.bf16.mxu0 0
    %2616 = vmatpush1.bf16.msra.mxu0 %v2555
    %2617 = vmatprep.subr.bf16.mxu0 0
    %2618 = vmatpush1.bf16.msra.mxu0 %v2556
    %2619 = vmatprep.subr.bf16.mxu0 0
    %2620 = vmatpush1.bf16.msra.mxu0 %v2557
    %2621 = vmatprep.subr.bf16.mxu0 0
    %2622 = vmatpush1.bf16.msra.mxu0 %v2558
    %2623 = vmatprep.subr.bf16.mxu0 0
    %2624 = vmatpush1.bf16.msra.mxu0 0
    %2625 = vmatprep.subr.bf16.mxu0 0
    %2626 = vmatpush1.bf16.msra.mxu0 0
    %2627 = vmatprep.subr.bf16.mxu0 0
    %2628 = vmatpush1.bf16.msra.mxu0 0
    %2629 = vmatprep.subr.bf16.mxu0 0
    %2630 = vmatpush1.bf16.msra.mxu0 0
    %2631 = vmatprep.subr.bf16.mxu0 0
    %2632 = vmatpush1.bf16.msra.mxu0 0
    %2633 = vmatprep.subr.bf16.mxu0 0
    %2634 = vmatpush1.bf16.msra.mxu0 0
    %2635 = vmatprep.subr.bf16.mxu0 0
    %2636 = vmatpush1.bf16.msra.mxu0 0
    %2637 = vmatprep.subr.bf16.mxu0 0
    %2638 = vmatpush1.bf16.msra.mxu0 0
    %2639 = vmatprep.mubr.bf16.mxu0 0
    %2640 = vmatmul.mubr.bf16.gmra.mrb[0].mxu0 %v2591
    %v2641 = vpop.f32.mrb[0].mxu0
    %v2642 = vadd.f32 0.0, %v2641
    %v2643 = vpop.f32.mrb[0].mxu0
    %v2644 = vpop.f32.mrb[0].mxu0
    %v2645 = vadd.f32 0.0, %v2644
    %v2646 = vpop.f32.mrb[0].mxu0
    %2647 = vmatprep.mubr.bf16.mxu0 0
    %2648 = vmatmul.mubr.bf16.gmra.mrb[0].mxu0 %v2592
    %v2649 = vpop.f32.mrb[0].mxu0
    %v2650 = vadd.f32 0.0, %v2649
    %v2651 = vpop.f32.mrb[0].mxu0
    %v2652 = vpop.f32.mrb[0].mxu0
    %v2653 = vadd.f32 0.0, %v2652
    %v2654 = vpop.f32.mrb[0].mxu0
    %2655 = vmatprep.mubr.bf16.mxu0 0
    %2656 = vmatmul.mubr.bf16.gmra.mrb[0].mxu0 %v2593
    %v2657 = vpop.f32.mrb[0].mxu0
    %v2658 = vadd.f32 0.0, %v2657
    %v2659 = vpop.f32.mrb[0].mxu0
    %v2660 = vpop.f32.mrb[0].mxu0
    %v2661 = vadd.f32 0.0, %v2660
    %v2662 = vpop.f32.mrb[0].mxu0
    %2663 = vmatprep.mubr.bf16.mxu0 0
    %2664 = vmatmul.mubr.bf16.gmra.mrb[0].mxu0 %v2594
    %v2665 = vpop.f32.mrb[0].mxu0
    %v2666 = vadd.f32 0.0, %v2665
    %v2667 = vpop.f32.mrb[0].mxu0
    %v2668 = vpop.f32.mrb[0].mxu0
    %v2669 = vadd.f32 0.0, %v2668
    %v2670 = vpop.f32.mrb[0].mxu0
    %2671 = vmatprep.mubr.bf16.mxu0 0
    %2672 = vmatmul.mubr.bf16.gmra.mrb[0].mxu0 %v2595
    %v2673 = vpop.f32.mrb[0].mxu0
    %v2674 = vadd.f32 0.0, %v2673
    %v2675 = vpop.f32.mrb[0].mxu0
    %v2676 = vpop.f32.mrb[0].mxu0
    %v2677 = vadd.f32 0.0, %v2676
    %v2678 = vpop.f32.mrb[0].mxu0
    %2679 = vmatprep.mubr.bf16.mxu0 0
    %2680 = vmatmul.mubr.bf16.gmra.mrb[0].mxu0 %v2596
    %v2681 = vpop.f32.mrb[0].mxu0
    %v2682 = vadd.f32 0.0, %v2681
    %v2683 = vpop.f32.mrb[0].mxu0
    %v2684 = vpop.f32.mrb[0].mxu0
    %v2685 = vadd.f32 0.0, %v2684
    %v2686 = vpop.f32.mrb[0].mxu0
    %2687 = vmatprep.mubr.bf16.mxu0 0
    %2688 = vmatmul.mubr.bf16.gmra.mrb[0].mxu0 %v2597
    %v2689 = vpop.f32.mrb[0].mxu0
    %v2690 = vadd.f32 0.0, %v2689
    %v2691 = vpop.f32.mrb[0].mxu0
    %v2692 = vpop.f32.mrb[0].mxu0
    %v2693 = vadd.f32 0.0, %v2692
    %v2694 = vpop.f32.mrb[0].mxu0
    %2695 = vmatprep.mubr.bf16.mxu0 0
    %2696 = vmatmul.mubr.bf16.gmra.mrb[0].mxu0 %v2598
    %v2697 = vpop.f32.mrb[0].mxu0
    %v2698 = vadd.f32 0.0, %v2697
    %v2699 = vpop.f32.mrb[0].mxu0
    %v2700 = vpop.f32.mrb[0].mxu0
    %v2701 = vadd.f32 0.0, %v2700
    %v2702 = vpop.f32.mrb[0].mxu0
    %2703 = vdwg.mxu0
    %v2704 = vmax.f32 %v2642, 0.0
    %v2705 = vmax.f32 %v2645, 0.0
    %v2706 = vmax.f32 %v2650, 0.0
    %v2707 = vmax.f32 %v2653, 0.0
    %v2708 = vmax.f32 %v2658, 0.0
    %v2709 = vmax.f32 %v2661, 0.0
    %v2710 = vmax.f32 %v2666, 0.0
    %v2711 = vmax.f32 %v2669, 0.0
    %v2712 = vmax.f32 %v2674, 0.0
    %v2713 = vmax.f32 %v2677, 0.0
    %v2714 = vmax.f32 %v2682, 0.0
    %v2715 = vmax.f32 %v2685, 0.0
    %v2716 = vmax.f32 %v2690, 0.0
    %v2717 = vmax.f32 %v2693, 0.0
    %v2718 = vmax.f32 %v2698, 0.0
    %v2719 = vmax.f32 %v2701, 0.0
    %s2720 = sld [smem:[#allocation7 + $0x5]]
    %v2721 = vld [vmem:[#allocation3] sm:$0xff]
    %v2722 = vld [vmem:[#allocation3 + $0x8] sm:$0xff]
    %v2723 = vld [vmem:[#allocation3 + $0x10] sm:$0xff]
    %v2724 = vld [vmem:[#allocation3 + $0x18] sm:$0xff]
    %v2725 = vld [vmem:[#allocation3 + $0x20] sm:$0xff]
    %v2726 = vld [vmem:[#allocation3 + $0x28] sm:$0xff]
    %v2727 = vld [vmem:[#allocation3 + $0x30] sm:$0xff]
    %v2728 = vld [vmem:[#allocation3 + $0x38] sm:$0xff]
    %v2729 = vld [vmem:[#allocation3 + $0x40] sm:$0xff]
    %v2730 = vld [vmem:[#allocation3 + $0x48] sm:$0xff]
    %v2731 = vld [vmem:[#allocation3 + $0x50] sm:$0xff]
    %v2732 = vld [vmem:[#allocation3 + $0x58] sm:$0xff]
    %v2733 = vld [vmem:[#allocation3 + $0x60] sm:$0xff]
    %v2734 = vld [vmem:[#allocation3 + $0x68] sm:$0xff]
    %v2735 = vld [vmem:[#allocation3 + $0x70] sm:$0xff]
    %v2736 = vld [vmem:[#allocation3 + $0x78] sm:$0xff]
    %v2737 = vstv %s2720
    %v2738 = vmul.f32 %v2737, %v2721
    %v2739 = vmul.f32 %v2737, %v2722
    %v2740 = vmul.f32 %v2737, %v2723
    %v2741 = vmul.f32 %v2737, %v2724
    %v2742 = vmul.f32 %v2737, %v2725
    %v2743 = vmul.f32 %v2737, %v2726
    %v2744 = vmul.f32 %v2737, %v2727
    %v2745 = vmul.f32 %v2737, %v2728
    %v2746 = vmul.f32 %v2737, %v2729
    %v2747 = vmul.f32 %v2737, %v2730
    %v2748 = vmul.f32 %v2737, %v2731
    %v2749 = vmul.f32 %v2737, %v2732
    %v2750 = vmul.f32 %v2737, %v2733
    %v2751 = vmul.f32 %v2737, %v2734
    %v2752 = vmul.f32 %v2737, %v2735
    %v2753 = vmul.f32 %v2737, %v2736
    %s2754 = sld [smem:[#allocation7 + $0x6]]
    %v2755 = vld [vmem:[#allocation4] sm:$0xff]
    %v2756 = vld [vmem:[#allocation4 + $0x8] sm:$0xff]
    %v2757 = vld [vmem:[#allocation4 + $0x10] sm:$0xff]
    %v2758 = vld [vmem:[#allocation4 + $0x18] sm:$0xff]
    %v2759 = vld [vmem:[#allocation4 + $0x20] sm:$0xff]
    %v2760 = vld [vmem:[#allocation4 + $0x28] sm:$0xff]
    %v2761 = vld [vmem:[#allocation4 + $0x30] sm:$0xff]
    %v2762 = vld [vmem:[#allocation4 + $0x38] sm:$0xff]
    %v2763 = vld [vmem:[#allocation4 + $0x40] sm:$0xff]
    %v2764 = vld [vmem:[#allocation4 + $0x48] sm:$0xff]
    %v2765 = vld [vmem:[#allocation4 + $0x50] sm:$0xff]
    %v2766 = vld [vmem:[#allocation4 + $0x58] sm:$0xff]
    %v2767 = vld [vmem:[#allocation4 + $0x60] sm:$0xff]
    %v2768 = vld [vmem:[#allocation4 + $0x68] sm:$0xff]
    %v2769 = vld [vmem:[#allocation4 + $0x70] sm:$0xff]
    %v2770 = vld [vmem:[#allocation4 + $0x78] sm:$0xff]
    %v2771 = vstv %s2754
    %v2772 = vmul.f32 %v2771, %v2755
    %v2773 = vmul.f32 %v2771, %v2756
    %v2774 = vmul.f32 %v2771, %v2757
    %v2775 = vmul.f32 %v2771, %v2758
    %v2776 = vmul.f32 %v2771, %v2759
    %v2777 = vmul.f32 %v2771, %v2760
    %v2778 = vmul.f32 %v2771, %v2761
    %v2779 = vmul.f32 %v2771, %v2762
    %v2780 = vmul.f32 %v2771, %v2763
    %v2781 = vmul.f32 %v2771, %v2764
    %v2782 = vmul.f32 %v2771, %v2765
    %v2783 = vmul.f32 %v2771, %v2766
    %v2784 = vmul.f32 %v2771, %v2767
    %v2785 = vmul.f32 %v2771, %v2768
    %v2786 = vmul.f32 %v2771, %v2769
    %v2787 = vmul.f32 %v2771, %v2770
    %v2788 = vadd.f32 %v2738, %v2772
    %v2789 = vadd.f32 %v2739, %v2773
    %v2790 = vadd.f32 %v2740, %v2774
    %v2791 = vadd.f32 %v2741, %v2775
    %v2792 = vadd.f32 %v2742, %v2776
    %v2793 = vadd.f32 %v2743, %v2777
    %v2794 = vadd.f32 %v2744, %v2778
    %v2795 = vadd.f32 %v2745, %v2779
    %v2796 = vadd.f32 %v2746, %v2780
    %v2797 = vadd.f32 %v2747, %v2781
    %v2798 = vadd.f32 %v2748, %v2782
    %v2799 = vadd.f32 %v2749, %v2783
    %v2800 = vadd.f32 %v2750, %v2784
    %v2801 = vadd.f32 %v2751, %v2785
    %v2802 = vadd.f32 %v2752, %v2786
    %v2803 = vadd.f32 %v2753, %v2787
    %s2804 = sld [smem:[#allocation7 + $0x7]]
    %v2805 = vld [vmem:[#allocation5] sm:$0xff]
    %v2806 = vld [vmem:[#allocation5 + $0x8] sm:$0xff]
    %v2807 = vld [vmem:[#allocation5 + $0x10] sm:$0xff]
    %v2808 = vld [vmem:[#allocation5 + $0x18] sm:$0xff]
    %v2809 = vld [vmem:[#allocation5 + $0x20] sm:$0xff]
    %v2810 = vld [vmem:[#allocation5 + $0x28] sm:$0xff]
    %v2811 = vld [vmem:[#allocation5 + $0x30] sm:$0xff]
    %v2812 = vld [vmem:[#allocation5 + $0x38] sm:$0xff]
    %v2813 = vld [vmem:[#allocation5 + $0x40] sm:$0xff]
    %v2814 = vld [vmem:[#allocation5 + $0x48] sm:$0xff]
    %v2815 = vld [vmem:[#allocation5 + $0x50] sm:$0xff]
    %v2816 = vld [vmem:[#allocation5 + $0x58] sm:$0xff]
    %v2817 = vld [vmem:[#allocation5 + $0x60] sm:$0xff]
    %v2818 = vld [vmem:[#allocation5 + $0x68] sm:$0xff]
    %v2819 = vld [vmem:[#allocation5 + $0x70] sm:$0xff]
    %v2820 = vld [vmem:[#allocation5 + $0x78] sm:$0xff]
    %v2821 = vstv %s2804
    %v2822 = vmul.f32 %v2821, %v2805
    %v2823 = vmul.f32 %v2821, %v2806
    %v2824 = vmul.f32 %v2821, %v2807
    %v2825 = vmul.f32 %v2821, %v2808
    %v2826 = vmul.f32 %v2821, %v2809
    %v2827 = vmul.f32 %v2821, %v2810
    %v2828 = vmul.f32 %v2821, %v2811
    %v2829 = vmul.f32 %v2821, %v2812
    %v2830 = vmul.f32 %v2821, %v2813
    %v2831 = vmul.f32 %v2821, %v2814
    %v2832 = vmul.f32 %v2821, %v2815
    %v2833 = vmul.f32 %v2821, %v2816
    %v2834 = vmul.f32 %v2821, %v2817
    %v2835 = vmul.f32 %v2821, %v2818
    %v2836 = vmul.f32 %v2821, %v2819
    %v2837 = vmul.f32 %v2821, %v2820
    %v2838 = vadd.f32 %v2788, %v2822
    %v2839 = vadd.f32 %v2789, %v2823
    %v2840 = vadd.f32 %v2790, %v2824
    %v2841 = vadd.f32 %v2791, %v2825
    %v2842 = vadd.f32 %v2792, %v2826
    %v2843 = vadd.f32 %v2793, %v2827
    %v2844 = vadd.f32 %v2794, %v2828
    %v2845 = vadd.f32 %v2795, %v2829
    %v2846 = vadd.f32 %v2796, %v2830
    %v2847 = vadd.f32 %v2797, %v2831
    %v2848 = vadd.f32 %v2798, %v2832
    %v2849 = vadd.f32 %v2799, %v2833
    %v2850 = vadd.f32 %v2800, %v2834
    %v2851 = vadd.f32 %v2801, %v2835
    %v2852 = vadd.f32 %v2802, %v2836
    %v2853 = vadd.f32 %v2803, %v2837
    %s2854 = sld [smem:[#allocation7 + $0x8]]
    %v2855 = vstv %s2854
    %v2856 = vmul.f32 %v2855, %v2704
    %v2857 = vmul.f32 %v2855, %v2705
    %v2858 = vmul.f32 %v2855, %v2706
    %v2859 = vmul.f32 %v2855, %v2707
    %v2860 = vmul.f32 %v2855, %v2708
    %v2861 = vmul.f32 %v2855, %v2709
    %v2862 = vmul.f32 %v2855, %v2710
    %v2863 = vmul.f32 %v2855, %v2711
    %v2864 = vmul.f32 %v2855, %v2712
    %v2865 = vmul.f32 %v2855, %v2713
    %v2866 = vmul.f32 %v2855, %v2714
    %v2867 = vmul.f32 %v2855, %v2715
    %v2868 = vmul.f32 %v2855, %v2716
    %v2869 = vmul.f32 %v2855, %v2717
    %v2870 = vmul.f32 %v2855, %v2718
    %v2871 = vmul.f32 %v2855, %v2719
    %v2872 = vadd.f32 %v2838, %v2856
    %v2873 = vadd.f32 %v2839, %v2857
    %v2874 = vadd.f32 %v2840, %v2858
    %v2875 = vadd.f32 %v2841, %v2859
    %v2876 = vadd.f32 %v2842, %v2860
    %v2877 = vadd.f32 %v2843, %v2861
    %v2878 = vadd.f32 %v2844, %v2862
    %v2879 = vadd.f32 %v2845, %v2863
    %v2880 = vadd.f32 %v2846, %v2864
    %v2881 = vadd.f32 %v2847, %v2865
    %v2882 = vadd.f32 %v2848, %v2866
    %v2883 = vadd.f32 %v2849, %v2867
    %v2884 = vadd.f32 %v2850, %v2868
    %v2885 = vadd.f32 %v2851, %v2869
    %v2886 = vadd.f32 %v2852, %v2870
    %v2887 = vadd.f32 %v2853, %v2871
    %2888 = vst [vmem:[#allocation6] sm:$0xff] %v2872
    %2889 = vst [vmem:[#allocation6 + $0x8] sm:$0xff] %v2873
    %2890 = vst [vmem:[#allocation6 + $0x10] sm:$0xff] %v2874
    %2891 = vst [vmem:[#allocation6 + $0x18] sm:$0xff] %v2875
    %2892 = vst [vmem:[#allocation6 + $0x20] sm:$0xff] %v2876
    %2893 = vst [vmem:[#allocation6 + $0x28] sm:$0xff] %v2877
    %2894 = vst [vmem:[#allocation6 + $0x30] sm:$0xff] %v2878
    %2895 = vst [vmem:[#allocation6 + $0x38] sm:$0xff] %v2879
    %2896 = vst [vmem:[#allocation6 + $0x40] sm:$0xff] %v2880
    %2897 = vst [vmem:[#allocation6 + $0x48] sm:$0xff] %v2881
    %2898 = vst [vmem:[#allocation6 + $0x50] sm:$0xff] %v2882
    %2899 = vst [vmem:[#allocation6 + $0x58] sm:$0xff] %v2883
    %2900 = vst [vmem:[#allocation6 + $0x60] sm:$0xff] %v2884
    %2901 = vst [vmem:[#allocation6 + $0x68] sm:$0xff] %v2885
    %2902 = vst [vmem:[#allocation6 + $0x70] sm:$0xff] %v2886
    %2903 = vst [vmem:[#allocation6 + $0x78] sm:$0xff] %v2887
    %v2904 = vld [vmem:[#allocation6] sm:$0xff]
    %v2905 = vld [vmem:[#allocation6 + $0x8] sm:$0xff]
    %v2906 = vld [vmem:[#allocation6 + $0x10] sm:$0xff]
    %v2907 = vld [vmem:[#allocation6 + $0x18] sm:$0xff]
    %v2908 = vld [vmem:[#allocation6 + $0x20] sm:$0xff]
    %v2909 = vld [vmem:[#allocation6 + $0x28] sm:$0xff]
    %v2910 = vld [vmem:[#allocation6 + $0x30] sm:$0xff]
    %v2911 = vld [vmem:[#allocation6 + $0x38] sm:$0xff]
    %v2912 = vld [vmem:[#allocation6 + $0x40] sm:$0xff]
    %v2913 = vld [vmem:[#allocation6 + $0x48] sm:$0xff]
    %v2914 = vld [vmem:[#allocation6 + $0x50] sm:$0xff]
    %v2915 = vld [vmem:[#allocation6 + $0x58] sm:$0xff]
    %v2916 = vld [vmem:[#allocation6 + $0x60] sm:$0xff]
    %v2917 = vld [vmem:[#allocation6 + $0x68] sm:$0xff]
    %v2918 = vld [vmem:[#allocation6 + $0x70] sm:$0xff]
    %v2919 = vld [vmem:[#allocation6 + $0x78] sm:$0xff]
    %v2920 = vld [vmem:[%s0] sm:$0xf]
    %v2921 = vld [vmem:[%s0 + $0x4] sm:$0xf]
    %v2922 = vld [vmem:[%s0 + $0x8] sm:$0xf]
    %v2923 = vld [vmem:[%s0 + $0xc] sm:$0xf]
    %v2924 = vld [vmem:[%s0 + $0x10] sm:$0xf]
    %v2925 = vld [vmem:[%s0 + $0x14] sm:$0xf]
    %v2926 = vld [vmem:[%s0 + $0x18] sm:$0xf]
    %v2927 = vld [vmem:[%s0 + $0x1c] sm:$0xf]
    %v2928 = vld [vmem:[%s0 + $0x20] sm:$0xf]
    %v2929 = vld [vmem:[%s0 + $0x24] sm:$0xf]
    %v2930 = vld [vmem:[%s0 + $0x28] sm:$0xf]
    %v2931 = vld [vmem:[%s0 + $0x2c] sm:$0xf]
    %v2932 = vld [vmem:[%s0 + $0x30] sm:$0xf]
    %v2933 = vld [vmem:[%s0 + $0x34] sm:$0xf]
    %v2934 = vld [vmem:[%s0 + $0x38] sm:$0xf]
    %v2935 = vld [vmem:[%s0 + $0x3c] sm:$0xf]
    %v2936 = vpack.c.bf16 %v2905, %v2904
    %v2937 = vpack.c.bf16 %v2907, %v2906
    %v2938 = vpack.c.bf16 %v2909, %v2908
    %v2939 = vpack.c.bf16 %v2911, %v2910
    %v2940 = vpack.c.bf16 %v2913, %v2912
    %v2941 = vpack.c.bf16 %v2915, %v2914
    %v2942 = vpack.c.bf16 %v2917, %v2916
    %v2943 = vpack.c.bf16 %v2919, %v2918
    %v2960 = vunpack.c.l.b16 %v2920
    %v2961 = vunpack.c.l.b16 %v2921
    %v2962 = vunpack.c.l.b16 %v2922
    %v2963 = vunpack.c.l.b16 %v2923
    %v2964 = vunpack.c.l.b16 %v2924
    %v2965 = vunpack.c.l.b16 %v2925
    %v2966 = vunpack.c.l.b16 %v2926
    %v2967 = vunpack.c.l.b16 %v2927
    %v2968 = vunpack.c.l.b16 %v2928
    %v2969 = vunpack.c.l.b16 %v2929
    %v2970 = vunpack.c.l.b16 %v2930
    %v2971 = vunpack.c.l.b16 %v2931
    %v2972 = vunpack.c.l.b16 %v2932
    %v2973 = vunpack.c.l.b16 %v2933
    %v2974 = vunpack.c.l.b16 %v2934
    %v2975 = vunpack.c.l.b16 %v2935
    %v2976 = vpack.c.b16 %v2961, %v2960
    %v2977 = vpack.c.b16 %v2963, %v2962
    %v2978 = vpack.c.b16 %v2965, %v2964
    %v2979 = vpack.c.b16 %v2967, %v2966
    %v2980 = vpack.c.b16 %v2969, %v2968
    %v2981 = vpack.c.b16 %v2971, %v2970
    %v2982 = vpack.c.b16 %v2973, %v2972
    %v2983 = vpack.c.b16 %v2975, %v2974
    %2992 = vmatprep.subr.bf16.mxu0 0
    %2993 = vmatpush1.bf16.msra.mxu0 %v2936
    %2994 = vmatprep.subr.bf16.mxu0 0
    %2995 = vmatpush1.bf16.msra.mxu0 %v2937
    %2996 = vmatprep.subr.bf16.mxu0 0
    %2997 = vmatpush1.bf16.msra.mxu0 %v2938
    %2998 = vmatprep.subr.bf16.mxu0 0
    %2999 = vmatpush1.bf16.msra.mxu0 %v2939
    %3000 = vmatprep.subr.bf16.mxu0 0
    %3001 = vmatpush1.bf16.msra.mxu0 %v2940
    %3002 = vmatprep.subr.bf16.mxu0 0
    %3003 = vmatpush1.bf16.msra.mxu0 %v2941
    %3004 = vmatprep.subr.bf16.mxu0 0
    %3005 = vmatpush1.bf16.msra.mxu0 %v2942
    %3006 = vmatprep.subr.bf16.mxu0 0
    %3007 = vmatpush1.bf16.msra.mxu0 %v2943
    %3008 = vmatprep.subr.bf16.mxu0 0
    %3009 = vmatpush1.bf16.msra.mxu0 0
    %3010 = vmatprep.subr.bf16.mxu0 0
    %3011 = vmatpush1.bf16.msra.mxu0 0
    %3012 = vmatprep.subr.bf16.mxu0 0
    %3013 = vmatpush1.bf16.msra.mxu0 0
    %3014 = vmatprep.subr.bf16.mxu0 0
    %3015 = vmatpush1.bf16.msra.mxu0 0
    %3016 = vmatprep.subr.bf16.mxu0 0
    %3017 = vmatpush1.bf16.msra.mxu0 0
    %3018 = vmatprep.subr.bf16.mxu0 0
    %3019 = vmatpush1.bf16.msra.mxu0 0
    %3020 = vmatprep.subr.bf16.mxu0 0
    %3021 = vmatpush1.bf16.msra.mxu0 0
    %3022 = vmatprep.subr.bf16.mxu0 0
    %3023 = vmatpush1.bf16.msra.mxu0 0
    %3024 = vmatprep.mubr.bf16.mxu0 0
    %3025 = vmatmul.mubr.bf16.gmra.mrb[0].mxu0 %v2976
    %v3026 = vpop.f32.mrb[0].mxu0
    %v3027 = vadd.f32 0.0, %v3026
    %v3028 = vpop.f32.mrb[0].mxu0
    %v3029 = vpop.f32.mrb[0].mxu0
    %v3030 = vadd.f32 0.0, %v3029
    %v3031 = vpop.f32.mrb[0].mxu0
    %3032 = vmatprep.mubr.bf16.mxu0 0
    %3033 = vmatmul.mubr.bf16.gmra.mrb[0].mxu0 %v2977
    %v3034 = vpop.f32.mrb[0].mxu0
    %v3035 = vadd.f32 0.0, %v3034
    %v3036 = vpop.f32.mrb[0].mxu0
    %v3037 = vpop.f32.mrb[0].mxu0
    %v3038 = vadd.f32 0.0, %v3037
    %v3039 = vpop.f32.mrb[0].mxu0
    %3040 = vmatprep.mubr.bf16.mxu0 0
    %3041 = vmatmul.mubr.bf16.gmra.mrb[0].mxu0 %v2978
    %v3042 = vpop.f32.mrb[0].mxu0
    %v3043 = vadd.f32 0.0, %v3042
    %v3044 = vpop.f32.mrb[0].mxu0
    %v3045 = vpop.f32.mrb[0].mxu0
    %v3046 = vadd.f32 0.0, %v3045
    %v3047 = vpop.f32.mrb[0].mxu0
    %3048 = vmatprep.mubr.bf16.mxu0 0
    %3049 = vmatmul.mubr.bf16.gmra.mrb[0].mxu0 %v2979
    %v3050 = vpop.f32.mrb[0].mxu0
    %v3051 = vadd.f32 0.0, %v3050
    %v3052 = vpop.f32.mrb[0].mxu0
    %v3053 = vpop.f32.mrb[0].mxu0
    %v3054 = vadd.f32 0.0, %v3053
    %v3055 = vpop.f32.mrb[0].mxu0
    %3056 = vmatprep.mubr.bf16.mxu0 0
    %3057 = vmatmul.mubr.bf16.gmra.mrb[0].mxu0 %v2980
    %v3058 = vpop.f32.mrb[0].mxu0
    %v3059 = vadd.f32 0.0, %v3058
    %v3060 = vpop.f32.mrb[0].mxu0
    %v3061 = vpop.f32.mrb[0].mxu0
    %v3062 = vadd.f32 0.0, %v3061
    %v3063 = vpop.f32.mrb[0].mxu0
    %3064 = vmatprep.mubr.bf16.mxu0 0
    %3065 = vmatmul.mubr.bf16.gmra.mrb[0].mxu0 %v2981
    %v3066 = vpop.f32.mrb[0].mxu0
    %v3067 = vadd.f32 0.0, %v3066
    %v3068 = vpop.f32.mrb[0].mxu0
    %v3069 = vpop.f32.mrb[0].mxu0
    %v3070 = vadd.f32 0.0, %v3069
    %v3071 = vpop.f32.mrb[0].mxu0
    %3072 = vmatprep.mubr.bf16.mxu0 0
    %3073 = vmatmul.mubr.bf16.gmra.mrb[0].mxu0 %v2982
    %v3074 = vpop.f32.mrb[0].mxu0
    %v3075 = vadd.f32 0.0, %v3074
    %v3076 = vpop.f32.mrb[0].mxu0
    %v3077 = vpop.f32.mrb[0].mxu0
    %v3078 = vadd.f32 0.0, %v3077
    %v3079 = vpop.f32.mrb[0].mxu0
    %3080 = vmatprep.mubr.bf16.mxu0 0
    %3081 = vmatmul.mubr.bf16.gmra.mrb[0].mxu0 %v2983
    %v3082 = vpop.f32.mrb[0].mxu0
    %v3083 = vadd.f32 0.0, %v3082
    %v3084 = vpop.f32.mrb[0].mxu0
    %v3085 = vpop.f32.mrb[0].mxu0
    %v3086 = vadd.f32 0.0, %v3085
    %v3087 = vpop.f32.mrb[0].mxu0
    %3088 = vdwg.mxu0
    %3089 = vst [vmem:[#allocation2] sm:$0xff] %v3027
    %3090 = vst [vmem:[#allocation2 + $0x10] sm:$0xff] %v3030
    %3091 = vst [vmem:[#allocation2 + $0x20] sm:$0xff] %v3035
    %3092 = vst [vmem:[#allocation2 + $0x30] sm:$0xff] %v3038
    %3093 = vst [vmem:[#allocation2 + $0x40] sm:$0xff] %v3043
    %3094 = vst [vmem:[#allocation2 + $0x50] sm:$0xff] %v3046
    %3095 = vst [vmem:[#allocation2 + $0x60] sm:$0xff] %v3051
    %3096 = vst [vmem:[#allocation2 + $0x70] sm:$0xff] %v3054
    %3097 = vst [vmem:[#allocation2 + $0x80] sm:$0xff] %v3059
    %3098 = vst [vmem:[#allocation2 + $0x90] sm:$0xff] %v3062
    %3099 = vst [vmem:[#allocation2 + $0xa0] sm:$0xff] %v3067
    %3100 = vst [vmem:[#allocation2 + $0xb0] sm:$0xff] %v3070
    %3101 = vst [vmem:[#allocation2 + $0xc0] sm:$0xff] %v3075
    %3102 = vst [vmem:[#allocation2 + $0xd0] sm:$0xff] %v3078
    %3103 = vst [vmem:[#allocation2 + $0xe0] sm:$0xff] %v3083
    %3104 = vst [vmem:[#allocation2 + $0xf0] sm:$0xff] %v3086
    %v3105 = vld [vmem:[#allocation2] sm:$0xff]
    %v3106 = vld [vmem:[#allocation2 + $0x8] sm:$0xff]
    %v3107 = vld [vmem:[#allocation2 + $0x10] sm:$0xff]
    %v3108 = vld [vmem:[#allocation2 + $0x18] sm:$0xff]
    %v3109 = vld [vmem:[#allocation2 + $0x20] sm:$0xff]
    %v3110 = vld [vmem:[#allocation2 + $0x28] sm:$0xff]
    %v3111 = vld [vmem:[#allocation2 + $0x30] sm:$0xff]
    %v3112 = vld [vmem:[#allocation2 + $0x38] sm:$0xff]
    %v3113 = vld [vmem:[#allocation2 + $0x40] sm:$0xff]
    %v3114 = vld [vmem:[#allocation2 + $0x48] sm:$0xff]
    %v3115 = vld [vmem:[#allocation2 + $0x50] sm:$0xff]
    %v3116 = vld [vmem:[#allocation2 + $0x58] sm:$0xff]
    %v3117 = vld [vmem:[#allocation2 + $0x60] sm:$0xff]
    %v3118 = vld [vmem:[#allocation2 + $0x68] sm:$0xff]
    %v3119 = vld [vmem:[#allocation2 + $0x70] sm:$0xff]
    %v3120 = vld [vmem:[#allocation2 + $0x78] sm:$0xff]
    %v3121 = vld [vmem:[#allocation2 + $0x80] sm:$0xff]
    %v3122 = vld [vmem:[#allocation2 + $0x88] sm:$0xff]
    %v3123 = vld [vmem:[#allocation2 + $0x90] sm:$0xff]
    %v3124 = vld [vmem:[#allocation2 + $0x98] sm:$0xff]
    %v3125 = vld [vmem:[#allocation2 + $0xa0] sm:$0xff]
    %v3126 = vld [vmem:[#allocation2 + $0xa8] sm:$0xff]
    %v3127 = vld [vmem:[#allocation2 + $0xb0] sm:$0xff]
    %v3128 = vld [vmem:[#allocation2 + $0xb8] sm:$0xff]
    %v3129 = vld [vmem:[#allocation2 + $0xc0] sm:$0xff]
    %v3130 = vld [vmem:[#allocation2 + $0xc8] sm:$0xff]
    %v3131 = vld [vmem:[#allocation2 + $0xd0] sm:$0xff]
    %v3132 = vld [vmem:[#allocation2 + $0xd8] sm:$0xff]
    %v3133 = vld [vmem:[#allocation2 + $0xe0] sm:$0xff]
    %v3134 = vld [vmem:[#allocation2 + $0xe8] sm:$0xff]
    %v3135 = vld [vmem:[#allocation2 + $0xf0] sm:$0xff]
    %v3136 = vld [vmem:[#allocation2 + $0xf8] sm:$0xff]
    %s3137 = scalar_lea.vmem %s4, 1024
    %v3138 = vld [vmem:[%s3137] sm:$0xff]
    %v3139 = vld [vmem:[%s3137 + $0x8] sm:$0xff]
    %v3140 = vld [vmem:[%s3137 + $0x10] sm:$0xff]
    %v3141 = vld [vmem:[%s3137 + $0x18] sm:$0xff]
    %v3142 = vld [vmem:[%s3137 + $0x20] sm:$0xff]
    %v3143 = vld [vmem:[%s3137 + $0x28] sm:$0xff]
    %v3144 = vld [vmem:[%s3137 + $0x30] sm:$0xff]
    %v3145 = vld [vmem:[%s3137 + $0x38] sm:$0xff]
    %v3146 = vld [vmem:[%s3137 + $0x40] sm:$0xff]
    %v3147 = vld [vmem:[%s3137 + $0x48] sm:$0xff]
    %v3148 = vld [vmem:[%s3137 + $0x50] sm:$0xff]
    %v3149 = vld [vmem:[%s3137 + $0x58] sm:$0xff]
    %v3150 = vld [vmem:[%s3137 + $0x60] sm:$0xff]
    %v3151 = vld [vmem:[%s3137 + $0x68] sm:$0xff]
    %v3152 = vld [vmem:[%s3137 + $0x70] sm:$0xff]
    %v3153 = vld [vmem:[%s3137 + $0x78] sm:$0xff]
    %v3154 = vld [vmem:[%s3137 + $0x80] sm:$0xff]
    %v3155 = vld [vmem:[%s3137 + $0x88] sm:$0xff]
    %v3156 = vld [vmem:[%s3137 + $0x90] sm:$0xff]
    %v3157 = vld [vmem:[%s3137 + $0x98] sm:$0xff]
    %v3158 = vld [vmem:[%s3137 + $0xa0] sm:$0xff]
    %v3159 = vld [vmem:[%s3137 + $0xa8] sm:$0xff]
    %v3160 = vld [vmem:[%s3137 + $0xb0] sm:$0xff]
    %v3161 = vld [vmem:[%s3137 + $0xb8] sm:$0xff]
    %v3162 = vld [vmem:[%s3137 + $0xc0] sm:$0xff]
    %v3163 = vld [vmem:[%s3137 + $0xc8] sm:$0xff]
    %v3164 = vld [vmem:[%s3137 + $0xd0] sm:$0xff]
    %v3165 = vld [vmem:[%s3137 + $0xd8] sm:$0xff]
    %v3166 = vld [vmem:[%s3137 + $0xe0] sm:$0xff]
    %v3167 = vld [vmem:[%s3137 + $0xe8] sm:$0xff]
    %v3168 = vld [vmem:[%s3137 + $0xf0] sm:$0xff]
    %v3169 = vld [vmem:[%s3137 + $0xf8] sm:$0xff]
    %s3170 = scalar_lea.vmem %s5, 4
    %v3171 = vld [vmem:[%s3170] sm:$0x1]
    %v3173 = vlaneseq
    %v3174 = vshrl.u32 %v3173, 7
    %v3175 = vsub.s32 0, %v3174
    %v3176 = vrot.slane %v3171, %v3175
    %3178 = vmatprep.subr.mxu0 0.0
    %3179 = vmatpush1.msra.mxu0 %v3138
    %3180 = vmatprep.subr.mxu0 0.0
    %3181 = vmatpush1.msra.mxu0 %v3139
    %3182 = vmatprep.subr.mxu0 0.0
    %3183 = vmatpush1.msra.mxu0 %v3140
    %3184 = vmatprep.subr.mxu0 0.0
    %3185 = vmatpush1.msra.mxu0 %v3141
    %3186 = vmatprep.subr.mxu0 0.0
    %3187 = vmatpush1.msra.mxu0 %v3142
    %3188 = vmatprep.subr.mxu0 0.0
    %3189 = vmatpush1.msra.mxu0 %v3143
    %3190 = vmatprep.subr.mxu0 0.0
    %3191 = vmatpush1.msra.mxu0 %v3144
    %3192 = vmatprep.subr.mxu0 0.0
    %3193 = vmatpush1.msra.mxu0 %v3145
    %3194 = vmatprep.subr.mxu0 0.0
    %3195 = vmatpush1.msra.mxu0 %v3146
    %3196 = vmatprep.subr.mxu0 0.0
    %3197 = vmatpush1.msra.mxu0 %v3147
    %3198 = vmatprep.subr.mxu0 0.0
    %3199 = vmatpush1.msra.mxu0 %v3148
    %3200 = vmatprep.subr.mxu0 0.0
    %3201 = vmatpush1.msra.mxu0 %v3149
    %3202 = vmatprep.subr.mxu0 0.0
    %3203 = vmatpush1.msra.mxu0 %v3150
    %3204 = vmatprep.subr.mxu0 0.0
    %3205 = vmatpush1.msra.mxu0 %v3151
    %3206 = vmatprep.subr.mxu0 0.0
    %3207 = vmatpush1.msra.mxu0 %v3152
    %3208 = vmatprep.subr.mxu0 0.0
    %3209 = vmatpush1.msra.mxu0 %v3153
    %3210 = vmatprep.subr.mxu0 0.0
    %3211 = vmatpush1.msra.mxu0 %v3154
    %3212 = vmatprep.subr.mxu0 0.0
    %3213 = vmatpush1.msra.mxu0 %v3155
    %3214 = vmatprep.subr.mxu0 0.0
    %3215 = vmatpush1.msra.mxu0 %v3156
    %3216 = vmatprep.subr.mxu0 0.0
    %3217 = vmatpush1.msra.mxu0 %v3157
    %3218 = vmatprep.subr.mxu0 0.0
    %3219 = vmatpush1.msra.mxu0 %v3158
    %3220 = vmatprep.subr.mxu0 0.0
    %3221 = vmatpush1.msra.mxu0 %v3159
    %3222 = vmatprep.subr.mxu0 0.0
    %3223 = vmatpush1.msra.mxu0 %v3160
    %3224 = vmatprep.subr.mxu0 0.0
    %3225 = vmatpush1.msra.mxu0 %v3161
    %3226 = vmatprep.subr.mxu0 0.0
    %3227 = vmatpush1.msra.mxu0 %v3162
    %3228 = vmatprep.subr.mxu0 0.0
    %3229 = vmatpush1.msra.mxu0 %v3163
    %3230 = vmatprep.subr.mxu0 0.0
    %3231 = vmatpush1.msra.mxu0 %v3164
    %3232 = vmatprep.subr.mxu0 0.0
    %3233 = vmatpush1.msra.mxu0 %v3165
    %3234 = vmatprep.subr.mxu0 0.0
    %3235 = vmatpush1.msra.mxu0 %v3166
    %3236 = vmatprep.subr.mxu0 0.0
    %3237 = vmatpush1.msra.mxu0 %v3167
    %3238 = vmatprep.subr.mxu0 0.0
    %3239 = vmatpush1.msra.mxu0 %v3168
    %3240 = vmatprep.subr.mxu0 0.0
    %3241 = vmatpush1.msra.mxu0 %v3169
    %3242 = vmatprep.mubr.f32.mxu0 %v3106
    %3243 = vmatmul.mubr.f32.gmra.mrb[0].mxu0 %v3105
    %v3244 = vpop.f32.mrb[0].mxu0
    %v3245 = vadd.f32 %v3176, %v3244
    %v3246 = vpop.f32.mrb[0].mxu0
    %3247 = vmatprep.mubr.f32.mxu0 %v3108
    %3248 = vmatmul.mubr.f32.gmra.mrb[0].mxu0 %v3107
    %v3249 = vpop.f32.mrb[0].mxu0
    %v3250 = vadd.f32 %v3176, %v3249
    %v3251 = vpop.f32.mrb[0].mxu0
    %3252 = vmatprep.mubr.f32.mxu0 %v3110
    %3253 = vmatmul.mubr.f32.gmra.mrb[0].mxu0 %v3109
    %v3254 = vpop.f32.mrb[0].mxu0
    %v3255 = vadd.f32 %v3176, %v3254
    %v3256 = vpop.f32.mrb[0].mxu0
    %3257 = vmatprep.mubr.f32.mxu0 %v3112
    %3258 = vmatmul.mubr.f32.gmra.mrb[0].mxu0 %v3111
    %v3259 = vpop.f32.mrb[0].mxu0
    %v3260 = vadd.f32 %v3176, %v3259
    %v3261 = vpop.f32.mrb[0].mxu0
    %3262 = vmatprep.mubr.f32.mxu0 %v3114
    %3263 = vmatmul.mubr.f32.gmra.mrb[0].mxu0 %v3113
    %v3264 = vpop.f32.mrb[0].mxu0
    %v3265 = vadd.f32 %v3176, %v3264
    %v3266 = vpop.f32.mrb[0].mxu0
    %3267 = vmatprep.mubr.f32.mxu0 %v3116
    %3268 = vmatmul.mubr.f32.gmra.mrb[0].mxu0 %v3115
    %v3269 = vpop.f32.mrb[0].mxu0
    %v3270 = vadd.f32 %v3176, %v3269
    %v3271 = vpop.f32.mrb[0].mxu0
    %3272 = vmatprep.mubr.f32.mxu0 %v3118
    %3273 = vmatmul.mubr.f32.gmra.mrb[0].mxu0 %v3117
    %v3274 = vpop.f32.mrb[0].mxu0
    %v3275 = vadd.f32 %v3176, %v3274
    %v3276 = vpop.f32.mrb[0].mxu0
    %3277 = vmatprep.mubr.f32.mxu0 %v3120
    %3278 = vmatmul.mubr.f32.gmra.mrb[0].mxu0 %v3119
    %v3279 = vpop.f32.mrb[0].mxu0
    %v3280 = vadd.f32 %v3176, %v3279
    %v3281 = vpop.f32.mrb[0].mxu0
    %3282 = vmatprep.mubr.f32.mxu0 %v3122
    %3283 = vmatmul.mubr.f32.gmra.mrb[0].mxu0 %v3121
    %v3284 = vpop.f32.mrb[0].mxu0
    %v3285 = vadd.f32 %v3176, %v3284
    %v3286 = vpop.f32.mrb[0].mxu0
    %3287 = vmatprep.mubr.f32.mxu0 %v3124
    %3288 = vmatmul.mubr.f32.gmra.mrb[0].mxu0 %v3123
    %v3289 = vpop.f32.mrb[0].mxu0
    %v3290 = vadd.f32 %v3176, %v3289
    %v3291 = vpop.f32.mrb[0].mxu0
    %3292 = vmatprep.mubr.f32.mxu0 %v3126
    %3293 = vmatmul.mubr.f32.gmra.mrb[0].mxu0 %v3125
    %v3294 = vpop.f32.mrb[0].mxu0
    %v3295 = vadd.f32 %v3176, %v3294
    %v3296 = vpop.f32.mrb[0].mxu0
    %3297 = vmatprep.mubr.f32.mxu0 %v3128
    %3298 = vmatmul.mubr.f32.gmra.mrb[0].mxu0 %v3127
    %v3299 = vpop.f32.mrb[0].mxu0
    %v3300 = vadd.f32 %v3176, %v3299
    %v3301 = vpop.f32.mrb[0].mxu0
    %3302 = vmatprep.mubr.f32.mxu0 %v3130
    %3303 = vmatmul.mubr.f32.gmra.mrb[0].mxu0 %v3129
    %v3304 = vpop.f32.mrb[0].mxu0
    %v3305 = vadd.f32 %v3176, %v3304
    %v3306 = vpop.f32.mrb[0].mxu0
    %3307 = vmatprep.mubr.f32.mxu0 %v3132
    %3308 = vmatmul.mubr.f32.gmra.mrb[0].mxu0 %v3131
    %v3309 = vpop.f32.mrb[0].mxu0
    %v3310 = vadd.f32 %v3176, %v3309
    %v3311 = vpop.f32.mrb[0].mxu0
    %3312 = vmatprep.mubr.f32.mxu0 %v3134
    %3313 = vmatmul.mubr.f32.gmra.mrb[0].mxu0 %v3133
    %v3314 = vpop.f32.mrb[0].mxu0
    %v3315 = vadd.f32 %v3176, %v3314
    %v3316 = vpop.f32.mrb[0].mxu0
    %3317 = vmatprep.mubr.f32.mxu0 %v3136
    %3318 = vmatmul.mubr.f32.gmra.mrb[0].mxu0 %v3135
    %v3319 = vpop.f32.mrb[0].mxu0
    %v3320 = vadd.f32 %v3176, %v3319
    %v3321 = vpop.f32.mrb[0].mxu0
    %3322 = vdwg.mxu0
    %v3323 = vld [vmem:[%s1] sm:$0xf]
    %v3324 = vld [vmem:[%s1 + $0x4] sm:$0xf]
    %v3325 = vld [vmem:[%s1 + $0x8] sm:$0xf]
    %v3326 = vld [vmem:[%s1 + $0xc] sm:$0xf]
    %v3327 = vld [vmem:[%s1 + $0x10] sm:$0xf]
    %v3328 = vld [vmem:[%s1 + $0x14] sm:$0xf]
    %v3329 = vld [vmem:[%s1 + $0x18] sm:$0xf]
    %v3330 = vld [vmem:[%s1 + $0x1c] sm:$0xf]
    %v3331 = vld [vmem:[%s1 + $0x20] sm:$0xf]
    %v3332 = vld [vmem:[%s1 + $0x24] sm:$0xf]
    %v3333 = vld [vmem:[%s1 + $0x28] sm:$0xf]
    %v3334 = vld [vmem:[%s1 + $0x2c] sm:$0xf]
    %v3335 = vld [vmem:[%s1 + $0x30] sm:$0xf]
    %v3336 = vld [vmem:[%s1 + $0x34] sm:$0xf]
    %v3337 = vld [vmem:[%s1 + $0x38] sm:$0xf]
    %v3338 = vld [vmem:[%s1 + $0x3c] sm:$0xf]
    %v3339 = vpack.c.bf16 %v3250, %v3245
    %v3340 = vpack.c.bf16 %v3260, %v3255
    %v3341 = vpack.c.bf16 %v3270, %v3265
    %v3342 = vpack.c.bf16 %v3280, %v3275
    %v3343 = vpack.c.bf16 %v3290, %v3285
    %v3344 = vpack.c.bf16 %v3300, %v3295
    %v3345 = vpack.c.bf16 %v3310, %v3305
    %v3346 = vpack.c.bf16 %v3320, %v3315
    %v3363 = vunpack.c.l.b16 %v3323
    %v3364 = vunpack.c.l.b16 %v3324
    %v3365 = vunpack.c.l.b16 %v3325
    %v3366 = vunpack.c.l.b16 %v3326
    %v3367 = vunpack.c.l.b16 %v3327
    %v3368 = vunpack.c.l.b16 %v3328
    %v3369 = vunpack.c.l.b16 %v3329
    %v3370 = vunpack.c.l.b16 %v3330
    %v3371 = vunpack.c.l.b16 %v3331
    %v3372 = vunpack.c.l.b16 %v3332
    %v3373 = vunpack.c.l.b16 %v3333
    %v3374 = vunpack.c.l.b16 %v3334
    %v3375 = vunpack.c.l.b16 %v3335
    %v3376 = vunpack.c.l.b16 %v3336
    %v3377 = vunpack.c.l.b16 %v3337
    %v3378 = vunpack.c.l.b16 %v3338
    %v3379 = vpack.c.b16 %v3364, %v3363
    %v3380 = vpack.c.b16 %v3366, %v3365
    %v3381 = vpack.c.b16 %v3368, %v3367
    %v3382 = vpack.c.b16 %v3370, %v3369
    %v3383 = vpack.c.b16 %v3372, %v3371
    %v3384 = vpack.c.b16 %v3374, %v3373
    %v3385 = vpack.c.b16 %v3376, %v3375
    %v3386 = vpack.c.b16 %v3378, %v3377
    %3395 = vmatprep.subr.bf16.mxu0 0
    %3396 = vmatpush1.bf16.msra.mxu0 %v3339
    %3397 = vmatprep.subr.bf16.mxu0 0
    %3398 = vmatpush1.bf16.msra.mxu0 %v3340
    %3399 = vmatprep.subr.bf16.mxu0 0
    %3400 = vmatpush1.bf16.msra.mxu0 %v3341
    %3401 = vmatprep.subr.bf16.mxu0 0
    %3402 = vmatpush1.bf16.msra.mxu0 %v3342
    %3403 = vmatprep.subr.bf16.mxu0 0
    %3404 = vmatpush1.bf16.msra.mxu0 %v3343
    %3405 = vmatprep.subr.bf16.mxu0 0
    %3406 = vmatpush1.bf16.msra.mxu0 %v3344
    %3407 = vmatprep.subr.bf16.mxu0 0
    %3408 = vmatpush1.bf16.msra.mxu0 %v3345
    %3409 = vmatprep.subr.bf16.mxu0 0
    %3410 = vmatpush1.bf16.msra.mxu0 %v3346
    %3411 = vmatprep.subr.bf16.mxu0 0
    %3412 = vmatpush1.bf16.msra.mxu0 0
    %3413 = vmatprep.subr.bf16.mxu0 0
    %3414 = vmatpush1.bf16.msra.mxu0 0
    %3415 = vmatprep.subr.bf16.mxu0 0
    %3416 = vmatpush1.bf16.msra.mxu0 0
    %3417 = vmatprep.subr.bf16.mxu0 0
    %3418 = vmatpush1.bf16.msra.mxu0 0
    %3419 = vmatprep.subr.bf16.mxu0 0
    %3420 = vmatpush1.bf16.msra.mxu0 0
    %3421 = vmatprep.subr.bf16.mxu0 0
    %3422 = vmatpush1.bf16.msra.mxu0 0
    %3423 = vmatprep.subr.bf16.mxu0 0
    %3424 = vmatpush1.bf16.msra.mxu0 0
    %3425 = vmatprep.subr.bf16.mxu0 0
    %3426 = vmatpush1.bf16.msra.mxu0 0
    %3427 = vmatprep.mubr.bf16.mxu0 0
    %3428 = vmatmul.mubr.bf16.gmra.mrb[0].mxu0 %v3379
    %v3429 = vpop.f32.mrb[0].mxu0
    %v3430 = vadd.f32 0.0, %v3429
    %v3431 = vpop.f32.mrb[0].mxu0
    %v3432 = vpop.f32.mrb[0].mxu0
    %v3433 = vadd.f32 0.0, %v3432
    %v3434 = vpop.f32.mrb[0].mxu0
    %3435 = vmatprep.mubr.bf16.mxu0 0
    %3436 = vmatmul.mubr.bf16.gmra.mrb[0].mxu0 %v3380
    %v3437 = vpop.f32.mrb[0].mxu0
    %v3438 = vadd.f32 0.0, %v3437
    %v3439 = vpop.f32.mrb[0].mxu0
    %v3440 = vpop.f32.mrb[0].mxu0
    %v3441 = vadd.f32 0.0, %v3440
    %v3442 = vpop.f32.mrb[0].mxu0
    %3443 = vmatprep.mubr.bf16.mxu0 0
    %3444 = vmatmul.mubr.bf16.gmra.mrb[0].mxu0 %v3381
    %v3445 = vpop.f32.mrb[0].mxu0
    %v3446 = vadd.f32 0.0, %v3445
    %v3447 = vpop.f32.mrb[0].mxu0
    %v3448 = vpop.f32.mrb[0].mxu0
    %v3449 = vadd.f32 0.0, %v3448
    %v3450 = vpop.f32.mrb[0].mxu0
    %3451 = vmatprep.mubr.bf16.mxu0 0
    %3452 = vmatmul.mubr.bf16.gmra.mrb[0].mxu0 %v3382
    %v3453 = vpop.f32.mrb[0].mxu0
    %v3454 = vadd.f32 0.0, %v3453
    %v3455 = vpop.f32.mrb[0].mxu0
    %v3456 = vpop.f32.mrb[0].mxu0
    %v3457 = vadd.f32 0.0, %v3456
    %v3458 = vpop.f32.mrb[0].mxu0
    %3459 = vmatprep.mubr.bf16.mxu0 0
    %3460 = vmatmul.mubr.bf16.gmra.mrb[0].mxu0 %v3383
    %v3461 = vpop.f32.mrb[0].mxu0
    %v3462 = vadd.f32 0.0, %v3461
    %v3463 = vpop.f32.mrb[0].mxu0
    %v3464 = vpop.f32.mrb[0].mxu0
    %v3465 = vadd.f32 0.0, %v3464
    %v3466 = vpop.f32.mrb[0].mxu0
    %3467 = vmatprep.mubr.bf16.mxu0 0
    %3468 = vmatmul.mubr.bf16.gmra.mrb[0].mxu0 %v3384
    %v3469 = vpop.f32.mrb[0].mxu0
    %v3470 = vadd.f32 0.0, %v3469
    %v3471 = vpop.f32.mrb[0].mxu0
    %v3472 = vpop.f32.mrb[0].mxu0
    %v3473 = vadd.f32 0.0, %v3472
    %v3474 = vpop.f32.mrb[0].mxu0
    %3475 = vmatprep.mubr.bf16.mxu0 0
    %3476 = vmatmul.mubr.bf16.gmra.mrb[0].mxu0 %v3385
    %v3477 = vpop.f32.mrb[0].mxu0
    %v3478 = vadd.f32 0.0, %v3477
    %v3479 = vpop.f32.mrb[0].mxu0
    %v3480 = vpop.f32.mrb[0].mxu0
    %v3481 = vadd.f32 0.0, %v3480
    %v3482 = vpop.f32.mrb[0].mxu0
    %3483 = vmatprep.mubr.bf16.mxu0 0
    %3484 = vmatmul.mubr.bf16.gmra.mrb[0].mxu0 %v3386
    %v3485 = vpop.f32.mrb[0].mxu0
    %v3486 = vadd.f32 0.0, %v3485
    %v3487 = vpop.f32.mrb[0].mxu0
    %v3488 = vpop.f32.mrb[0].mxu0
    %v3489 = vadd.f32 0.0, %v3488
    %v3490 = vpop.f32.mrb[0].mxu0
    %3491 = vdwg.mxu0
    %v3492 = vmax.f32 %v3430, 0.0
    %v3493 = vmax.f32 %v3433, 0.0
    %v3494 = vmax.f32 %v3438, 0.0
    %v3495 = vmax.f32 %v3441, 0.0
    %v3496 = vmax.f32 %v3446, 0.0
    %v3497 = vmax.f32 %v3449, 0.0
    %v3498 = vmax.f32 %v3454, 0.0
    %v3499 = vmax.f32 %v3457, 0.0
    %v3500 = vmax.f32 %v3462, 0.0
    %v3501 = vmax.f32 %v3465, 0.0
    %v3502 = vmax.f32 %v3470, 0.0
    %v3503 = vmax.f32 %v3473, 0.0
    %v3504 = vmax.f32 %v3478, 0.0
    %v3505 = vmax.f32 %v3481, 0.0
    %v3506 = vmax.f32 %v3486, 0.0
    %v3507 = vmax.f32 %v3489, 0.0
    %s3508 = sld [smem:[#allocation7 + $0x9]]
    %v3509 = vld [vmem:[#allocation3] sm:$0xff]
    %v3510 = vld [vmem:[#allocation3 + $0x8] sm:$0xff]
    %v3511 = vld [vmem:[#allocation3 + $0x10] sm:$0xff]
    %v3512 = vld [vmem:[#allocation3 + $0x18] sm:$0xff]
    %v3513 = vld [vmem:[#allocation3 + $0x20] sm:$0xff]
    %v3514 = vld [vmem:[#allocation3 + $0x28] sm:$0xff]
    %v3515 = vld [vmem:[#allocation3 + $0x30] sm:$0xff]
    %v3516 = vld [vmem:[#allocation3 + $0x38] sm:$0xff]
    %v3517 = vld [vmem:[#allocation3 + $0x40] sm:$0xff]
    %v3518 = vld [vmem:[#allocation3 + $0x48] sm:$0xff]
    %v3519 = vld [vmem:[#allocation3 + $0x50] sm:$0xff]
    %v3520 = vld [vmem:[#allocation3 + $0x58] sm:$0xff]
    %v3521 = vld [vmem:[#allocation3 + $0x60] sm:$0xff]
    %v3522 = vld [vmem:[#allocation3 + $0x68] sm:$0xff]
    %v3523 = vld [vmem:[#allocation3 + $0x70] sm:$0xff]
    %v3524 = vld [vmem:[#allocation3 + $0x78] sm:$0xff]
    %v3525 = vstv %s3508
    %v3526 = vmul.f32 %v3525, %v3509
    %v3527 = vmul.f32 %v3525, %v3510
    %v3528 = vmul.f32 %v3525, %v3511
    %v3529 = vmul.f32 %v3525, %v3512
    %v3530 = vmul.f32 %v3525, %v3513
    %v3531 = vmul.f32 %v3525, %v3514
    %v3532 = vmul.f32 %v3525, %v3515
    %v3533 = vmul.f32 %v3525, %v3516
    %v3534 = vmul.f32 %v3525, %v3517
    %v3535 = vmul.f32 %v3525, %v3518
    %v3536 = vmul.f32 %v3525, %v3519
    %v3537 = vmul.f32 %v3525, %v3520
    %v3538 = vmul.f32 %v3525, %v3521
    %v3539 = vmul.f32 %v3525, %v3522
    %v3540 = vmul.f32 %v3525, %v3523
    %v3541 = vmul.f32 %v3525, %v3524
    %s3542 = sld [smem:[#allocation7 + $0xa]]
    %v3543 = vld [vmem:[#allocation4] sm:$0xff]
    %v3544 = vld [vmem:[#allocation4 + $0x8] sm:$0xff]
    %v3545 = vld [vmem:[#allocation4 + $0x10] sm:$0xff]
    %v3546 = vld [vmem:[#allocation4 + $0x18] sm:$0xff]
    %v3547 = vld [vmem:[#allocation4 + $0x20] sm:$0xff]
    %v3548 = vld [vmem:[#allocation4 + $0x28] sm:$0xff]
    %v3549 = vld [vmem:[#allocation4 + $0x30] sm:$0xff]
    %v3550 = vld [vmem:[#allocation4 + $0x38] sm:$0xff]
    %v3551 = vld [vmem:[#allocation4 + $0x40] sm:$0xff]
    %v3552 = vld [vmem:[#allocation4 + $0x48] sm:$0xff]
    %v3553 = vld [vmem:[#allocation4 + $0x50] sm:$0xff]
    %v3554 = vld [vmem:[#allocation4 + $0x58] sm:$0xff]
    %v3555 = vld [vmem:[#allocation4 + $0x60] sm:$0xff]
    %v3556 = vld [vmem:[#allocation4 + $0x68] sm:$0xff]
    %v3557 = vld [vmem:[#allocation4 + $0x70] sm:$0xff]
    %v3558 = vld [vmem:[#allocation4 + $0x78] sm:$0xff]
    %v3559 = vstv %s3542
    %v3560 = vmul.f32 %v3559, %v3543
    %v3561 = vmul.f32 %v3559, %v3544
    %v3562 = vmul.f32 %v3559, %v3545
    %v3563 = vmul.f32 %v3559, %v3546
    %v3564 = vmul.f32 %v3559, %v3547
    %v3565 = vmul.f32 %v3559, %v3548
    %v3566 = vmul.f32 %v3559, %v3549
    %v3567 = vmul.f32 %v3559, %v3550
    %v3568 = vmul.f32 %v3559, %v3551
    %v3569 = vmul.f32 %v3559, %v3552
    %v3570 = vmul.f32 %v3559, %v3553
    %v3571 = vmul.f32 %v3559, %v3554
    %v3572 = vmul.f32 %v3559, %v3555
    %v3573 = vmul.f32 %v3559, %v3556
    %v3574 = vmul.f32 %v3559, %v3557
    %v3575 = vmul.f32 %v3559, %v3558
    %v3576 = vadd.f32 %v3526, %v3560
    %v3577 = vadd.f32 %v3527, %v3561
    %v3578 = vadd.f32 %v3528, %v3562
    %v3579 = vadd.f32 %v3529, %v3563
    %v3580 = vadd.f32 %v3530, %v3564
    %v3581 = vadd.f32 %v3531, %v3565
    %v3582 = vadd.f32 %v3532, %v3566
    %v3583 = vadd.f32 %v3533, %v3567
    %v3584 = vadd.f32 %v3534, %v3568
    %v3585 = vadd.f32 %v3535, %v3569
    %v3586 = vadd.f32 %v3536, %v3570
    %v3587 = vadd.f32 %v3537, %v3571
    %v3588 = vadd.f32 %v3538, %v3572
    %v3589 = vadd.f32 %v3539, %v3573
    %v3590 = vadd.f32 %v3540, %v3574
    %v3591 = vadd.f32 %v3541, %v3575
    %s3592 = sld [smem:[#allocation7 + $0xb]]
    %v3593 = vld [vmem:[#allocation5] sm:$0xff]
    %v3594 = vld [vmem:[#allocation5 + $0x8] sm:$0xff]
    %v3595 = vld [vmem:[#allocation5 + $0x10] sm:$0xff]
    %v3596 = vld [vmem:[#allocation5 + $0x18] sm:$0xff]
    %v3597 = vld [vmem:[#allocation5 + $0x20] sm:$0xff]
    %v3598 = vld [vmem:[#allocation5 + $0x28] sm:$0xff]
    %v3599 = vld [vmem:[#allocation5 + $0x30] sm:$0xff]
    %v3600 = vld [vmem:[#allocation5 + $0x38] sm:$0xff]
    %v3601 = vld [vmem:[#allocation5 + $0x40] sm:$0xff]
    %v3602 = vld [vmem:[#allocation5 + $0x48] sm:$0xff]
    %v3603 = vld [vmem:[#allocation5 + $0x50] sm:$0xff]
    %v3604 = vld [vmem:[#allocation5 + $0x58] sm:$0xff]
    %v3605 = vld [vmem:[#allocation5 + $0x60] sm:$0xff]
    %v3606 = vld [vmem:[#allocation5 + $0x68] sm:$0xff]
    %v3607 = vld [vmem:[#allocation5 + $0x70] sm:$0xff]
    %v3608 = vld [vmem:[#allocation5 + $0x78] sm:$0xff]
    %v3609 = vstv %s3592
    %v3610 = vmul.f32 %v3609, %v3593
    %v3611 = vmul.f32 %v3609, %v3594
    %v3612 = vmul.f32 %v3609, %v3595
    %v3613 = vmul.f32 %v3609, %v3596
    %v3614 = vmul.f32 %v3609, %v3597
    %v3615 = vmul.f32 %v3609, %v3598
    %v3616 = vmul.f32 %v3609, %v3599
    %v3617 = vmul.f32 %v3609, %v3600
    %v3618 = vmul.f32 %v3609, %v3601
    %v3619 = vmul.f32 %v3609, %v3602
    %v3620 = vmul.f32 %v3609, %v3603
    %v3621 = vmul.f32 %v3609, %v3604
    %v3622 = vmul.f32 %v3609, %v3605
    %v3623 = vmul.f32 %v3609, %v3606
    %v3624 = vmul.f32 %v3609, %v3607
    %v3625 = vmul.f32 %v3609, %v3608
    %v3626 = vadd.f32 %v3576, %v3610
    %v3627 = vadd.f32 %v3577, %v3611
    %v3628 = vadd.f32 %v3578, %v3612
    %v3629 = vadd.f32 %v3579, %v3613
    %v3630 = vadd.f32 %v3580, %v3614
    %v3631 = vadd.f32 %v3581, %v3615
    %v3632 = vadd.f32 %v3582, %v3616
    %v3633 = vadd.f32 %v3583, %v3617
    %v3634 = vadd.f32 %v3584, %v3618
    %v3635 = vadd.f32 %v3585, %v3619
    %v3636 = vadd.f32 %v3586, %v3620
    %v3637 = vadd.f32 %v3587, %v3621
    %v3638 = vadd.f32 %v3588, %v3622
    %v3639 = vadd.f32 %v3589, %v3623
    %v3640 = vadd.f32 %v3590, %v3624
    %v3641 = vadd.f32 %v3591, %v3625
    %s3642 = sld [smem:[#allocation7 + $0xc]]
    %v3643 = vld [vmem:[#allocation6] sm:$0xff]
    %v3644 = vld [vmem:[#allocation6 + $0x8] sm:$0xff]
    %v3645 = vld [vmem:[#allocation6 + $0x10] sm:$0xff]
    %v3646 = vld [vmem:[#allocation6 + $0x18] sm:$0xff]
    %v3647 = vld [vmem:[#allocation6 + $0x20] sm:$0xff]
    %v3648 = vld [vmem:[#allocation6 + $0x28] sm:$0xff]
    %v3649 = vld [vmem:[#allocation6 + $0x30] sm:$0xff]
    %v3650 = vld [vmem:[#allocation6 + $0x38] sm:$0xff]
    %v3651 = vld [vmem:[#allocation6 + $0x40] sm:$0xff]
    %v3652 = vld [vmem:[#allocation6 + $0x48] sm:$0xff]
    %v3653 = vld [vmem:[#allocation6 + $0x50] sm:$0xff]
    %v3654 = vld [vmem:[#allocation6 + $0x58] sm:$0xff]
    %v3655 = vld [vmem:[#allocation6 + $0x60] sm:$0xff]
    %v3656 = vld [vmem:[#allocation6 + $0x68] sm:$0xff]
    %v3657 = vld [vmem:[#allocation6 + $0x70] sm:$0xff]
    %v3658 = vld [vmem:[#allocation6 + $0x78] sm:$0xff]
    %v3659 = vstv %s3642
    %v3660 = vmul.f32 %v3659, %v3643
    %v3661 = vmul.f32 %v3659, %v3644
    %v3662 = vmul.f32 %v3659, %v3645
    %v3663 = vmul.f32 %v3659, %v3646
    %v3664 = vmul.f32 %v3659, %v3647
    %v3665 = vmul.f32 %v3659, %v3648
    %v3666 = vmul.f32 %v3659, %v3649
    %v3667 = vmul.f32 %v3659, %v3650
    %v3668 = vmul.f32 %v3659, %v3651
    %v3669 = vmul.f32 %v3659, %v3652
    %v3670 = vmul.f32 %v3659, %v3653
    %v3671 = vmul.f32 %v3659, %v3654
    %v3672 = vmul.f32 %v3659, %v3655
    %v3673 = vmul.f32 %v3659, %v3656
    %v3674 = vmul.f32 %v3659, %v3657
    %v3675 = vmul.f32 %v3659, %v3658
    %v3676 = vadd.f32 %v3626, %v3660
    %v3677 = vadd.f32 %v3627, %v3661
    %v3678 = vadd.f32 %v3628, %v3662
    %v3679 = vadd.f32 %v3629, %v3663
    %v3680 = vadd.f32 %v3630, %v3664
    %v3681 = vadd.f32 %v3631, %v3665
    %v3682 = vadd.f32 %v3632, %v3666
    %v3683 = vadd.f32 %v3633, %v3667
    %v3684 = vadd.f32 %v3634, %v3668
    %v3685 = vadd.f32 %v3635, %v3669
    %v3686 = vadd.f32 %v3636, %v3670
    %v3687 = vadd.f32 %v3637, %v3671
    %v3688 = vadd.f32 %v3638, %v3672
    %v3689 = vadd.f32 %v3639, %v3673
    %v3690 = vadd.f32 %v3640, %v3674
    %v3691 = vadd.f32 %v3641, %v3675
    %s3692 = sld [smem:[#allocation7 + $0xd]]
    %v3693 = vstv %s3692
    %v3694 = vmul.f32 %v3693, %v3492
    %v3695 = vmul.f32 %v3693, %v3493
    %v3696 = vmul.f32 %v3693, %v3494
    %v3697 = vmul.f32 %v3693, %v3495
    %v3698 = vmul.f32 %v3693, %v3496
    %v3699 = vmul.f32 %v3693, %v3497
    %v3700 = vmul.f32 %v3693, %v3498
    %v3701 = vmul.f32 %v3693, %v3499
    %v3702 = vmul.f32 %v3693, %v3500
    %v3703 = vmul.f32 %v3693, %v3501
    %v3704 = vmul.f32 %v3693, %v3502
    %v3705 = vmul.f32 %v3693, %v3503
    %v3706 = vmul.f32 %v3693, %v3504
    %v3707 = vmul.f32 %v3693, %v3505
    %v3708 = vmul.f32 %v3693, %v3506
    %v3709 = vmul.f32 %v3693, %v3507
    %v3710 = vadd.f32 %v3676, %v3694
    %v3711 = vadd.f32 %v3677, %v3695
    %v3712 = vadd.f32 %v3678, %v3696
    %v3713 = vadd.f32 %v3679, %v3697
    %v3714 = vadd.f32 %v3680, %v3698
    %v3715 = vadd.f32 %v3681, %v3699
    %v3716 = vadd.f32 %v3682, %v3700
    %v3717 = vadd.f32 %v3683, %v3701
    %v3718 = vadd.f32 %v3684, %v3702
    %v3719 = vadd.f32 %v3685, %v3703
    %v3720 = vadd.f32 %v3686, %v3704
    %v3721 = vadd.f32 %v3687, %v3705
    %v3722 = vadd.f32 %v3688, %v3706
    %v3723 = vadd.f32 %v3689, %v3707
    %v3724 = vadd.f32 %v3690, %v3708
    %v3725 = vadd.f32 %v3691, %v3709
    %v3726 = vld [vmem:[%s0] sm:$0xf]
    %v3727 = vld [vmem:[%s0 + $0x4] sm:$0xf]
    %v3728 = vld [vmem:[%s0 + $0x8] sm:$0xf]
    %v3729 = vld [vmem:[%s0 + $0xc] sm:$0xf]
    %v3730 = vld [vmem:[%s0 + $0x10] sm:$0xf]
    %v3731 = vld [vmem:[%s0 + $0x14] sm:$0xf]
    %v3732 = vld [vmem:[%s0 + $0x18] sm:$0xf]
    %v3733 = vld [vmem:[%s0 + $0x1c] sm:$0xf]
    %v3734 = vld [vmem:[%s0 + $0x20] sm:$0xf]
    %v3735 = vld [vmem:[%s0 + $0x24] sm:$0xf]
    %v3736 = vld [vmem:[%s0 + $0x28] sm:$0xf]
    %v3737 = vld [vmem:[%s0 + $0x2c] sm:$0xf]
    %v3738 = vld [vmem:[%s0 + $0x30] sm:$0xf]
    %v3739 = vld [vmem:[%s0 + $0x34] sm:$0xf]
    %v3740 = vld [vmem:[%s0 + $0x38] sm:$0xf]
    %v3741 = vld [vmem:[%s0 + $0x3c] sm:$0xf]
    %v3742 = vpack.c.bf16 %v3711, %v3710
    %v3743 = vpack.c.bf16 %v3713, %v3712
    %v3744 = vpack.c.bf16 %v3715, %v3714
    %v3745 = vpack.c.bf16 %v3717, %v3716
    %v3746 = vpack.c.bf16 %v3719, %v3718
    %v3747 = vpack.c.bf16 %v3721, %v3720
    %v3748 = vpack.c.bf16 %v3723, %v3722
    %v3749 = vpack.c.bf16 %v3725, %v3724
    %v3766 = vunpack.c.l.b16 %v3726
    %v3767 = vunpack.c.l.b16 %v3727
    %v3768 = vunpack.c.l.b16 %v3728
    %v3769 = vunpack.c.l.b16 %v3729
    %v3770 = vunpack.c.l.b16 %v3730
    %v3771 = vunpack.c.l.b16 %v3731
    %v3772 = vunpack.c.l.b16 %v3732
    %v3773 = vunpack.c.l.b16 %v3733
    %v3774 = vunpack.c.l.b16 %v3734
    %v3775 = vunpack.c.l.b16 %v3735
    %v3776 = vunpack.c.l.b16 %v3736
    %v3777 = vunpack.c.l.b16 %v3737
    %v3778 = vunpack.c.l.b16 %v3738
    %v3779 = vunpack.c.l.b16 %v3739
    %v3780 = vunpack.c.l.b16 %v3740
    %v3781 = vunpack.c.l.b16 %v3741
    %v3782 = vpack.c.b16 %v3767, %v3766
    %v3783 = vpack.c.b16 %v3769, %v3768
    %v3784 = vpack.c.b16 %v3771, %v3770
    %v3785 = vpack.c.b16 %v3773, %v3772
    %v3786 = vpack.c.b16 %v3775, %v3774
    %v3787 = vpack.c.b16 %v3777, %v3776
    %v3788 = vpack.c.b16 %v3779, %v3778
    %v3789 = vpack.c.b16 %v3781, %v3780
    %3798 = vmatprep.subr.bf16.mxu0 0
    %3799 = vmatpush1.bf16.msra.mxu0 %v3742
    %3800 = vmatprep.subr.bf16.mxu0 0
    %3801 = vmatpush1.bf16.msra.mxu0 %v3743
    %3802 = vmatprep.subr.bf16.mxu0 0
    %3803 = vmatpush1.bf16.msra.mxu0 %v3744
    %3804 = vmatprep.subr.bf16.mxu0 0
    %3805 = vmatpush1.bf16.msra.mxu0 %v3745
    %3806 = vmatprep.subr.bf16.mxu0 0
    %3807 = vmatpush1.bf16.msra.mxu0 %v3746
    %3808 = vmatprep.subr.bf16.mxu0 0
    %3809 = vmatpush1.bf16.msra.mxu0 %v3747
    %3810 = vmatprep.subr.bf16.mxu0 0
    %3811 = vmatpush1.bf16.msra.mxu0 %v3748
    %3812 = vmatprep.subr.bf16.mxu0 0
    %3813 = vmatpush1.bf16.msra.mxu0 %v3749
    %3814 = vmatprep.subr.bf16.mxu0 0
    %3815 = vmatpush1.bf16.msra.mxu0 0
    %3816 = vmatprep.subr.bf16.mxu0 0
    %3817 = vmatpush1.bf16.msra.mxu0 0
    %3818 = vmatprep.subr.bf16.mxu0 0
    %3819 = vmatpush1.bf16.msra.mxu0 0
    %3820 = vmatprep.subr.bf16.mxu0 0
    %3821 = vmatpush1.bf16.msra.mxu0 0
    %3822 = vmatprep.subr.bf16.mxu0 0
    %3823 = vmatpush1.bf16.msra.mxu0 0
    %3824 = vmatprep.subr.bf16.mxu0 0
    %3825 = vmatpush1.bf16.msra.mxu0 0
    %3826 = vmatprep.subr.bf16.mxu0 0
    %3827 = vmatpush1.bf16.msra.mxu0 0
    %3828 = vmatprep.subr.bf16.mxu0 0
    %3829 = vmatpush1.bf16.msra.mxu0 0
    %3830 = vmatprep.mubr.bf16.mxu0 0
    %3831 = vmatmul.mubr.bf16.gmra.mrb[0].mxu0 %v3782
    %v3832 = vpop.f32.mrb[0].mxu0
    %v3833 = vadd.f32 0.0, %v3832
    %v3834 = vpop.f32.mrb[0].mxu0
    %v3835 = vpop.f32.mrb[0].mxu0
    %v3836 = vadd.f32 0.0, %v3835
    %v3837 = vpop.f32.mrb[0].mxu0
    %3838 = vmatprep.mubr.bf16.mxu0 0
    %3839 = vmatmul.mubr.bf16.gmra.mrb[0].mxu0 %v3783
    %v3840 = vpop.f32.mrb[0].mxu0
    %v3841 = vadd.f32 0.0, %v3840
    %v3842 = vpop.f32.mrb[0].mxu0
    %v3843 = vpop.f32.mrb[0].mxu0
    %v3844 = vadd.f32 0.0, %v3843
    %v3845 = vpop.f32.mrb[0].mxu0
    %3846 = vmatprep.mubr.bf16.mxu0 0
    %3847 = vmatmul.mubr.bf16.gmra.mrb[0].mxu0 %v3784
    %v3848 = vpop.f32.mrb[0].mxu0
    %v3849 = vadd.f32 0.0, %v3848
    %v3850 = vpop.f32.mrb[0].mxu0
    %v3851 = vpop.f32.mrb[0].mxu0
    %v3852 = vadd.f32 0.0, %v3851
    %v3853 = vpop.f32.mrb[0].mxu0
    %3854 = vmatprep.mubr.bf16.mxu0 0
    %3855 = vmatmul.mubr.bf16.gmra.mrb[0].mxu0 %v3785
    %v3856 = vpop.f32.mrb[0].mxu0
    %v3857 = vadd.f32 0.0, %v3856
    %v3858 = vpop.f32.mrb[0].mxu0
    %v3859 = vpop.f32.mrb[0].mxu0
    %v3860 = vadd.f32 0.0, %v3859
    %v3861 = vpop.f32.mrb[0].mxu0
    %3862 = vmatprep.mubr.bf16.mxu0 0
    %3863 = vmatmul.mubr.bf16.gmra.mrb[0].mxu0 %v3786
    %v3864 = vpop.f32.mrb[0].mxu0
    %v3865 = vadd.f32 0.0, %v3864
    %v3866 = vpop.f32.mrb[0].mxu0
    %v3867 = vpop.f32.mrb[0].mxu0
    %v3868 = vadd.f32 0.0, %v3867
    %v3869 = vpop.f32.mrb[0].mxu0
    %3870 = vmatprep.mubr.bf16.mxu0 0
    %3871 = vmatmul.mubr.bf16.gmra.mrb[0].mxu0 %v3787
    %v3872 = vpop.f32.mrb[0].mxu0
    %v3873 = vadd.f32 0.0, %v3872
    %v3874 = vpop.f32.mrb[0].mxu0
    %v3875 = vpop.f32.mrb[0].mxu0
    %v3876 = vadd.f32 0.0, %v3875
    %v3877 = vpop.f32.mrb[0].mxu0
    %3878 = vmatprep.mubr.bf16.mxu0 0
    %3879 = vmatmul.mubr.bf16.gmra.mrb[0].mxu0 %v3788
    %v3880 = vpop.f32.mrb[0].mxu0
    %v3881 = vadd.f32 0.0, %v3880
    %v3882 = vpop.f32.mrb[0].mxu0
    %v3883 = vpop.f32.mrb[0].mxu0
    %v3884 = vadd.f32 0.0, %v3883
    %v3885 = vpop.f32.mrb[0].mxu0
    %3886 = vmatprep.mubr.bf16.mxu0 0
    %3887 = vmatmul.mubr.bf16.gmra.mrb[0].mxu0 %v3789
    %v3888 = vpop.f32.mrb[0].mxu0
    %v3889 = vadd.f32 0.0, %v3888
    %v3890 = vpop.f32.mrb[0].mxu0
    %v3891 = vpop.f32.mrb[0].mxu0
    %v3892 = vadd.f32 0.0, %v3891
    %v3893 = vpop.f32.mrb[0].mxu0
    %3894 = vdwg.mxu0
    %3895 = vst [vmem:[#allocation2] sm:$0xff] %v3833
    %3896 = vst [vmem:[#allocation2 + $0x10] sm:$0xff] %v3836
    %3897 = vst [vmem:[#allocation2 + $0x20] sm:$0xff] %v3841
    %3898 = vst [vmem:[#allocation2 + $0x30] sm:$0xff] %v3844
    %3899 = vst [vmem:[#allocation2 + $0x40] sm:$0xff] %v3849
    %3900 = vst [vmem:[#allocation2 + $0x50] sm:$0xff] %v3852
    %3901 = vst [vmem:[#allocation2 + $0x60] sm:$0xff] %v3857
    %3902 = vst [vmem:[#allocation2 + $0x70] sm:$0xff] %v3860
    %3903 = vst [vmem:[#allocation2 + $0x80] sm:$0xff] %v3865
    %3904 = vst [vmem:[#allocation2 + $0x90] sm:$0xff] %v3868
    %3905 = vst [vmem:[#allocation2 + $0xa0] sm:$0xff] %v3873
    %3906 = vst [vmem:[#allocation2 + $0xb0] sm:$0xff] %v3876
    %3907 = vst [vmem:[#allocation2 + $0xc0] sm:$0xff] %v3881
    %3908 = vst [vmem:[#allocation2 + $0xd0] sm:$0xff] %v3884
    %3909 = vst [vmem:[#allocation2 + $0xe0] sm:$0xff] %v3889
    %3910 = vst [vmem:[#allocation2 + $0xf0] sm:$0xff] %v3892
    %v3911 = vld [vmem:[#allocation2] sm:$0xff]
    %v3912 = vld [vmem:[#allocation2 + $0x8] sm:$0xff]
    %v3913 = vld [vmem:[#allocation2 + $0x10] sm:$0xff]
    %v3914 = vld [vmem:[#allocation2 + $0x18] sm:$0xff]
    %v3915 = vld [vmem:[#allocation2 + $0x20] sm:$0xff]
    %v3916 = vld [vmem:[#allocation2 + $0x28] sm:$0xff]
    %v3917 = vld [vmem:[#allocation2 + $0x30] sm:$0xff]
    %v3918 = vld [vmem:[#allocation2 + $0x38] sm:$0xff]
    %v3919 = vld [vmem:[#allocation2 + $0x40] sm:$0xff]
    %v3920 = vld [vmem:[#allocation2 + $0x48] sm:$0xff]
    %v3921 = vld [vmem:[#allocation2 + $0x50] sm:$0xff]
    %v3922 = vld [vmem:[#allocation2 + $0x58] sm:$0xff]
    %v3923 = vld [vmem:[#allocation2 + $0x60] sm:$0xff]
    %v3924 = vld [vmem:[#allocation2 + $0x68] sm:$0xff]
    %v3925 = vld [vmem:[#allocation2 + $0x70] sm:$0xff]
    %v3926 = vld [vmem:[#allocation2 + $0x78] sm:$0xff]
    %v3927 = vld [vmem:[#allocation2 + $0x80] sm:$0xff]
    %v3928 = vld [vmem:[#allocation2 + $0x88] sm:$0xff]
    %v3929 = vld [vmem:[#allocation2 + $0x90] sm:$0xff]
    %v3930 = vld [vmem:[#allocation2 + $0x98] sm:$0xff]
    %v3931 = vld [vmem:[#allocation2 + $0xa0] sm:$0xff]
    %v3932 = vld [vmem:[#allocation2 + $0xa8] sm:$0xff]
    %v3933 = vld [vmem:[#allocation2 + $0xb0] sm:$0xff]
    %v3934 = vld [vmem:[#allocation2 + $0xb8] sm:$0xff]
    %v3935 = vld [vmem:[#allocation2 + $0xc0] sm:$0xff]
    %v3936 = vld [vmem:[#allocation2 + $0xc8] sm:$0xff]
    %v3937 = vld [vmem:[#allocation2 + $0xd0] sm:$0xff]
    %v3938 = vld [vmem:[#allocation2 + $0xd8] sm:$0xff]
    %v3939 = vld [vmem:[#allocation2 + $0xe0] sm:$0xff]
    %v3940 = vld [vmem:[#allocation2 + $0xe8] sm:$0xff]
    %v3941 = vld [vmem:[#allocation2 + $0xf0] sm:$0xff]
    %v3942 = vld [vmem:[#allocation2 + $0xf8] sm:$0xff]
    %s3943 = scalar_lea.vmem %s4, 1280
    %v3944 = vld [vmem:[%s3943] sm:$0xff]
    %v3945 = vld [vmem:[%s3943 + $0x8] sm:$0xff]
    %v3946 = vld [vmem:[%s3943 + $0x10] sm:$0xff]
    %v3947 = vld [vmem:[%s3943 + $0x18] sm:$0xff]
    %v3948 = vld [vmem:[%s3943 + $0x20] sm:$0xff]
    %v3949 = vld [vmem:[%s3943 + $0x28] sm:$0xff]
    %v3950 = vld [vmem:[%s3943 + $0x30] sm:$0xff]
    %v3951 = vld [vmem:[%s3943 + $0x38] sm:$0xff]
    %v3952 = vld [vmem:[%s3943 + $0x40] sm:$0xff]
    %v3953 = vld [vmem:[%s3943 + $0x48] sm:$0xff]
    %v3954 = vld [vmem:[%s3943 + $0x50] sm:$0xff]
    %v3955 = vld [vmem:[%s3943 + $0x58] sm:$0xff]
    %v3956 = vld [vmem:[%s3943 + $0x60] sm:$0xff]
    %v3957 = vld [vmem:[%s3943 + $0x68] sm:$0xff]
    %v3958 = vld [vmem:[%s3943 + $0x70] sm:$0xff]
    %v3959 = vld [vmem:[%s3943 + $0x78] sm:$0xff]
    %v3960 = vld [vmem:[%s3943 + $0x80] sm:$0xff]
    %v3961 = vld [vmem:[%s3943 + $0x88] sm:$0xff]
    %v3962 = vld [vmem:[%s3943 + $0x90] sm:$0xff]
    %v3963 = vld [vmem:[%s3943 + $0x98] sm:$0xff]
    %v3964 = vld [vmem:[%s3943 + $0xa0] sm:$0xff]
    %v3965 = vld [vmem:[%s3943 + $0xa8] sm:$0xff]
    %v3966 = vld [vmem:[%s3943 + $0xb0] sm:$0xff]
    %v3967 = vld [vmem:[%s3943 + $0xb8] sm:$0xff]
    %v3968 = vld [vmem:[%s3943 + $0xc0] sm:$0xff]
    %v3969 = vld [vmem:[%s3943 + $0xc8] sm:$0xff]
    %v3970 = vld [vmem:[%s3943 + $0xd0] sm:$0xff]
    %v3971 = vld [vmem:[%s3943 + $0xd8] sm:$0xff]
    %v3972 = vld [vmem:[%s3943 + $0xe0] sm:$0xff]
    %v3973 = vld [vmem:[%s3943 + $0xe8] sm:$0xff]
    %v3974 = vld [vmem:[%s3943 + $0xf0] sm:$0xff]
    %v3975 = vld [vmem:[%s3943 + $0xf8] sm:$0xff]
    %s3976 = scalar_lea.vmem %s5, 5
    %v3977 = vld [vmem:[%s3976] sm:$0x1]
    %v3979 = vlaneseq
    %v3980 = vshrl.u32 %v3979, 7
    %v3981 = vsub.s32 0, %v3980
    %v3982 = vrot.slane %v3977, %v3981
    %3984 = vmatprep.subr.mxu0 0.0
    %3985 = vmatpush1.msra.mxu0 %v3944
    %3986 = vmatprep.subr.mxu0 0.0
    %3987 = vmatpush1.msra.mxu0 %v3945
    %3988 = vmatprep.subr.mxu0 0.0
    %3989 = vmatpush1.msra.mxu0 %v3946
    %3990 = vmatprep.subr.mxu0 0.0
    %3991 = vmatpush1.msra.mxu0 %v3947
    %3992 = vmatprep.subr.mxu0 0.0
    %3993 = vmatpush1.msra.mxu0 %v3948
    %3994 = vmatprep.subr.mxu0 0.0
    %3995 = vmatpush1.msra.mxu0 %v3949
    %3996 = vmatprep.subr.mxu0 0.0
    %3997 = vmatpush1.msra.mxu0 %v3950
    %3998 = vmatprep.subr.mxu0 0.0
    %3999 = vmatpush1.msra.mxu0 %v3951
    %4000 = vmatprep.subr.mxu0 0.0
    %4001 = vmatpush1.msra.mxu0 %v3952
    %4002 = vmatprep.subr.mxu0 0.0
    %4003 = vmatpush1.msra.mxu0 %v3953
    %4004 = vmatprep.subr.mxu0 0.0
    %4005 = vmatpush1.msra.mxu0 %v3954
    %4006 = vmatprep.subr.mxu0 0.0
    %4007 = vmatpush1.msra.mxu0 %v3955
    %4008 = vmatprep.subr.mxu0 0.0
    %4009 = vmatpush1.msra.mxu0 %v3956
    %4010 = vmatprep.subr.mxu0 0.0
    %4011 = vmatpush1.msra.mxu0 %v3957
    %4012 = vmatprep.subr.mxu0 0.0
    %4013 = vmatpush1.msra.mxu0 %v3958
    %4014 = vmatprep.subr.mxu0 0.0
    %4015 = vmatpush1.msra.mxu0 %v3959
    %4016 = vmatprep.subr.mxu0 0.0
    %4017 = vmatpush1.msra.mxu0 %v3960
    %4018 = vmatprep.subr.mxu0 0.0
    %4019 = vmatpush1.msra.mxu0 %v3961
    %4020 = vmatprep.subr.mxu0 0.0
    %4021 = vmatpush1.msra.mxu0 %v3962
    %4022 = vmatprep.subr.mxu0 0.0
    %4023 = vmatpush1.msra.mxu0 %v3963
    %4024 = vmatprep.subr.mxu0 0.0
    %4025 = vmatpush1.msra.mxu0 %v3964
    %4026 = vmatprep.subr.mxu0 0.0
    %4027 = vmatpush1.msra.mxu0 %v3965
    %4028 = vmatprep.subr.mxu0 0.0
    %4029 = vmatpush1.msra.mxu0 %v3966
    %4030 = vmatprep.subr.mxu0 0.0
    %4031 = vmatpush1.msra.mxu0 %v3967
    %4032 = vmatprep.subr.mxu0 0.0
    %4033 = vmatpush1.msra.mxu0 %v3968
    %4034 = vmatprep.subr.mxu0 0.0
    %4035 = vmatpush1.msra.mxu0 %v3969
    %4036 = vmatprep.subr.mxu0 0.0
    %4037 = vmatpush1.msra.mxu0 %v3970
    %4038 = vmatprep.subr.mxu0 0.0
    %4039 = vmatpush1.msra.mxu0 %v3971
    %4040 = vmatprep.subr.mxu0 0.0
    %4041 = vmatpush1.msra.mxu0 %v3972
    %4042 = vmatprep.subr.mxu0 0.0
    %4043 = vmatpush1.msra.mxu0 %v3973
    %4044 = vmatprep.subr.mxu0 0.0
    %4045 = vmatpush1.msra.mxu0 %v3974
    %4046 = vmatprep.subr.mxu0 0.0
    %4047 = vmatpush1.msra.mxu0 %v3975
    %4048 = vmatprep.mubr.f32.mxu0 %v3912
    %4049 = vmatmul.mubr.f32.gmra.mrb[0].mxu0 %v3911
    %v4050 = vpop.f32.mrb[0].mxu0
    %v4051 = vadd.f32 %v3982, %v4050
    %v4052 = vpop.f32.mrb[0].mxu0
    %4053 = vmatprep.mubr.f32.mxu0 %v3914
    %4054 = vmatmul.mubr.f32.gmra.mrb[0].mxu0 %v3913
    %v4055 = vpop.f32.mrb[0].mxu0
    %v4056 = vadd.f32 %v3982, %v4055
    %v4057 = vpop.f32.mrb[0].mxu0
    %4058 = vmatprep.mubr.f32.mxu0 %v3916
    %4059 = vmatmul.mubr.f32.gmra.mrb[0].mxu0 %v3915
    %v4060 = vpop.f32.mrb[0].mxu0
    %v4061 = vadd.f32 %v3982, %v4060
    %v4062 = vpop.f32.mrb[0].mxu0
    %4063 = vmatprep.mubr.f32.mxu0 %v3918
    %4064 = vmatmul.mubr.f32.gmra.mrb[0].mxu0 %v3917
    %v4065 = vpop.f32.mrb[0].mxu0
    %v4066 = vadd.f32 %v3982, %v4065
    %v4067 = vpop.f32.mrb[0].mxu0
    %4068 = vmatprep.mubr.f32.mxu0 %v3920
    %4069 = vmatmul.mubr.f32.gmra.mrb[0].mxu0 %v3919
    %v4070 = vpop.f32.mrb[0].mxu0
    %v4071 = vadd.f32 %v3982, %v4070
    %v4072 = vpop.f32.mrb[0].mxu0
    %4073 = vmatprep.mubr.f32.mxu0 %v3922
    %4074 = vmatmul.mubr.f32.gmra.mrb[0].mxu0 %v3921
    %v4075 = vpop.f32.mrb[0].mxu0
    %v4076 = vadd.f32 %v3982, %v4075
    %v4077 = vpop.f32.mrb[0].mxu0
    %4078 = vmatprep.mubr.f32.mxu0 %v3924
    %4079 = vmatmul.mubr.f32.gmra.mrb[0].mxu0 %v3923
    %v4080 = vpop.f32.mrb[0].mxu0
    %v4081 = vadd.f32 %v3982, %v4080
    %v4082 = vpop.f32.mrb[0].mxu0
    %4083 = vmatprep.mubr.f32.mxu0 %v3926
    %4084 = vmatmul.mubr.f32.gmra.mrb[0].mxu0 %v3925
    %v4085 = vpop.f32.mrb[0].mxu0
    %v4086 = vadd.f32 %v3982, %v4085
    %v4087 = vpop.f32.mrb[0].mxu0
    %4088 = vmatprep.mubr.f32.mxu0 %v3928
    %4089 = vmatmul.mubr.f32.gmra.mrb[0].mxu0 %v3927
    %v4090 = vpop.f32.mrb[0].mxu0
    %v4091 = vadd.f32 %v3982, %v4090
    %v4092 = vpop.f32.mrb[0].mxu0
    %4093 = vmatprep.mubr.f32.mxu0 %v3930
    %4094 = vmatmul.mubr.f32.gmra.mrb[0].mxu0 %v3929
    %v4095 = vpop.f32.mrb[0].mxu0
    %v4096 = vadd.f32 %v3982, %v4095
    %v4097 = vpop.f32.mrb[0].mxu0
    %4098 = vmatprep.mubr.f32.mxu0 %v3932
    %4099 = vmatmul.mubr.f32.gmra.mrb[0].mxu0 %v3931
    %v4100 = vpop.f32.mrb[0].mxu0
    %v4101 = vadd.f32 %v3982, %v4100
    %v4102 = vpop.f32.mrb[0].mxu0
    %4103 = vmatprep.mubr.f32.mxu0 %v3934
    %4104 = vmatmul.mubr.f32.gmra.mrb[0].mxu0 %v3933
    %v4105 = vpop.f32.mrb[0].mxu0
    %v4106 = vadd.f32 %v3982, %v4105
    %v4107 = vpop.f32.mrb[0].mxu0
    %4108 = vmatprep.mubr.f32.mxu0 %v3936
    %4109 = vmatmul.mubr.f32.gmra.mrb[0].mxu0 %v3935
    %v4110 = vpop.f32.mrb[0].mxu0
    %v4111 = vadd.f32 %v3982, %v4110
    %v4112 = vpop.f32.mrb[0].mxu0
    %4113 = vmatprep.mubr.f32.mxu0 %v3938
    %4114 = vmatmul.mubr.f32.gmra.mrb[0].mxu0 %v3937
    %v4115 = vpop.f32.mrb[0].mxu0
    %v4116 = vadd.f32 %v3982, %v4115
    %v4117 = vpop.f32.mrb[0].mxu0
    %4118 = vmatprep.mubr.f32.mxu0 %v3940
    %4119 = vmatmul.mubr.f32.gmra.mrb[0].mxu0 %v3939
    %v4120 = vpop.f32.mrb[0].mxu0
    %v4121 = vadd.f32 %v3982, %v4120
    %v4122 = vpop.f32.mrb[0].mxu0
    %4123 = vmatprep.mubr.f32.mxu0 %v3942
    %4124 = vmatmul.mubr.f32.gmra.mrb[0].mxu0 %v3941
    %v4125 = vpop.f32.mrb[0].mxu0
    %v4126 = vadd.f32 %v3982, %v4125
    %v4127 = vpop.f32.mrb[0].mxu0
    %4128 = vdwg.mxu0
    %v4129 = vld [vmem:[%s1] sm:$0xf]
    %v4130 = vld [vmem:[%s1 + $0x4] sm:$0xf]
    %v4131 = vld [vmem:[%s1 + $0x8] sm:$0xf]
    %v4132 = vld [vmem:[%s1 + $0xc] sm:$0xf]
    %v4133 = vld [vmem:[%s1 + $0x10] sm:$0xf]
    %v4134 = vld [vmem:[%s1 + $0x14] sm:$0xf]
    %v4135 = vld [vmem:[%s1 + $0x18] sm:$0xf]
    %v4136 = vld [vmem:[%s1 + $0x1c] sm:$0xf]
    %v4137 = vld [vmem:[%s1 + $0x20] sm:$0xf]
    %v4138 = vld [vmem:[%s1 + $0x24] sm:$0xf]
    %v4139 = vld [vmem:[%s1 + $0x28] sm:$0xf]
    %v4140 = vld [vmem:[%s1 + $0x2c] sm:$0xf]
    %v4141 = vld [vmem:[%s1 + $0x30] sm:$0xf]
    %v4142 = vld [vmem:[%s1 + $0x34] sm:$0xf]
    %v4143 = vld [vmem:[%s1 + $0x38] sm:$0xf]
    %v4144 = vld [vmem:[%s1 + $0x3c] sm:$0xf]
    %v4145 = vpack.c.bf16 %v4056, %v4051
    %v4146 = vpack.c.bf16 %v4066, %v4061
    %v4147 = vpack.c.bf16 %v4076, %v4071
    %v4148 = vpack.c.bf16 %v4086, %v4081
    %v4149 = vpack.c.bf16 %v4096, %v4091
    %v4150 = vpack.c.bf16 %v4106, %v4101
    %v4151 = vpack.c.bf16 %v4116, %v4111
    %v4152 = vpack.c.bf16 %v4126, %v4121
    %v4169 = vunpack.c.l.b16 %v4129
    %v4170 = vunpack.c.l.b16 %v4130
    %v4171 = vunpack.c.l.b16 %v4131
    %v4172 = vunpack.c.l.b16 %v4132
    %v4173 = vunpack.c.l.b16 %v4133
    %v4174 = vunpack.c.l.b16 %v4134
    %v4175 = vunpack.c.l.b16 %v4135
    %v4176 = vunpack.c.l.b16 %v4136
    %v4177 = vunpack.c.l.b16 %v4137
    %v4178 = vunpack.c.l.b16 %v4138
    %v4179 = vunpack.c.l.b16 %v4139
    %v4180 = vunpack.c.l.b16 %v4140
    %v4181 = vunpack.c.l.b16 %v4141
    %v4182 = vunpack.c.l.b16 %v4142
    %v4183 = vunpack.c.l.b16 %v4143
    %v4184 = vunpack.c.l.b16 %v4144
    %v4185 = vpack.c.b16 %v4170, %v4169
    %v4186 = vpack.c.b16 %v4172, %v4171
    %v4187 = vpack.c.b16 %v4174, %v4173
    %v4188 = vpack.c.b16 %v4176, %v4175
    %v4189 = vpack.c.b16 %v4178, %v4177
    %v4190 = vpack.c.b16 %v4180, %v4179
    %v4191 = vpack.c.b16 %v4182, %v4181
    %v4192 = vpack.c.b16 %v4184, %v4183
    %4201 = vmatprep.subr.bf16.mxu0 0
    %4202 = vmatpush1.bf16.msra.mxu0 %v4145
    %4203 = vmatprep.subr.bf16.mxu0 0
    %4204 = vmatpush1.bf16.msra.mxu0 %v4146
    %4205 = vmatprep.subr.bf16.mxu0 0
    %4206 = vmatpush1.bf16.msra.mxu0 %v4147
    %4207 = vmatprep.subr.bf16.mxu0 0
    %4208 = vmatpush1.bf16.msra.mxu0 %v4148
    %4209 = vmatprep.subr.bf16.mxu0 0
    %4210 = vmatpush1.bf16.msra.mxu0 %v4149
    %4211 = vmatprep.subr.bf16.mxu0 0
    %4212 = vmatpush1.bf16.msra.mxu0 %v4150
    %4213 = vmatprep.subr.bf16.mxu0 0
    %4214 = vmatpush1.bf16.msra.mxu0 %v4151
    %4215 = vmatprep.subr.bf16.mxu0 0
    %4216 = vmatpush1.bf16.msra.mxu0 %v4152
    %4217 = vmatprep.subr.bf16.mxu0 0
    %4218 = vmatpush1.bf16.msra.mxu0 0
    %4219 = vmatprep.subr.bf16.mxu0 0
    %4220 = vmatpush1.bf16.msra.mxu0 0
    %4221 = vmatprep.subr.bf16.mxu0 0
    %4222 = vmatpush1.bf16.msra.mxu0 0
    %4223 = vmatprep.subr.bf16.mxu0 0
    %4224 = vmatpush1.bf16.msra.mxu0 0
    %4225 = vmatprep.subr.bf16.mxu0 0
    %4226 = vmatpush1.bf16.msra.mxu0 0
    %4227 = vmatprep.subr.bf16.mxu0 0
    %4228 = vmatpush1.bf16.msra.mxu0 0
    %4229 = vmatprep.subr.bf16.mxu0 0
    %4230 = vmatpush1.bf16.msra.mxu0 0
    %4231 = vmatprep.subr.bf16.mxu0 0
    %4232 = vmatpush1.bf16.msra.mxu0 0
    %4233 = vmatprep.mubr.bf16.mxu0 0
    %4234 = vmatmul.mubr.bf16.gmra.mrb[0].mxu0 %v4185
    %v4235 = vpop.f32.mrb[0].mxu0
    %v4236 = vadd.f32 0.0, %v4235
    %v4237 = vpop.f32.mrb[0].mxu0
    %v4238 = vpop.f32.mrb[0].mxu0
    %v4239 = vadd.f32 0.0, %v4238
    %v4240 = vpop.f32.mrb[0].mxu0
    %4241 = vmatprep.mubr.bf16.mxu0 0
    %4242 = vmatmul.mubr.bf16.gmra.mrb[0].mxu0 %v4186
    %v4243 = vpop.f32.mrb[0].mxu0
    %v4244 = vadd.f32 0.0, %v4243
    %v4245 = vpop.f32.mrb[0].mxu0
    %v4246 = vpop.f32.mrb[0].mxu0
    %v4247 = vadd.f32 0.0, %v4246
    %v4248 = vpop.f32.mrb[0].mxu0
    %4249 = vmatprep.mubr.bf16.mxu0 0
    %4250 = vmatmul.mubr.bf16.gmra.mrb[0].mxu0 %v4187
    %v4251 = vpop.f32.mrb[0].mxu0
    %v4252 = vadd.f32 0.0, %v4251
    %v4253 = vpop.f32.mrb[0].mxu0
    %v4254 = vpop.f32.mrb[0].mxu0
    %v4255 = vadd.f32 0.0, %v4254
    %v4256 = vpop.f32.mrb[0].mxu0
    %4257 = vmatprep.mubr.bf16.mxu0 0
    %4258 = vmatmul.mubr.bf16.gmra.mrb[0].mxu0 %v4188
    %v4259 = vpop.f32.mrb[0].mxu0
    %v4260 = vadd.f32 0.0, %v4259
    %v4261 = vpop.f32.mrb[0].mxu0
    %v4262 = vpop.f32.mrb[0].mxu0
    %v4263 = vadd.f32 0.0, %v4262
    %v4264 = vpop.f32.mrb[0].mxu0
    %4265 = vmatprep.mubr.bf16.mxu0 0
    %4266 = vmatmul.mubr.bf16.gmra.mrb[0].mxu0 %v4189
    %v4267 = vpop.f32.mrb[0].mxu0
    %v4268 = vadd.f32 0.0, %v4267
    %v4269 = vpop.f32.mrb[0].mxu0
    %v4270 = vpop.f32.mrb[0].mxu0
    %v4271 = vadd.f32 0.0, %v4270
    %v4272 = vpop.f32.mrb[0].mxu0
    %4273 = vmatprep.mubr.bf16.mxu0 0
    %4274 = vmatmul.mubr.bf16.gmra.mrb[0].mxu0 %v4190
    %v4275 = vpop.f32.mrb[0].mxu0
    %v4276 = vadd.f32 0.0, %v4275
    %v4277 = vpop.f32.mrb[0].mxu0
    %v4278 = vpop.f32.mrb[0].mxu0
    %v4279 = vadd.f32 0.0, %v4278
    %v4280 = vpop.f32.mrb[0].mxu0
    %4281 = vmatprep.mubr.bf16.mxu0 0
    %4282 = vmatmul.mubr.bf16.gmra.mrb[0].mxu0 %v4191
    %v4283 = vpop.f32.mrb[0].mxu0
    %v4284 = vadd.f32 0.0, %v4283
    %v4285 = vpop.f32.mrb[0].mxu0
    %v4286 = vpop.f32.mrb[0].mxu0
    %v4287 = vadd.f32 0.0, %v4286
    %v4288 = vpop.f32.mrb[0].mxu0
    %4289 = vmatprep.mubr.bf16.mxu0 0
    %4290 = vmatmul.mubr.bf16.gmra.mrb[0].mxu0 %v4192
    %v4291 = vpop.f32.mrb[0].mxu0
    %v4292 = vadd.f32 0.0, %v4291
    %v4293 = vpop.f32.mrb[0].mxu0
    %v4294 = vpop.f32.mrb[0].mxu0
    %v4295 = vadd.f32 0.0, %v4294
    %v4296 = vpop.f32.mrb[0].mxu0
    %4297 = vdwg.mxu0
    %v4298 = vmax.f32 %v4236, 0.0
    %v4299 = vmax.f32 %v4239, 0.0
    %v4300 = vmax.f32 %v4244, 0.0
    %v4301 = vmax.f32 %v4247, 0.0
    %v4302 = vmax.f32 %v4252, 0.0
    %v4303 = vmax.f32 %v4255, 0.0
    %v4304 = vmax.f32 %v4260, 0.0
    %v4305 = vmax.f32 %v4263, 0.0
    %v4306 = vmax.f32 %v4268, 0.0
    %v4307 = vmax.f32 %v4271, 0.0
    %v4308 = vmax.f32 %v4276, 0.0
    %v4309 = vmax.f32 %v4279, 0.0
    %v4310 = vmax.f32 %v4284, 0.0
    %v4311 = vmax.f32 %v4287, 0.0
    %v4312 = vmax.f32 %v4292, 0.0
    %v4313 = vmax.f32 %v4295, 0.0
    %4314 = vst [vmem:[%s7] sm:$0xff] %v4298
    %4315 = vst [vmem:[%s7 + $0x8] sm:$0xff] %v4299
    %4316 = vst [vmem:[%s7 + $0x10] sm:$0xff] %v4300
    %4317 = vst [vmem:[%s7 + $0x18] sm:$0xff] %v4301
    %4318 = vst [vmem:[%s7 + $0x20] sm:$0xff] %v4302
    %4319 = vst [vmem:[%s7 + $0x28] sm:$0xff] %v4303
    %4320 = vst [vmem:[%s7 + $0x30] sm:$0xff] %v4304
    %4321 = vst [vmem:[%s7 + $0x38] sm:$0xff] %v4305
    %4322 = vst [vmem:[%s7 + $0x40] sm:$0xff] %v4306
    %4323 = vst [vmem:[%s7 + $0x48] sm:$0xff] %v4307
    %4324 = vst [vmem:[%s7 + $0x50] sm:$0xff] %v4308
    %4325 = vst [vmem:[%s7 + $0x58] sm:$0xff] %v4309
    %4326 = vst [vmem:[%s7 + $0x60] sm:$0xff] %v4310
    %4327 = vst [vmem:[%s7 + $0x68] sm:$0xff] %v4311
    %4328 = vst [vmem:[%s7 + $0x70] sm:$0xff] %v4312
    %4329 = vst [vmem:[%s7 + $0x78] sm:$0xff] %v4313
    // Predicated region
    $region34: #{gnn_forward.1} parent=1 // pred_check
      _
    $region35: #{gnn_forward.1} parent=1 // pred_check_branch
      %4331 = sbr.rel (0) target = $region37
    $region36: #{gnn_forward.1} parent=1 // pred_region
      _
    $region37: #{gnn_forward.1} parent=1 // pred_fallthru
      _
    // Predicated region
    $region38: #{gnn_forward.1} parent=1 // pred_check
      _
    $region39: #{gnn_forward.1} parent=1 // pred_check_branch
      %4333 = sbr.rel (0) target = $region41
    $region40: #{gnn_forward.1} parent=1 // pred_region
      _
    $region41: #{gnn_forward.1} parent=1 // pred_fallthru
      _
    %4334 = vsyncpa [#allocation8], 1

</llo_original>
